<compile_context>
chip_gen: v5e
topology: v5e:2x2
jax: 0.10.0
libtpu: 0.0.40
codegen_flags: <defaults>
</compile_context>

<pallas_src>
import jax
import jax.numpy as jnp
from jax.experimental import pallas as pl
from jax.experimental.pallas import tpu as pltpu


def _round_up(x, m):
    return ((x + m - 1) // m) * m


def cnn3_forward(sent, conv_params, h_mapping, t_mapping, dis_s, dis_t,
                 bili_w, bili_b, *, batch_block=None, rel_block=32,
                 pair_block=256, bilinear_bf16=False):
    """Fused CNN3 forward (graph-free path), eval mode.

    sent:        [B, L, Cin]  (word | coref | ner embedding concat)
    conv_params: 3 x (W [Cout, Cin_k, 3], b [Cout])  -- PyTorch Conv1d layout
    h_mapping / t_mapping: [B, P, L]
    dis_s / dis_t:         [B, P, dis_size]
    bili_w: [R, D, D], bili_b: [R]   with D = Cout + dis_size
    returns: [B, P, R] float32
    """
    B, L, Cin = sent.shape
    P = h_mapping.shape[1]
    R = bili_w.shape[0]
    (w1, b1), (w2, b2), (w3, b3) = conv_params
    Cout = w1.shape[0]
    dis_size = dis_s.shape[-1]
    D = Cout + dis_size
    assert bili_w.shape == (R, D, D)

    # padded widths (all lane dims multiples of 128)
    Cin_p = _round_up(Cin, 128)            # conv-1 input channels
    Cp = _round_up(Cout, 128)              # conv-1/2 output channels (200 -> 256)
    Dp = _round_up(max(D, Cout), 128)      # conv-3 / bilinear width  (216 -> 256)

    # ---- batch blocking: keep MXU M-dim filled at small L, but >= 2 grid
    # steps when B >= 2 (pipelining + v7x megacore), and avoid the ~Bb^2
    # block-diagonal mapping cost at real DocRED shapes (L~512 -> Bb = 1).
    if batch_block is None:
        Bb = max(1, min(B, 256 // max(L, 1)))
        if B >= 2:
            Bb = min(Bb, max(1, B // 2))
    else:
        Bb = max(1, min(batch_block, B))
    B_pad = _round_up(B, Bb)
    nb = B_pad // Bb
    BbL = Bb * L
    BbP = Bb * P
    BbP_pad = _round_up(BbP, 8)            # sublane-aligned pair rows

    # relation chunking (grid axis) and per-chunk 128-wide lane-dense output
    Rc = max(1, min(rel_block, R, 128))
    Rp = _round_up(R, Rc)
    nR = Rp // Rc
    Ro = 128

    # pair chunking (static in-kernel loop) bounds sw / swt intermediates
    Pc = min(_round_up(pair_block, 8), BbP_pad)

    f32, bf16 = jnp.float32, jnp.bfloat16
    bl_dtype = bf16 if bilinear_bf16 else f32

    # ---- wrapper-side layout plumbing (plain JAX) --------------------------
    sent_p = jnp.pad(sent, ((0, B_pad - B), (0, 0), (0, Cin_p - Cin)))
    sent_p = sent_p.reshape(nb, BbL, Cin_p).astype(bf16)

    def prep_conv(w, b, cin_p, width):
        # torch Conv1d weight [cout, cin, 3] -> [cin_p, 3*width] (taps concat'd
        # along the output dim: [ W_k0 | W_k1 | W_k2 ]); bias -> [1, width].
        cout, cin, _k = w.shape
        wt = jnp.transpose(w, (1, 2, 0))                           # [cin, 3, cout]
        wt = jnp.pad(wt, ((0, cin_p - cin), (0, 0), (0, width - cout)))
        wt = wt.reshape(cin_p, 3 * width)
        bp = jnp.pad(b, (0, width - cout)).reshape(1, width)
        return wt.astype(bf16), bp.astype(f32)

    w1c, b1p = prep_conv(w1, b1, Cin_p, Cp)
    w2c, b2p = prep_conv(w2, b2, Cp, Cp)
    w3c, b3p = prep_conv(w3, b3, Cp, Dp)

    def prep_map(m):
        # [B, P, L] -> block-diagonal [nb, BbP_pad, Bb*L].  Padded rows are
        # zero, which also neutralizes any padded batch rows downstream.
        m = jnp.pad(m, ((0, B_pad - B), (0, 0), (0, 0))).reshape(nb, Bb, P, L)
        bd = jnp.einsum('nbpl,bc->nbpcl', m, jnp.eye(Bb, dtype=m.dtype))
        bd = bd.reshape(nb, BbP, BbL)
        return jnp.pad(bd, ((0, 0), (0, BbP_pad - BbP), (0, 0)))

    st_map = jnp.concatenate([prep_map(h_mapping), prep_map(t_mapping)],
                             axis=1).astype(bf16)                  # [nb, 2*BbP_pad, BbL]

    def prep_dis(d):
        # place dis embedding at lanes [Cout, Cout+dis) of a Dp-wide zero slab;
        # the concat becomes a plain add in the kernel.  This relies on the
        # conv-3 output lanes [Cout, Dp) being exactly zero (zero-padded weight
        # columns / bias; maxpool + relu preserve 0) -- see kernel NOTE.
        d = jnp.pad(d, ((0, B_pad - B), (0, 0), (Cout, Dp - Cout - dis_size)))
        d = d.reshape(nb, BbP, Dp)
        return jnp.pad(d, ((0, 0), (0, BbP_pad - BbP), (0, 0)))

    dis_st = jnp.concatenate([prep_dis(dis_s), prep_dis(dis_t)],
                             axis=1).astype(f32)                   # [nb, 2*BbP_pad, Dp]

    # bilinear: W[r, i, j] -> W_flat[i, r*Dp + j]; G sums each Dp-wide lane
    # group of a relation chunk into one of 128 output lanes.
    w_pad = jnp.pad(bili_w, ((0, Rp - R), (0, Dp - D), (0, Dp - D)))
    w_flat = jnp.transpose(w_pad, (1, 0, 2)).reshape(Dp, Rp * Dp).astype(bl_dtype)
    g_sum = jnp.pad(jnp.repeat(jnp.eye(Rc, dtype=f32), Dp, axis=0),
                    ((0, 0), (0, Ro - Rc))).astype(bl_dtype)       # [Rc*Dp, 128]
    bb = jnp.pad(bili_b, (0, Rp - R)).reshape(nR, Rc)
    bb = jnp.pad(bb, ((0, 0), (0, Ro - Rc))).reshape(nR, 1, Ro).astype(f32)

    neg_inf = float("-inf")   # plain Python float: never captured as an array

    # ---- kernel -------------------------------------------------------------
    def kernel(sent_ref, map_ref, dis_ref,
               w1_ref, b1_ref, w2_ref, b2_ref, w3_ref, b3_ref,
               wflat_ref, g_ref, bb_ref,
               out_ref, rep_scr, sw_scr):
        r = pl.program_id(1)

        # per-sequence boundary predicates as [BbL, 1] columns (broadcast).
        pos = jax.lax.broadcasted_iota(jnp.int32, (BbL, 1), 0) % L
        first = pos == 0
        last = pos == (L - 1)

        def conv_pool_relu(x, w_ref, b_ref, width):
            # Conv1d(k=3, s=1, p=1): ONE matmul against 3 concatenated taps,
            # then +-1 sublane shifts with per-sequence zero masks.
            y3 = jnp.dot(x, w_ref[...], preferred_element_type=jnp.float32)
            a = y3[:, :width]               # tap k=0 (needs x[t-1])
            c = y3[:, width:2 * width]      # tap k=1 (x[t])
            e = y3[:, 2 * width:]           # tap k=2 (needs x[t+1])
            a = jnp.where(first, 0.0, jnp.roll(a, 1, axis=0))
            e = jnp.where(last, 0.0, jnp.roll(e, -1, axis=0))
            y = a + c + e + b_ref[...]
            # MaxPool1d(k=3, s=1, p=1) with -inf boundary padding.
            ym = jnp.where(first, neg_inf, jnp.roll(y, 1, axis=0))
            yp = jnp.where(last, neg_inf, jnp.roll(y, -1, axis=0))
            y = jnp.maximum(jnp.maximum(ym, y), yp)
            return jnp.maximum(y, 0.0)      # ReLU; Dropout = identity (eval)

        # conv + mapping computed once per batch block (relation chunk 0) and
        # cached in VMEM scratch; reused by the remaining relation chunks.
        @pl.when(r == 0)
        def _():
            x1 = conv_pool_relu(sent_ref[0], w1_ref, b1_ref, Cp)
            x2 = conv_pool_relu(x1.astype(jnp.bfloat16), w2_ref, b2_ref, Cp)
            ctx = conv_pool_relu(x2.astype(jnp.bfloat16), w3_ref, b3_ref, Dp)
            # NOTE: ctx lanes [Cout, Dp) are exactly zero by construction, so
            # adding dis_ref (pre-placed at those lanes) == the torch concat.
            st = jnp.dot(map_ref[0], ctx.astype(jnp.bfloat16),
                         preferred_element_type=jnp.float32)       # [2*BbP_pad, Dp]
            rep_scr[...] = st + dis_ref[0]

        # Bilinear for this relation chunk, chunked over pairs (static loop).
        for p0 in range(0, BbP_pad, Pc):
            pc = min(Pc, BbP_pad - p0)
            s_c = rep_scr[p0:p0 + pc, :]
            t_c = rep_scr[BbP_pad + p0:BbP_pad + p0 + pc, :]
            if bilinear_bf16:
                s_c = s_c.astype(jnp.bfloat16)
            sw_scr[:pc, :] = jnp.dot(s_c, wflat_ref[...],
                                     preferred_element_type=jnp.float32)
            # multiply every Dp-wide lane group by t_rep IN PLACE
            # (static slices; no [t_rep]*R tiled copy is materialized).
            for j in range(Rc):
                sw_scr[:pc, j * Dp:(j + 1) * Dp] = (
                    sw_scr[:pc, j * Dp:(j + 1) * Dp] * t_c)
            swt = sw_scr[:pc, :]
            if bilinear_bf16:
                swt = swt.astype(jnp.bfloat16)
            out_ref[0, p0:p0 + pc, :] = (
                jnp.dot(swt, g_ref[...], preferred_element_type=jnp.float32)
                + bb_ref[0])

    # ---- pallas_call plumbing -----------------------------------------------
    def per_block(arr):
        nd = arr.ndim
        shp = arr.shape
        return pl.BlockSpec((1,) + shp[1:],
                            lambda n, r: (n,) + (0,) * (nd - 1))

    def const(arr):
        nd = arr.ndim
        shp = arr.shape
        return pl.BlockSpec(shp, lambda n, r: (0,) * nd)

    inputs = (sent_p, st_map, dis_st, w1c, b1p, w2c, b2p, w3c, b3p,
              w_flat, g_sum, bb)
    in_specs = [
        per_block(sent_p), per_block(st_map), per_block(dis_st),
        const(w1c), const(b1p), const(w2c), const(b2p), const(w3c), const(b3p),
        pl.BlockSpec((Dp, Rc * Dp), lambda n, r: (0, r)),      # relation chunk
        const(g_sum),
        pl.BlockSpec((1, 1, Ro), lambda n, r: (r, 0, 0)),      # bias chunk
    ]
    out_specs = pl.BlockSpec((1, BbP_pad, Ro), lambda n, r: (n, 0, r))

    # advisory cost estimate (3 conv matmuls + mapping + bilinear)
    flops = nb * 2 * BbL * (Cin_p * 3 * Cp + Cp * 3 * Cp + Cp * 3 * Dp)
    flops += nb * 2 * (2 * BbP_pad) * BbL * Dp
    flops += nb * 2 * BbP_pad * Dp * Rp * Dp
    flops += nb * nR * 2 * BbP_pad * (Rc * Dp) * Ro
    bytes_accessed = sum(int(a.size) * a.dtype.itemsize for a in inputs)
    bytes_accessed += nb * BbP_pad * nR * Ro * 4
    cost = pl.CostEstimate(flops=int(flops), transcendentals=0,
                           bytes_accessed=int(bytes_accessed))

    out = pl.pallas_call(
        kernel,
        out_shape=jax.ShapeDtypeStruct((nb, BbP_pad, nR * Ro), jnp.float32),
        grid_spec=pltpu.PrefetchScalarGridSpec(
            num_scalar_prefetch=0,
            grid=(nb, nR),
            in_specs=in_specs,
            out_specs=out_specs,
            scratch_shapes=[pltpu.VMEM((2 * BbP_pad, Dp), jnp.float32),
                            pltpu.VMEM((Pc, Rc * Dp), jnp.float32)]),
        compiler_params=pltpu.CompilerParams(
            dimension_semantics=("parallel", "arbitrary"),
            vmem_limit_bytes=64 * 1024 * 1024),
        cost_estimate=cost,
    )(*inputs)

    out = out.reshape(nb, BbP_pad, nR, Ro)[:, :BbP, :, :Rc]
    out = out.reshape(nb * Bb, P, nR * Rc)
    return out[:B, :, :R]


def reference_forward(sent, conv_params, h_mapping, t_mapping, dis_s, dis_t,
                      bili_w, bili_b):
    """Pure-JAX f32 reference matching the PyTorch module (eval mode)."""
    def layer(x, w, b):
        wm, w0, wp = (jnp.transpose(w[:, :, k]) for k in range(3))
        xm = jnp.pad(x, ((0, 0), (1, 0), (0, 0)))[:, :-1]
        xp = jnp.pad(x, ((0, 0), (0, 1), (0, 0)))[:, 1:]
        y = (jnp.einsum('bld,dc->blc', xm, wm, precision='highest')
             + jnp.einsum('bld,dc->blc', x, w0, precision='highest')
             + jnp.einsum('bld,dc->blc', xp, wp, precision='highest')
             + b.reshape(1, 1, -1))
        neg = jnp.full_like(y[:, :1], -jnp.inf)
        ym = jnp.concatenate([neg, y[:, :-1]], axis=1)
        yp = jnp.concatenate([y[:, 1:], neg], axis=1)
        y = jnp.maximum(jnp.maximum(ym, y), yp)
        return jnp.maximum(y, 0.0)

    x = sent
    for (w, b) in conv_params:
        x = layer(x, w, b)
    s = jnp.einsum('bpl,bld->bpd', h_mapping, x, precision='highest')
    t = jnp.einsum('bpl,bld->bpd', t_mapping, x, precision='highest')
    s_rep = jnp.concatenate([s, dis_s], axis=-1)
    t_rep = jnp.concatenate([t, dis_t], axis=-1)
    out = jnp.einsum('bpi,rij,bpj->bpr', s_rep, bili_w, t_rep,
                     precision='highest')
    return out + bili_b.reshape(1, 1, -1)


if __name__ == "__main__":
    key = jax.random.PRNGKey(0)
    # small shapes consistent with the module
    B, L, P = 2, 16, 8                      # batch, seq length, # h-t pairs
    vocab, word_dim = 100, 32               # config.data_word_vec.shape
    max_length, coref_size = 64, 8          # coref embedding
    ner_size, ent_type_size = 7, 8          # ner embedding
    Cin = word_dim + coref_size + ent_type_size   # 48
    Cout = 200                              # module's hard-coded out_channels
    dis_size, R = 16, 8                     # distance emb size, relation_num

    keys = jax.random.split(key, 20)
    word_emb = jax.random.normal(keys[0], (vocab, word_dim), jnp.float32)
    coref_emb = jax.random.normal(keys[1], (max_length, coref_size), jnp.float32).at[0].set(0.0)
    ner_emb = jax.random.normal(keys[2], (ner_size, ent_type_size), jnp.float32).at[0].set(0.0)
    dis_emb = jax.random.normal(keys[3], (20, dis_size), jnp.float32).at[10].set(0.0)

    def conv_w(k, cin, cout):
        # PyTorch Conv1d weight layout: [out_channels, in_channels, kernel]
        return jax.random.normal(k, (cout, cin, 3), jnp.float32) * 0.05

    w1 = conv_w(keys[4], Cin, Cout)
    b1 = jax.random.normal(keys[5], (Cout,), jnp.float32) * 0.05
    w2 = conv_w(keys[6], Cout, Cout)
    b2 = jax.random.normal(keys[7], (Cout,), jnp.float32) * 0.05
    w3 = conv_w(keys[8], Cout, Cout)
    b3 = jax.random.normal(keys[9], (Cout,), jnp.float32) * 0.05

    D = Cout + dis_size
    bili_w = jax.random.normal(keys[10], (R, D, D), jnp.float32) * 0.01
    bili_b = jax.random.normal(keys[11], (R,), jnp.float32) * 0.01

    # synthetic forward inputs
    context_idxs = jax.random.randint(keys[12], (B, L), 0, vocab)
    pos = jax.random.randint(keys[13], (B, L), 0, max_length)
    context_ner = jax.random.randint(keys[14], (B, L), 0, ner_size)
    dis_h_2_t = jax.random.randint(keys[15], (B, P), 0, 20)
    dis_t_2_h = jax.random.randint(keys[16], (B, P), 0, 20)
    h_mapping = jax.nn.softmax(jax.random.normal(keys[17], (B, P, L), jnp.float32), axis=-1)
    t_mapping = jax.nn.softmax(jax.random.normal(keys[18], (B, P, L), jnp.float32), axis=-1)

    # glue (plain JAX): embedding gathers + feature concat
    sent = jnp.concatenate(
        [word_emb[context_idxs], coref_emb[pos], ner_emb[context_ner]], axis=-1)  # [B, L, Cin]
    dis_s = dis_emb[dis_h_2_t]  # [B, P, dis_size]
    dis_t = dis_emb[dis_t_2_h]  # [B, P, dis_size]

    conv_params = ((w1, b1), (w2, b2), (w3, b3))

    predict_re = cnn3_forward(sent, conv_params, h_mapping, t_mapping,
                              dis_s, dis_t, bili_w, bili_b)
    predict_re = jax.block_until_ready(predict_re)

    ref = reference_forward(sent, conv_params, h_mapping, t_mapping,
                            dis_s, dis_t, bili_w, bili_b)
    assert predict_re.shape == (B, P, R)
    # Tolerance sized for bf16 conv/mapping MXU operands (f32 accumulation,
    # f32 bilinear) vs. the all-f32 'highest'-precision reference.
    assert jnp.allclose(predict_re, ref, atol=5e-2, rtol=5e-2), (
        "mismatch vs. pure-JAX reference: max |diff| = "
        f"{float(jnp.max(jnp.abs(predict_re - ref)))}")

    # TODO(synk): RaEncoder / GraphNetWork / DoubleGraphNetWork branches
    # (cfg.SGRAPH/DGRAPH LAYERS_NUM > 0) use external, undefined modules and
    # ragged python-list bookkeeping; only the LAYERS_NUM == 0 path is kernelized.
    print("KERNEL_OK")
</pallas_src>

<mosaic_0001>
module attributes {stable_mosaic.version = 11 : i64} {
  func.func @kernel(%arg0: i32, %arg1: i32, %arg2: memref<1x16x128xbf16, #tpu.memory_space<vmem>>, %arg3: memref<1x16x16xbf16, #tpu.memory_space<vmem>>, %arg4: memref<1x16x256xf32, #tpu.memory_space<vmem>>, %arg5: memref<128x768xbf16, #tpu.memory_space<vmem>>, %arg6: memref<1x256xf32, #tpu.memory_space<vmem>>, %arg7: memref<256x768xbf16, #tpu.memory_space<vmem>>, %arg8: memref<1x256xf32, #tpu.memory_space<vmem>>, %arg9: memref<256x768xbf16, #tpu.memory_space<vmem>>, %arg10: memref<1x256xf32, #tpu.memory_space<vmem>>, %arg11: memref<256x2048xf32, #tpu.memory_space<vmem>>, %arg12: memref<2048x128xf32, #tpu.memory_space<vmem>>, %arg13: memref<1x1x128xf32, #tpu.memory_space<vmem>>, %arg14: memref<1x8x128xf32, #tpu.memory_space<vmem>>, %arg15: memref<16x256xf32, #tpu.memory_space<vmem>>, %arg16: memref<8x2048xf32, #tpu.memory_space<vmem>>) attributes {dimension_semantics = [#tpu.dimension_semantics<parallel>, #tpu.dimension_semantics<arbitrary>], iteration_bounds = array<i64: 2, 1>, scalar_prefetch = 0 : i64, scratch_operands = 2 : i64, tpu.core_type = #tpu.core_type<tc>, window_params = [{transform_indices = @transform_0, window_bounds = array<i64: 1, 16, 128>}, {transform_indices = @transform_1, window_bounds = array<i64: 1, 16, 16>}, {transform_indices = @transform_2, window_bounds = array<i64: 1, 16, 256>}, {pipeline_mode = #tpu.pipeline_mode<synchronous>, transform_indices = @transform_3, window_bounds = array<i64: 128, 768>}, {pipeline_mode = #tpu.pipeline_mode<synchronous>, transform_indices = @transform_4, window_bounds = array<i64: 1, 256>}, {pipeline_mode = #tpu.pipeline_mode<synchronous>, transform_indices = @transform_5, window_bounds = array<i64: 256, 768>}, {pipeline_mode = #tpu.pipeline_mode<synchronous>, transform_indices = @transform_6, window_bounds = array<i64: 1, 256>}, {pipeline_mode = #tpu.pipeline_mode<synchronous>, transform_indices = @transform_7, window_bounds = array<i64: 256, 768>}, {pipeline_mode = #tpu.pipeline_mode<synchronous>, transform_indices = @transform_8, window_bounds = array<i64: 1, 256>}, {transform_indices = @transform_9, window_bounds = array<i64: 256, 2048>}, {pipeline_mode = #tpu.pipeline_mode<synchronous>, transform_indices = @transform_10, window_bounds = array<i64: 2048, 128>}, {transform_indices = @transform_11, window_bounds = array<i64: 1, 1, 128>}, {transform_indices = @transform_12, window_bounds = array<i64: 1, 8, 128>}]} {
    %0 = tpu.iota {dimensions = array<i32: 0>} : vector<16x1xi32>
    %c16_i32 = arith.constant 16 : i32
    %c0_i32 = arith.constant 0 : i32
    %1 = arith.cmpi eq, %c16_i32, %c0_i32 : i32
    %c1_i32 = arith.constant 1 : i32
    %2 = arith.select %1, %c1_i32, %c16_i32 : i32
    %3 = vector.broadcast %2 : i32 to vector<16x1xi32>
    %4 = arith.remsi %0, %3 : vector<16x1xi32>
    %c0_i32_0 = arith.constant 0 : i32
    %5 = vector.broadcast %c0_i32_0 : i32 to vector<16x1xi32>
    %6 = arith.cmpi ne, %4, %5 : vector<16x1xi32>
    %c0_i32_1 = arith.constant 0 : i32
    %7 = vector.broadcast %c0_i32_1 : i32 to vector<16x1xi32>
    %8 = arith.cmpi slt, %4, %7 : vector<16x1xi32>
    %c0_i32_2 = arith.constant 0 : i32
    %9 = arith.cmpi slt, %2, %c0_i32_2 : i32
    %10 = vector.broadcast %9 : i1 to vector<16x1xi1>
    %11 = vector.broadcast %10 : vector<16x1xi1> to vector<16x1xi1>
    %12 = arith.xori %8, %11 : vector<16x1xi1>
    %13 = arith.andi %12, %6 : vector<16x1xi1>
    %14 = vector.broadcast %2 : i32 to vector<16x1xi32>
    %15 = arith.addi %4, %14 : vector<16x1xi32>
    %16 = arith.select %13, %15, %4 : vector<16x1xi1>, vector<16x1xi32>
    %c0_i32_3 = arith.constant 0 : i32
    %17 = vector.broadcast %c0_i32_3 : i32 to vector<16x1xi32>
    %18 = arith.cmpi eq, %16, %17 : vector<16x1xi32>
    %c15_i32 = arith.constant 15 : i32
    %19 = vector.broadcast %c15_i32 : i32 to vector<16x1xi32>
    %20 = arith.cmpi eq, %16, %19 : vector<16x1xi32>
    %c0_i32_4 = arith.constant 0 : i32
    %21 = arith.cmpi eq, %arg1, %c0_i32_4 : i32
    %22 = arith.extui %21 : i1 to i32
    %c0_i32_5 = arith.constant 0 : i32
    %23 = arith.cmpi ne, %22, %c0_i32_5 : i32
    scf.if %23 {
      %c0_48 = arith.constant 0 : index
      %c0_49 = arith.constant 0 : index
      %c0_50 = arith.constant 0 : index
      %63 = vector.load %arg2[%c0_48, %c0_49, %c0_50] : memref<1x16x128xbf16, #tpu.memory_space<vmem>>, vector<1x16x128xbf16>
      %64 = vector.shape_cast %63 : vector<1x16x128xbf16> to vector<16x128xbf16>
      %c0_51 = arith.constant 0 : index
      %c0_52 = arith.constant 0 : index
      %65 = vector.load %arg5[%c0_51, %c0_52] : memref<128x768xbf16, #tpu.memory_space<vmem>>, vector<128x768xbf16>
      %cst_53 = arith.constant dense<0.000000e+00> : vector<16x768xf32>
      %66 = tpu.matmul %64, %65, %cst_53 {dimension_numbers = #tpu.dot_dimension_numbers<[1], [0], [0], [1], [0, 0, 1, 1], [], []>} : vector<16x128xbf16>, vector<128x768xbf16>, vector<16x768xf32> -> vector<16x768xf32>
      %67 = vector.extract_strided_slice %66 {offsets = [0, 0], sizes = [16, 256], strides = [1, 1]} : vector<16x768xf32> to vector<16x256xf32>
      %68 = vector.extract_strided_slice %66 {offsets = [0, 256], sizes = [16, 256], strides = [1, 1]} : vector<16x768xf32> to vector<16x256xf32>
      %69 = vector.extract_strided_slice %66 {offsets = [0, 512], sizes = [16, 256], strides = [1, 1]} : vector<16x768xf32> to vector<16x256xf32>
      %70 = vector.extract_strided_slice %67 {offsets = [15, 0], sizes = [1, 256], strides = [1, 1]} : vector<16x256xf32> to vector<1x256xf32>
      %71 = vector.extract_strided_slice %67 {offsets = [0, 0], sizes = [15, 256], strides = [1, 1]} : vector<16x256xf32> to vector<15x256xf32>
      %72 = tpu.concatenate %70, %71 in 0 : vector<1x256xf32>, vector<15x256xf32> -> vector<16x256xf32>
      %cst_54 = arith.constant 0.000000e+00 : f32
      %73 = vector.shape_cast %18 : vector<16x1xi1> to vector<16x1xi1>
      %74 = vector.broadcast %73 : vector<16x1xi1> to vector<16x256xi1>
      %75 = vector.broadcast %cst_54 : f32 to vector<16x256xf32>
      %76 = arith.select %74, %75, %72 : vector<16x256xi1>, vector<16x256xf32>
      %77 = vector.extract_strided_slice %69 {offsets = [1, 0], sizes = [15, 256], strides = [1, 1]} : vector<16x256xf32> to vector<15x256xf32>
      %78 = vector.extract_strided_slice %69 {offsets = [0, 0], sizes = [1, 256], strides = [1, 1]} : vector<16x256xf32> to vector<1x256xf32>
      %79 = tpu.concatenate %77, %78 in 0 : vector<15x256xf32>, vector<1x256xf32> -> vector<16x256xf32>
      %cst_55 = arith.constant 0.000000e+00 : f32
      %80 = vector.shape_cast %20 : vector<16x1xi1> to vector<16x1xi1>
      %81 = vector.broadcast %80 : vector<16x1xi1> to vector<16x256xi1>
      %82 = vector.broadcast %cst_55 : f32 to vector<16x256xf32>
      %83 = arith.select %81, %82, %79 : vector<16x256xi1>, vector<16x256xf32>
      %84 = arith.addf %76, %68 : vector<16x256xf32>
      %85 = arith.addf %84, %83 : vector<16x256xf32>
      %c0_56 = arith.constant 0 : index
      %c0_57 = arith.constant 0 : index
      %86 = vector.load %arg6[%c0_56, %c0_57] : memref<1x256xf32, #tpu.memory_space<vmem>>, vector<1x256xf32>
      %87 = vector.broadcast %86 : vector<1x256xf32> to vector<16x256xf32>
      %88 = arith.addf %85, %87 : vector<16x256xf32>
      %89 = vector.extract_strided_slice %88 {offsets = [15, 0], sizes = [1, 256], strides = [1, 1]} : vector<16x256xf32> to vector<1x256xf32>
      %90 = vector.extract_strided_slice %88 {offsets = [0, 0], sizes = [15, 256], strides = [1, 1]} : vector<16x256xf32> to vector<15x256xf32>
      %91 = tpu.concatenate %89, %90 in 0 : vector<1x256xf32>, vector<15x256xf32> -> vector<16x256xf32>
      %cst_58 = arith.constant 0xFF800000 : f32
      %92 = vector.shape_cast %18 : vector<16x1xi1> to vector<16x1xi1>
      %93 = vector.broadcast %92 : vector<16x1xi1> to vector<16x256xi1>
      %94 = vector.broadcast %cst_58 : f32 to vector<16x256xf32>
      %95 = arith.select %93, %94, %91 : vector<16x256xi1>, vector<16x256xf32>
      %96 = vector.extract_strided_slice %88 {offsets = [1, 0], sizes = [15, 256], strides = [1, 1]} : vector<16x256xf32> to vector<15x256xf32>
      %97 = vector.extract_strided_slice %88 {offsets = [0, 0], sizes = [1, 256], strides = [1, 1]} : vector<16x256xf32> to vector<1x256xf32>
      %98 = tpu.concatenate %96, %97 in 0 : vector<15x256xf32>, vector<1x256xf32> -> vector<16x256xf32>
      %cst_59 = arith.constant 0xFF800000 : f32
      %99 = vector.shape_cast %20 : vector<16x1xi1> to vector<16x1xi1>
      %100 = vector.broadcast %99 : vector<16x1xi1> to vector<16x256xi1>
      %101 = vector.broadcast %cst_59 : f32 to vector<16x256xf32>
      %102 = arith.select %100, %101, %98 : vector<16x256xi1>, vector<16x256xf32>
      %103 = arith.maximumf %95, %88 : vector<16x256xf32>
      %104 = arith.maximumf %103, %102 : vector<16x256xf32>
      %cst_60 = arith.constant 0.000000e+00 : f32
      %105 = vector.broadcast %cst_60 : f32 to vector<16x256xf32>
      %106 = arith.maximumf %104, %105 : vector<16x256xf32>
      %107 = arith.truncf %106 : vector<16x256xf32> to vector<16x256xbf16>
      %c0_61 = arith.constant 0 : index
      %c0_62 = arith.constant 0 : index
      %108 = vector.load %arg7[%c0_61, %c0_62] : memref<256x768xbf16, #tpu.memory_space<vmem>>, vector<256x768xbf16>
      %cst_63 = arith.constant dense<0.000000e+00> : vector<16x768xf32>
      %109 = tpu.matmul %107, %108, %cst_63 {dimension_numbers = #tpu.dot_dimension_numbers<[1], [0], [0], [1], [0, 0, 1, 1], [], []>} : vector<16x256xbf16>, vector<256x768xbf16>, vector<16x768xf32> -> vector<16x768xf32>
      %110 = vector.extract_strided_slice %109 {offsets = [0, 0], sizes = [16, 256], strides = [1, 1]} : vector<16x768xf32> to vector<16x256xf32>
      %111 = vector.extract_strided_slice %109 {offsets = [0, 256], sizes = [16, 256], strides = [1, 1]} : vector<16x768xf32> to vector<16x256xf32>
      %112 = vector.extract_strided_slice %109 {offsets = [0, 512], sizes = [16, 256], strides = [1, 1]} : vector<16x768xf32> to vector<16x256xf32>
      %113 = vector.extract_strided_slice %110 {offsets = [15, 0], sizes = [1, 256], strides = [1, 1]} : vector<16x256xf32> to vector<1x256xf32>
      %114 = vector.extract_strided_slice %110 {offsets = [0, 0], sizes = [15, 256], strides = [1, 1]} : vector<16x256xf32> to vector<15x256xf32>
      %115 = tpu.concatenate %113, %114 in 0 : vector<1x256xf32>, vector<15x256xf32> -> vector<16x256xf32>
      %cst_64 = arith.constant 0.000000e+00 : f32
      %116 = vector.shape_cast %18 : vector<16x1xi1> to vector<16x1xi1>
      %117 = vector.broadcast %116 : vector<16x1xi1> to vector<16x256xi1>
      %118 = vector.broadcast %cst_64 : f32 to vector<16x256xf32>
      %119 = arith.select %117, %118, %115 : vector<16x256xi1>, vector<16x256xf32>
      %120 = vector.extract_strided_slice %112 {offsets = [1, 0], sizes = [15, 256], strides = [1, 1]} : vector<16x256xf32> to vector<15x256xf32>
      %121 = vector.extract_strided_slice %112 {offsets = [0, 0], sizes = [1, 256], strides = [1, 1]} : vector<16x256xf32> to vector<1x256xf32>
      %122 = tpu.concatenate %120, %121 in 0 : vector<15x256xf32>, vector<1x256xf32> -> vector<16x256xf32>
      %cst_65 = arith.constant 0.000000e+00 : f32
      %123 = vector.shape_cast %20 : vector<16x1xi1> to vector<16x1xi1>
      %124 = vector.broadcast %123 : vector<16x1xi1> to vector<16x256xi1>
      %125 = vector.broadcast %cst_65 : f32 to vector<16x256xf32>
      %126 = arith.select %124, %125, %122 : vector<16x256xi1>, vector<16x256xf32>
      %127 = arith.addf %119, %111 : vector<16x256xf32>
      %128 = arith.addf %127, %126 : vector<16x256xf32>
      %c0_66 = arith.constant 0 : index
      %c0_67 = arith.constant 0 : index
      %129 = vector.load %arg8[%c0_66, %c0_67] : memref<1x256xf32, #tpu.memory_space<vmem>>, vector<1x256xf32>
      %130 = vector.broadcast %129 : vector<1x256xf32> to vector<16x256xf32>
      %131 = arith.addf %128, %130 : vector<16x256xf32>
      %132 = vector.extract_strided_slice %131 {offsets = [15, 0], sizes = [1, 256], strides = [1, 1]} : vector<16x256xf32> to vector<1x256xf32>
      %133 = vector.extract_strided_slice %131 {offsets = [0, 0], sizes = [15, 256], strides = [1, 1]} : vector<16x256xf32> to vector<15x256xf32>
      %134 = tpu.concatenate %132, %133 in 0 : vector<1x256xf32>, vector<15x256xf32> -> vector<16x256xf32>
      %cst_68 = arith.constant 0xFF800000 : f32
      %135 = vector.shape_cast %18 : vector<16x1xi1> to vector<16x1xi1>
      %136 = vector.broadcast %135 : vector<16x1xi1> to vector<16x256xi1>
      %137 = vector.broadcast %cst_68 : f32 to vector<16x256xf32>
      %138 = arith.select %136, %137, %134 : vector<16x256xi1>, vector<16x256xf32>
      %139 = vector.extract_strided_slice %131 {offsets = [1, 0], sizes = [15, 256], strides = [1, 1]} : vector<16x256xf32> to vector<15x256xf32>
      %140 = vector.extract_strided_slice %131 {offsets = [0, 0], sizes = [1, 256], strides = [1, 1]} : vector<16x256xf32> to vector<1x256xf32>
      %141 = tpu.concatenate %139, %140 in 0 : vector<15x256xf32>, vector<1x256xf32> -> vector<16x256xf32>
      %cst_69 = arith.constant 0xFF800000 : f32
      %142 = vector.shape_cast %20 : vector<16x1xi1> to vector<16x1xi1>
      %143 = vector.broadcast %142 : vector<16x1xi1> to vector<16x256xi1>
      %144 = vector.broadcast %cst_69 : f32 to vector<16x256xf32>
      %145 = arith.select %143, %144, %141 : vector<16x256xi1>, vector<16x256xf32>
      %146 = arith.maximumf %138, %131 : vector<16x256xf32>
      %147 = arith.maximumf %146, %145 : vector<16x256xf32>
      %cst_70 = arith.constant 0.000000e+00 : f32
      %148 = vector.broadcast %cst_70 : f32 to vector<16x256xf32>
      %149 = arith.maximumf %147, %148 : vector<16x256xf32>
      %150 = arith.truncf %149 : vector<16x256xf32> to vector<16x256xbf16>
      %c0_71 = arith.constant 0 : index
      %c0_72 = arith.constant 0 : index
      %151 = vector.load %arg9[%c0_71, %c0_72] : memref<256x768xbf16, #tpu.memory_space<vmem>>, vector<256x768xbf16>
      %cst_73 = arith.constant dense<0.000000e+00> : vector<16x768xf32>
      %152 = tpu.matmul %150, %151, %cst_73 {dimension_numbers = #tpu.dot_dimension_numbers<[1], [0], [0], [1], [0, 0, 1, 1], [], []>} : vector<16x256xbf16>, vector<256x768xbf16>, vector<16x768xf32> -> vector<16x768xf32>
      %153 = vector.extract_strided_slice %152 {offsets = [0, 0], sizes = [16, 256], strides = [1, 1]} : vector<16x768xf32> to vector<16x256xf32>
      %154 = vector.extract_strided_slice %152 {offsets = [0, 256], sizes = [16, 256], strides = [1, 1]} : vector<16x768xf32> to vector<16x256xf32>
      %155 = vector.extract_strided_slice %152 {offsets = [0, 512], sizes = [16, 256], strides = [1, 1]} : vector<16x768xf32> to vector<16x256xf32>
      %156 = vector.extract_strided_slice %153 {offsets = [15, 0], sizes = [1, 256], strides = [1, 1]} : vector<16x256xf32> to vector<1x256xf32>
      %157 = vector.extract_strided_slice %153 {offsets = [0, 0], sizes = [15, 256], strides = [1, 1]} : vector<16x256xf32> to vector<15x256xf32>
      %158 = tpu.concatenate %156, %157 in 0 : vector<1x256xf32>, vector<15x256xf32> -> vector<16x256xf32>
      %cst_74 = arith.constant 0.000000e+00 : f32
      %159 = vector.shape_cast %18 : vector<16x1xi1> to vector<16x1xi1>
      %160 = vector.broadcast %159 : vector<16x1xi1> to vector<16x256xi1>
      %161 = vector.broadcast %cst_74 : f32 to vector<16x256xf32>
      %162 = arith.select %160, %161, %158 : vector<16x256xi1>, vector<16x256xf32>
      %163 = vector.extract_strided_slice %155 {offsets = [1, 0], sizes = [15, 256], strides = [1, 1]} : vector<16x256xf32> to vector<15x256xf32>
      %164 = vector.extract_strided_slice %155 {offsets = [0, 0], sizes = [1, 256], strides = [1, 1]} : vector<16x256xf32> to vector<1x256xf32>
      %165 = tpu.concatenate %163, %164 in 0 : vector<15x256xf32>, vector<1x256xf32> -> vector<16x256xf32>
      %cst_75 = arith.constant 0.000000e+00 : f32
      %166 = vector.shape_cast %20 : vector<16x1xi1> to vector<16x1xi1>
      %167 = vector.broadcast %166 : vector<16x1xi1> to vector<16x256xi1>
      %168 = vector.broadcast %cst_75 : f32 to vector<16x256xf32>
      %169 = arith.select %167, %168, %165 : vector<16x256xi1>, vector<16x256xf32>
      %170 = arith.addf %162, %154 : vector<16x256xf32>
      %171 = arith.addf %170, %169 : vector<16x256xf32>
      %c0_76 = arith.constant 0 : index
      %c0_77 = arith.constant 0 : index
      %172 = vector.load %arg10[%c0_76, %c0_77] : memref<1x256xf32, #tpu.memory_space<vmem>>, vector<1x256xf32>
      %173 = vector.broadcast %172 : vector<1x256xf32> to vector<16x256xf32>
      %174 = arith.addf %171, %173 : vector<16x256xf32>
      %175 = vector.extract_strided_slice %174 {offsets = [15, 0], sizes = [1, 256], strides = [1, 1]} : vector<16x256xf32> to vector<1x256xf32>
      %176 = vector.extract_strided_slice %174 {offsets = [0, 0], sizes = [15, 256], strides = [1, 1]} : vector<16x256xf32> to vector<15x256xf32>
      %177 = tpu.concatenate %175, %176 in 0 : vector<1x256xf32>, vector<15x256xf32> -> vector<16x256xf32>
      %cst_78 = arith.constant 0xFF800000 : f32
      %178 = vector.shape_cast %18 : vector<16x1xi1> to vector<16x1xi1>
      %179 = vector.broadcast %178 : vector<16x1xi1> to vector<16x256xi1>
      %180 = vector.broadcast %cst_78 : f32 to vector<16x256xf32>
      %181 = arith.select %179, %180, %177 : vector<16x256xi1>, vector<16x256xf32>
      %182 = vector.extract_strided_slice %174 {offsets = [1, 0], sizes = [15, 256], strides = [1, 1]} : vector<16x256xf32> to vector<15x256xf32>
      %183 = vector.extract_strided_slice %174 {offsets = [0, 0], sizes = [1, 256], strides = [1, 1]} : vector<16x256xf32> to vector<1x256xf32>
      %184 = tpu.concatenate %182, %183 in 0 : vector<15x256xf32>, vector<1x256xf32> -> vector<16x256xf32>
      %cst_79 = arith.constant 0xFF800000 : f32
      %185 = vector.shape_cast %20 : vector<16x1xi1> to vector<16x1xi1>
      %186 = vector.broadcast %185 : vector<16x1xi1> to vector<16x256xi1>
      %187 = vector.broadcast %cst_79 : f32 to vector<16x256xf32>
      %188 = arith.select %186, %187, %184 : vector<16x256xi1>, vector<16x256xf32>
      %189 = arith.maximumf %181, %174 : vector<16x256xf32>
      %190 = arith.maximumf %189, %188 : vector<16x256xf32>
      %cst_80 = arith.constant 0.000000e+00 : f32
      %191 = vector.broadcast %cst_80 : f32 to vector<16x256xf32>
      %192 = arith.maximumf %190, %191 : vector<16x256xf32>
      %c0_81 = arith.constant 0 : index
      %c0_82 = arith.constant 0 : index
      %c0_83 = arith.constant 0 : index
      %193 = vector.load %arg3[%c0_81, %c0_82, %c0_83] : memref<1x16x16xbf16, #tpu.memory_space<vmem>>, vector<1x16x16xbf16>
      %194 = vector.shape_cast %193 : vector<1x16x16xbf16> to vector<16x16xbf16>
      %195 = arith.truncf %192 : vector<16x256xf32> to vector<16x256xbf16>
      %cst_84 = arith.constant dense<0.000000e+00> : vector<16x256xf32>
      %196 = tpu.matmul %194, %195, %cst_84 {dimension_numbers = #tpu.dot_dimension_numbers<[1], [0], [0], [1], [0, 0, 1, 1], [], []>} : vector<16x16xbf16>, vector<16x256xbf16>, vector<16x256xf32> -> vector<16x256xf32>
      %c0_85 = arith.constant 0 : index
      %c0_86 = arith.constant 0 : index
      %c0_87 = arith.constant 0 : index
      %197 = vector.load %arg4[%c0_85, %c0_86, %c0_87] : memref<1x16x256xf32, #tpu.memory_space<vmem>>, vector<1x16x256xf32>
      %198 = vector.shape_cast %197 : vector<1x16x256xf32> to vector<16x256xf32>
      %199 = arith.addf %196, %198 : vector<16x256xf32>
      %c0_88 = arith.constant 0 : index
      %c0_89 = arith.constant 0 : index
      %200 = vector.load %arg15[%c0_88, %c0_89] : memref<16x256xf32, #tpu.memory_space<vmem>>, vector<16x256xf32>
      tpu.vector_store %arg15[%c0_88, %c0_89], %199 {strides = array<i32>} : memref<16x256xf32, #tpu.memory_space<vmem>>, vector<16x256xf32>,
    } else {
    }
    %c0 = arith.constant 0 : index
    %c0_6 = arith.constant 0 : index
    %24 = vector.load %arg15[%c0, %c0_6] : memref<16x256xf32, #tpu.memory_space<vmem>>, vector<8x256xf32>
    %c8 = arith.constant 8 : index
    %c0_7 = arith.constant 0 : index
    %25 = vector.load %arg15[%c8, %c0_7] : memref<16x256xf32, #tpu.memory_space<vmem>>, vector<8x256xf32>
    %c0_8 = arith.constant 0 : index
    %c0_9 = arith.constant 0 : index
    %26 = vector.load %arg11[%c0_8, %c0_9] : memref<256x2048xf32, #tpu.memory_space<vmem>>, vector<256x2048xf32>
    %cst = arith.constant dense<0.000000e+00> : vector<8x2048xf32>
    %27 = tpu.matmul %24, %26, %cst {dimension_numbers = #tpu.dot_dimension_numbers<[1], [0], [0], [1], [0, 0, 1, 1], [], []>} : vector<8x256xf32>, vector<256x2048xf32>, vector<8x2048xf32> -> vector<8x2048xf32>
    %c0_10 = arith.constant 0 : index
    %c0_11 = arith.constant 0 : index
    %28 = vector.load %arg16[%c0_10, %c0_11] : memref<8x2048xf32, #tpu.memory_space<vmem>>, vector<8x2048xf32>
    tpu.vector_store %arg16[%c0_10, %c0_11], %27 {strides = array<i32>} : memref<8x2048xf32, #tpu.memory_space<vmem>>, vector<8x2048xf32>,
    %c0_12 = arith.constant 0 : index
    %c0_13 = arith.constant 0 : index
    %29 = vector.load %arg16[%c0_12, %c0_13] : memref<8x2048xf32, #tpu.memory_space<vmem>>, vector<8x256xf32>
    %30 = arith.mulf %29, %25 : vector<8x256xf32>
    %c0_14 = arith.constant 0 : index
    %c0_15 = arith.constant 0 : index
    %31 = vector.load %arg16[%c0_14, %c0_15] : memref<8x2048xf32, #tpu.memory_space<vmem>>, vector<8x256xf32>
    tpu.vector_store %arg16[%c0_14, %c0_15], %30 {strides = array<i32>} : memref<8x2048xf32, #tpu.memory_space<vmem>>, vector<8x256xf32>,
    %c0_16 = arith.constant 0 : index
    %c256 = arith.constant 256 : index
    %32 = vector.load %arg16[%c0_16, %c256] : memref<8x2048xf32, #tpu.memory_space<vmem>>, vector<8x256xf32>
    %33 = arith.mulf %32, %25 : vector<8x256xf32>
    %c0_17 = arith.constant 0 : index
    %c256_18 = arith.constant 256 : index
    %34 = vector.load %arg16[%c0_17, %c256_18] : memref<8x2048xf32, #tpu.memory_space<vmem>>, vector<8x256xf32>
    tpu.vector_store %arg16[%c0_17, %c256_18], %33 {strides = array<i32>} : memref<8x2048xf32, #tpu.memory_space<vmem>>, vector<8x256xf32>,
    %c0_19 = arith.constant 0 : index
    %c512 = arith.constant 512 : index
    %35 = vector.load %arg16[%c0_19, %c512] : memref<8x2048xf32, #tpu.memory_space<vmem>>, vector<8x256xf32>
    %36 = arith.mulf %35, %25 : vector<8x256xf32>
    %c0_20 = arith.constant 0 : index
    %c512_21 = arith.constant 512 : index
    %37 = vector.load %arg16[%c0_20, %c512_21] : memref<8x2048xf32, #tpu.memory_space<vmem>>, vector<8x256xf32>
    tpu.vector_store %arg16[%c0_20, %c512_21], %36 {strides = array<i32>} : memref<8x2048xf32, #tpu.memory_space<vmem>>, vector<8x256xf32>,
    %c0_22 = arith.constant 0 : index
    %c768 = arith.constant 768 : index
    %38 = vector.load %arg16[%c0_22, %c768] : memref<8x2048xf32, #tpu.memory_space<vmem>>, vector<8x256xf32>
    %39 = arith.mulf %38, %25 : vector<8x256xf32>
    %c0_23 = arith.constant 0 : index
    %c768_24 = arith.constant 768 : index
    %40 = vector.load %arg16[%c0_23, %c768_24] : memref<8x2048xf32, #tpu.memory_space<vmem>>, vector<8x256xf32>
    tpu.vector_store %arg16[%c0_23, %c768_24], %39 {strides = array<i32>} : memref<8x2048xf32, #tpu.memory_space<vmem>>, vector<8x256xf32>,
    %c0_25 = arith.constant 0 : index
    %c1024 = arith.constant 1024 : index
    %41 = vector.load %arg16[%c0_25, %c1024] : memref<8x2048xf32, #tpu.memory_space<vmem>>, vector<8x256xf32>
    %42 = arith.mulf %41, %25 : vector<8x256xf32>
    %c0_26 = arith.constant 0 : index
    %c1024_27 = arith.constant 1024 : index
    %43 = vector.load %arg16[%c0_26, %c1024_27] : memref<8x2048xf32, #tpu.memory_space<vmem>>, vector<8x256xf32>
    tpu.vector_store %arg16[%c0_26, %c1024_27], %42 {strides = array<i32>} : memref<8x2048xf32, #tpu.memory_space<vmem>>, vector<8x256xf32>,
    %c0_28 = arith.constant 0 : index
    %c1280 = arith.constant 1280 : index
    %44 = vector.load %arg16[%c0_28, %c1280] : memref<8x2048xf32, #tpu.memory_space<vmem>>, vector<8x256xf32>
    %45 = arith.mulf %44, %25 : vector<8x256xf32>
    %c0_29 = arith.constant 0 : index
    %c1280_30 = arith.constant 1280 : index
    %46 = vector.load %arg16[%c0_29, %c1280_30] : memref<8x2048xf32, #tpu.memory_space<vmem>>, vector<8x256xf32>
    tpu.vector_store %arg16[%c0_29, %c1280_30], %45 {strides = array<i32>} : memref<8x2048xf32, #tpu.memory_space<vmem>>, vector<8x256xf32>,
    %c0_31 = arith.constant 0 : index
    %c1536 = arith.constant 1536 : index
    %47 = vector.load %arg16[%c0_31, %c1536] : memref<8x2048xf32, #tpu.memory_space<vmem>>, vector<8x256xf32>
    %48 = arith.mulf %47, %25 : vector<8x256xf32>
    %c0_32 = arith.constant 0 : index
    %c1536_33 = arith.constant 1536 : index
    %49 = vector.load %arg16[%c0_32, %c1536_33] : memref<8x2048xf32, #tpu.memory_space<vmem>>, vector<8x256xf32>
    tpu.vector_store %arg16[%c0_32, %c1536_33], %48 {strides = array<i32>} : memref<8x2048xf32, #tpu.memory_space<vmem>>, vector<8x256xf32>,
    %c0_34 = arith.constant 0 : index
    %c1792 = arith.constant 1792 : index
    %50 = vector.load %arg16[%c0_34, %c1792] : memref<8x2048xf32, #tpu.memory_space<vmem>>, vector<8x256xf32>
    %51 = arith.mulf %50, %25 : vector<8x256xf32>
    %c0_35 = arith.constant 0 : index
    %c1792_36 = arith.constant 1792 : index
    %52 = vector.load %arg16[%c0_35, %c1792_36] : memref<8x2048xf32, #tpu.memory_space<vmem>>, vector<8x256xf32>
    tpu.vector_store %arg16[%c0_35, %c1792_36], %51 {strides = array<i32>} : memref<8x2048xf32, #tpu.memory_space<vmem>>, vector<8x256xf32>,
    %c0_37 = arith.constant 0 : index
    %c0_38 = arith.constant 0 : index
    %53 = vector.load %arg16[%c0_37, %c0_38] : memref<8x2048xf32, #tpu.memory_space<vmem>>, vector<8x2048xf32>
    %c0_39 = arith.constant 0 : index
    %c0_40 = arith.constant 0 : index
    %54 = vector.load %arg12[%c0_39, %c0_40] : memref<2048x128xf32, #tpu.memory_space<vmem>>, vector<2048x128xf32>
    %cst_41 = arith.constant dense<0.000000e+00> : vector<8x128xf32>
    %55 = tpu.matmul %53, %54, %cst_41 {dimension_numbers = #tpu.dot_dimension_numbers<[1], [0], [0], [1], [0, 0, 1, 1], [], []>} : vector<8x2048xf32>, vector<2048x128xf32>, vector<8x128xf32> -> vector<8x128xf32>
    %c0_42 = arith.constant 0 : index
    %c0_43 = arith.constant 0 : index
    %c0_44 = arith.constant 0 : index
    %56 = vector.load %arg13[%c0_42, %c0_43, %c0_44] : memref<1x1x128xf32, #tpu.memory_space<vmem>>, vector<1x1x128xf32>
    %57 = vector.shape_cast %56 : vector<1x1x128xf32> to vector<1x128xf32>
    %58 = vector.broadcast %57 : vector<1x128xf32> to vector<8x128xf32>
    %59 = arith.addf %55, %58 : vector<8x128xf32>
    %c0_45 = arith.constant 0 : index
    %c0_46 = arith.constant 0 : index
    %c0_47 = arith.constant 0 : index
    %60 = vector.load %arg14[%c0_45, %c0_46, %c0_47] : memref<1x8x128xf32, #tpu.memory_space<vmem>>, vector<1x8x128xf32>
    %61 = vector.shape_cast %60 : vector<1x8x128xf32> to vector<8x128xf32>
    %62 = vector.shape_cast %59 : vector<8x128xf32> to vector<1x8x128xf32>
    tpu.vector_store %arg14[%c0_45, %c0_46, %c0_47], %62 {strides = array<i32>} : memref<1x8x128xf32, #tpu.memory_space<vmem>>, vector<1x8x128xf32>,
    return
  }
  func.func @transform_0(%arg0: i32, %arg1: i32) -> (i32, i32, i32) {
    %c0_i32 = arith.constant 0 : i32
    %c0_i32_0 = arith.constant 0 : i32
    %c0_i32_1 = arith.constant 0 : i32
    return %arg0, %c0_i32, %c0_i32_0 : i32, i32, i32
  }
  func.func @transform_1(%arg0: i32, %arg1: i32) -> (i32, i32, i32) {
    %c0_i32 = arith.constant 0 : i32
    %c0_i32_0 = arith.constant 0 : i32
    %c0_i32_1 = arith.constant 0 : i32
    return %arg0, %c0_i32, %c0_i32_0 : i32, i32, i32
  }
  func.func @transform_2(%arg0: i32, %arg1: i32) -> (i32, i32, i32) {
    %c0_i32 = arith.constant 0 : i32
    %c0_i32_0 = arith.constant 0 : i32
    %c0_i32_1 = arith.constant 0 : i32
    return %arg0, %c0_i32, %c0_i32_0 : i32, i32, i32
  }
  func.func @transform_3(%arg0: i32, %arg1: i32) -> (i32, i32) {
    %c0_i32 = arith.constant 0 : i32
    %c0_i32_0 = arith.constant 0 : i32
    %c0_i32_1 = arith.constant 0 : i32
    return %c0_i32, %c0_i32_0 : i32, i32
  }
  func.func @transform_4(%arg0: i32, %arg1: i32) -> (i32, i32) {
    %c0_i32 = arith.constant 0 : i32
    %c0_i32_0 = arith.constant 0 : i32
    %c0_i32_1 = arith.constant 0 : i32
    return %c0_i32, %c0_i32_0 : i32, i32
  }
  func.func @transform_5(%arg0: i32, %arg1: i32) -> (i32, i32) {
    %c0_i32 = arith.constant 0 : i32
    %c0_i32_0 = arith.constant 0 : i32
    %c0_i32_1 = arith.constant 0 : i32
    return %c0_i32, %c0_i32_0 : i32, i32
  }
  func.func @transform_6(%arg0: i32, %arg1: i32) -> (i32, i32) {
    %c0_i32 = arith.constant 0 : i32
    %c0_i32_0 = arith.constant 0 : i32
    %c0_i32_1 = arith.constant 0 : i32
    return %c0_i32, %c0_i32_0 : i32, i32
  }
  func.func @transform_7(%arg0: i32, %arg1: i32) -> (i32, i32) {
    %c0_i32 = arith.constant 0 : i32
    %c0_i32_0 = arith.constant 0 : i32
    %c0_i32_1 = arith.constant 0 : i32
    return %c0_i32, %c0_i32_0 : i32, i32
  }
  func.func @transform_8(%arg0: i32, %arg1: i32) -> (i32, i32) {
    %c0_i32 = arith.constant 0 : i32
    %c0_i32_0 = arith.constant 0 : i32
    %c0_i32_1 = arith.constant 0 : i32
    return %c0_i32, %c0_i32_0 : i32, i32
  }
  func.func @transform_9(%arg0: i32, %arg1: i32) -> (i32, i32) {
    %c0_i32 = arith.constant 0 : i32
    %c0_i32_0 = arith.constant 0 : i32
    return %c0_i32, %arg1 : i32, i32
  }
  func.func @transform_10(%arg0: i32, %arg1: i32) -> (i32, i32) {
    %c0_i32 = arith.constant 0 : i32
    %c0_i32_0 = arith.constant 0 : i32
    %c0_i32_1 = arith.constant 0 : i32
    return %c0_i32, %c0_i32_0 : i32, i32
  }
  func.func @transform_11(%arg0: i32, %arg1: i32) -> (i32, i32, i32) {
    %c0_i32 = arith.constant 0 : i32
    %c0_i32_0 = arith.constant 0 : i32
    %c0_i32_1 = arith.constant 0 : i32
    return %arg1, %c0_i32, %c0_i32_0 : i32, i32, i32
  }
  func.func @transform_12(%arg0: i32, %arg1: i32) -> (i32, i32, i32) {
    %c0_i32 = arith.constant 0 : i32
    %c0_i32_0 = arith.constant 0 : i32
    return %arg0, %c0_i32, %arg1 : i32, i32, i32
  }
}

</mosaic_0001>

<llo_original>
// kernel: tpu_custom_call.1
$region0: #{tpu_custom_call.1}
  #allocation0 [shape = 'u32[]', space=smem, size = 0x4, offset = 0x4, fixed_abs, tag = 'smem constant byte address 0x4 - core index']
  #allocation1 [shape = 'u32[72,128]{1,0:T(1,128)}', space=vmem, size = 0x9000, scoped, tag = 'internal scratch']
  #allocation2 [shape = 'f32[16,256]{1,0:T(8,128)}', space=vmem, size = 0x4000, scoped, tag = 'scratch operand']
  #allocation3 [shape = 'f32[8,2048]{1,0:T(8,128)}', space=vmem, size = 0x10000, scoped, tag = 'scratch operand']
  %s0 = inlined_call_operand.hbm [shape: bf16[2,16,128], index: 0, kind: input, shape index: {}]
  %s1 = inlined_call_operand.hbm [shape: bf16[2,16,16], index: 1, kind: input, shape index: {}]
  %s2 = inlined_call_operand.hbm [shape: f32[2,16,256], index: 2, kind: input, shape index: {}]
  %s3 = inlined_call_operand.hbm [shape: bf16[128,768], index: 3, kind: input, shape index: {}]
  %s4 = inlined_call_operand.hbm [shape: f32[1,256], index: 4, kind: input, shape index: {}]
  %s5 = inlined_call_operand.hbm [shape: bf16[256,768], index: 5, kind: input, shape index: {}]
  %s6 = inlined_call_operand.hbm [shape: f32[1,256], index: 6, kind: input, shape index: {}]
  %s7 = inlined_call_operand.hbm [shape: bf16[256,768], index: 7, kind: input, shape index: {}]
  %s8 = inlined_call_operand.hbm [shape: f32[1,256], index: 8, kind: input, shape index: {}]
  %s9 = inlined_call_operand.hbm [shape: f32[256,2048], index: 9, kind: input, shape index: {}]
  %s10 = inlined_call_operand.hbm [shape: f32[2048,128], index: 10, kind: input, shape index: {}]
  %s11 = inlined_call_operand.hbm [shape: f32[1,1,128], index: 11, kind: input, shape index: {}]
  %s12 = inlined_call_operand.hbm [shape: f32[2,8,128], index: 12, kind: output, shape index: {}]
  %s13 = sld [smem:[#allocation0]]
  $region133: #{tpu_custom_call.1} parent=0
    _
  %s15 = ssub.s32 1, %s13
  %s16 = scalar_select 0, %s15, %s13
  $region1: #{tpu_custom_call.1} parent=0
    #allocation4 [shape = 'u8[8192]{0}', space=vmem, size = 0x2000, scoped, tag = 'input window, operand 0']
    #allocation5 [shape = 's32[2]{0}', space=sflag, size = 0x8, scoped, tag = 'scoped memory for tpu_custom_call.1']
    #allocation6 [shape = 's32[2]{0}', space=sflag, size = 0x8, scoped, tag = 'scoped memory for tpu_custom_call.1']
    #allocation7 [shape = 'u8[8192]{0}', space=vmem, size = 0x2000, scoped, tag = 'input window, operand 1']
    #allocation8 [shape = 's32[2]{0}', space=sflag, size = 0x8, scoped, tag = 'scoped memory for tpu_custom_call.1']
    #allocation9 [shape = 'u8[32768]{0}', space=vmem, size = 0x8000, scoped, tag = 'input window, operand 2']
    #allocation10 [shape = 'u8[196608]{0}', space=vmem, size = 0x30000, scoped, tag = 'input window, operand 3, single buffered']
    #allocation11 [shape = 's32[1]{0}', space=sflag, size = 0x4, scoped, tag = 'scoped memory for tpu_custom_call.1']
    #allocation12 [shape = 'u8[1024]{0}', space=vmem, size = 0x400, scoped, tag = 'input window, operand 4, single buffered']
    #allocation13 [shape = 'u8[393216]{0}', space=vmem, size = 0x60000, scoped, tag = 'input window, operand 5, single buffered']
    #allocation14 [shape = 's32[1]{0}', space=sflag, size = 0x4, scoped, tag = 'scoped memory for tpu_custom_call.1']
    #allocation15 [shape = 'u8[1024]{0}', space=vmem, size = 0x400, scoped, tag = 'input window, operand 6, single buffered']
    #allocation16 [shape = 'u8[393216]{0}', space=vmem, size = 0x60000, scoped, tag = 'input window, operand 7, single buffered']
    #allocation17 [shape = 's32[1]{0}', space=sflag, size = 0x4, scoped, tag = 'scoped memory for tpu_custom_call.1']
    #allocation18 [shape = 'u8[1024]{0}', space=vmem, size = 0x400, scoped, tag = 'input window, operand 8, single buffered']
    #allocation19 [shape = 'u8[2097152]{0}', space=vmem, size = 0x200000, scoped, tag = 'input window, operand 9, single buffered']
    #allocation20 [shape = 's32[1]{0}', space=sflag, size = 0x4, scoped, tag = 'scoped memory for tpu_custom_call.1']
    #allocation21 [shape = 'u8[1048576]{0}', space=vmem, size = 0x100000, scoped, tag = 'input window, operand 10, single buffered']
    #allocation22 [shape = 'u8[512]{0}', space=vmem, size = 0x400, scoped, tag = 'input window, operand 11, single buffered']
    #allocation23 [shape = 's32[1]{0}', space=sflag, size = 0x4, scoped, tag = 'scoped memory for tpu_custom_call.1']
    #allocation24 [shape = 'u8[8192]{0}', space=vmem, size = 0x2000, scoped, tag = 'output window, operand 0']
    %17 = vsyncpa [#allocation5], 0
    %s18 = scalar_lea.sflag [#allocation5], 1
    %19 = vsyncpa %s18, 0
    %20 = vsyncpa [#allocation8], 0
    %s21 = scalar_lea.sflag [#allocation8], 1
    %22 = vsyncpa %s21, 0
    %23 = vsyncpa [#allocation11], 0
    %24 = vsyncpa [#allocation14], 0
    %25 = vsyncpa [#allocation17], 0
    %26 = vsyncpa [#allocation20], 0
    %27 = vsyncpa [#allocation23], 0
    %28 = vsyncpa [#allocation6], 0
    %s29 = scalar_lea.sflag [#allocation6], 1
    %30 = vsyncpa %s29, 0
    loop: start=0, step=1, limit=4
    $region2: #{tpu_custom_call.1} parent=1 // loop_pre_header
      _
    $region3: #{tpu_custom_call.1} parent=1 // loop_header
      %s32 = sphi 0, %s36
      %p33 = scmp.ge.s32.totalorder %s32, 4
      %s39 = sphi 0, %s51
      %s40 = sphi 0, %s47
      %s41 = sphi 0, %s39
      %s42 = sphi 0, %s40
      %s43 = sphi 0, %s41
      %s44 = sphi 0, %s42
      %s54 = sphi 0, %s56
      %s57 = sphi 0, %s54
      %s58 = sphi 0, %s57
      %s74 = sphi 0, %s58
      %s80 = sphi 0, %s82
      %s83 = sphi 0, %s80
      %s84 = sphi 0, %s83
      %s100 = sphi 0, %s84
      %s106 = sphi 0, %s108
      %s109 = sphi 0, %s106
      %s110 = sphi 0, %s109
      %s126 = sphi 0, %s110
      %s130 = sphi 0, %s130
      %s132 = sphi 0, %s130
      %s133 = sphi 0, %s132
      %s147 = sphi 0, %s133
      %s151 = sphi 0, %s151
      %s153 = sphi 0, %s151
      %s154 = sphi 0, %s153
      %s168 = sphi 0, %s154
      %s172 = sphi 0, %s172
      %s174 = sphi 0, %s172
      %s175 = sphi 0, %s174
      %s189 = sphi 0, %s175
      %s193 = sphi 0, %s193
      %s195 = sphi 0, %s193
      %s196 = sphi 0, %s195
      %s210 = sphi 0, %s196
      %s214 = sphi 0, %s214
      %s216 = sphi 0, %s214
      %s217 = sphi 0, %s216
      %s231 = sphi 0, %s217
      %s235 = sphi 0, %s235
      %s237 = sphi 0, %s235
      %s238 = sphi 0, %s237
      %s252 = sphi 0, %s238
      %s258 = sphi 0, %s260
      %s261 = sphi 0, %s258
      %s262 = sphi 0, %s261
      %s278 = sphi 0, %s262
      %s282 = sphi 0, %s282
      %s284 = sphi 0, %s282
      %s285 = sphi 0, %s284
      %s299 = sphi 0, %s285
      %s305 = sphi 0, %s307
      %s308 = sphi 0, %s305
      %s309 = sphi 0, %s308
      %s325 = sphi 0, %s309
      %s333 = sphi 0, %s335
      %s336 = sphi 0, %s333
      %s337 = sphi 0, %s336
      %s353 = sphi 0, %s337
    $region4: #{tpu_custom_call.1} parent=1 // loop_header_branch
      %35 = sbr.rel (%p33) target = $region8
    $region5: #{tpu_custom_call.1} parent=1 // loop_body
      %s37 = ssub.s32 %s32, 1
      %s38 = ssub.s32 %s32, 2
      %s45 = sadd.s32 1, %s40
      %p46 = scmp.ge.s32.totalorder %s45, 1
      %s47 = scalar_select %p46, 0, %s45
      %s48 = sadd.s32 1, %s39
      %s49 = scalar_select %p46, %s48, %s39
      %p50 = scmp.ge.s32.totalorder %s49, 2
      %s51 = scalar_select %p50, 0, %s49
      %s52 = ssub.s32 %s39, %s51
      %p53 = scmp.eq.s32.totalorder %s52, 0
      %s55 = sadd.s32 %s54, 1
      %s56 = scalar_select %p53, %s54, %s55
      %p59 = pneg %p53
      %p60 = scmp.eq.s32.totalorder %s32, 1
      %p61 = por %p59, %p60
      %p62 = scmp.ne.s32.totalorder %s54, %s57
      %p63 = scmp.eq.s32.totalorder %s32, 0
      %p64 = por %p62, %p63
      %p65 = scmp.ne.s32.totalorder %s54, %s57
      %p66 = scmp.eq.s32.totalorder %s37, 1
      %p67 = por %p65, %p66
      %p68 = scmp.ne.s32.totalorder %s57, %s58
      %p69 = scmp.eq.s32.totalorder %s37, 0
      %p70 = por %p68, %p69
      %p71 = scmp.ne.s32.totalorder %s57, %s58
      %p72 = scmp.eq.s32.totalorder %s38, 1
      %p73 = por %p71, %p72
      %p75 = scmp.ne.s32.totalorder %s58, %s74
      %p76 = scmp.eq.s32.totalorder %s38, 0
      %p77 = por %p75, %p76
      %s78 = ssub.s32 %s39, %s51
      %p79 = scmp.eq.s32.totalorder %s78, 0
      %s81 = sadd.s32 %s80, 1
      %s82 = scalar_select %p79, %s80, %s81
      %p85 = pneg %p79
      %p86 = scmp.eq.s32.totalorder %s32, 1
      %p87 = por %p85, %p86
      %p88 = scmp.ne.s32.totalorder %s80, %s83
      %p89 = scmp.eq.s32.totalorder %s32, 0
      %p90 = por %p88, %p89
      %p91 = scmp.ne.s32.totalorder %s80, %s83
      %p92 = scmp.eq.s32.totalorder %s37, 1
      %p93 = por %p91, %p92
      %p94 = scmp.ne.s32.totalorder %s83, %s84
      %p95 = scmp.eq.s32.totalorder %s37, 0
      %p96 = por %p94, %p95
      %p97 = scmp.ne.s32.totalorder %s83, %s84
      %p98 = scmp.eq.s32.totalorder %s38, 1
      %p99 = por %p97, %p98
      %p101 = scmp.ne.s32.totalorder %s84, %s100
      %p102 = scmp.eq.s32.totalorder %s38, 0
      %p103 = por %p101, %p102
      %s104 = ssub.s32 %s39, %s51
      %p105 = scmp.eq.s32.totalorder %s104, 0
      %s107 = sadd.s32 %s106, 1
      %s108 = scalar_select %p105, %s106, %s107
      %p111 = pneg %p105
      %p112 = scmp.eq.s32.totalorder %s32, 1
      %p113 = por %p111, %p112
      %p114 = scmp.ne.s32.totalorder %s106, %s109
      %p115 = scmp.eq.s32.totalorder %s32, 0
      %p116 = por %p114, %p115
      %p117 = scmp.ne.s32.totalorder %s106, %s109
      %p118 = scmp.eq.s32.totalorder %s37, 1
      %p119 = por %p117, %p118
      %p120 = scmp.ne.s32.totalorder %s109, %s110
      %p121 = scmp.eq.s32.totalorder %s37, 0
      %p122 = por %p120, %p121
      %p123 = scmp.ne.s32.totalorder %s109, %s110
      %p124 = scmp.eq.s32.totalorder %s38, 1
      %p125 = por %p123, %p124
      %p127 = scmp.ne.s32.totalorder %s110, %s126
      %p128 = scmp.eq.s32.totalorder %s38, 0
      %p129 = por %p127, %p128
      %s131 = sadd.s32 %s130, 1
      %p134 = scmp.eq.s32.totalorder %s32, 1
      %p135 = scmp.ne.s32.totalorder %s130, %s132
      %p136 = scmp.eq.s32.totalorder %s32, 0
      %p137 = por %p135, %p136
      %p138 = scmp.ne.s32.totalorder %s130, %s132
      %p139 = scmp.eq.s32.totalorder %s37, 1
      %p140 = por %p138, %p139
      %p141 = scmp.ne.s32.totalorder %s132, %s133
      %p142 = scmp.eq.s32.totalorder %s37, 0
      %p143 = por %p141, %p142
      %p144 = scmp.ne.s32.totalorder %s132, %s133
      %p145 = scmp.eq.s32.totalorder %s38, 1
      %p146 = por %p144, %p145
      %p148 = scmp.ne.s32.totalorder %s133, %s147
      %p149 = scmp.eq.s32.totalorder %s38, 0
      %p150 = por %p148, %p149
      %s152 = sadd.s32 %s151, 1
      %p155 = scmp.eq.s32.totalorder %s32, 1
      %p156 = scmp.ne.s32.totalorder %s151, %s153
      %p157 = scmp.eq.s32.totalorder %s32, 0
      %p158 = por %p156, %p157
      %p159 = scmp.ne.s32.totalorder %s151, %s153
      %p160 = scmp.eq.s32.totalorder %s37, 1
      %p161 = por %p159, %p160
      %p162 = scmp.ne.s32.totalorder %s153, %s154
      %p163 = scmp.eq.s32.totalorder %s37, 0
      %p164 = por %p162, %p163
      %p165 = scmp.ne.s32.totalorder %s153, %s154
      %p166 = scmp.eq.s32.totalorder %s38, 1
      %p167 = por %p165, %p166
      %p169 = scmp.ne.s32.totalorder %s154, %s168
      %p170 = scmp.eq.s32.totalorder %s38, 0
      %p171 = por %p169, %p170
      %s173 = sadd.s32 %s172, 1
      %p176 = scmp.eq.s32.totalorder %s32, 1
      %p177 = scmp.ne.s32.totalorder %s172, %s174
      %p178 = scmp.eq.s32.totalorder %s32, 0
      %p179 = por %p177, %p178
      %p180 = scmp.ne.s32.totalorder %s172, %s174
      %p181 = scmp.eq.s32.totalorder %s37, 1
      %p182 = por %p180, %p181
      %p183 = scmp.ne.s32.totalorder %s174, %s175
      %p184 = scmp.eq.s32.totalorder %s37, 0
      %p185 = por %p183, %p184
      %p186 = scmp.ne.s32.totalorder %s174, %s175
      %p187 = scmp.eq.s32.totalorder %s38, 1
      %p188 = por %p186, %p187
      %p190 = scmp.ne.s32.totalorder %s175, %s189
      %p191 = scmp.eq.s32.totalorder %s38, 0
      %p192 = por %p190, %p191
      %s194 = sadd.s32 %s193, 1
      %p197 = scmp.eq.s32.totalorder %s32, 1
      %p198 = scmp.ne.s32.totalorder %s193, %s195
      %p199 = scmp.eq.s32.totalorder %s32, 0
      %p200 = por %p198, %p199
      %p201 = scmp.ne.s32.totalorder %s193, %s195
      %p202 = scmp.eq.s32.totalorder %s37, 1
      %p203 = por %p201, %p202
      %p204 = scmp.ne.s32.totalorder %s195, %s196
      %p205 = scmp.eq.s32.totalorder %s37, 0
      %p206 = por %p204, %p205
      %p207 = scmp.ne.s32.totalorder %s195, %s196
      %p208 = scmp.eq.s32.totalorder %s38, 1
      %p209 = por %p207, %p208
      %p211 = scmp.ne.s32.totalorder %s196, %s210
      %p212 = scmp.eq.s32.totalorder %s38, 0
      %p213 = por %p211, %p212
      %s215 = sadd.s32 %s214, 1
      %p218 = scmp.eq.s32.totalorder %s32, 1
      %p219 = scmp.ne.s32.totalorder %s214, %s216
      %p220 = scmp.eq.s32.totalorder %s32, 0
      %p221 = por %p219, %p220
      %p222 = scmp.ne.s32.totalorder %s214, %s216
      %p223 = scmp.eq.s32.totalorder %s37, 1
      %p224 = por %p222, %p223
      %p225 = scmp.ne.s32.totalorder %s216, %s217
      %p226 = scmp.eq.s32.totalorder %s37, 0
      %p227 = por %p225, %p226
      %p228 = scmp.ne.s32.totalorder %s216, %s217
      %p229 = scmp.eq.s32.totalorder %s38, 1
      %p230 = por %p228, %p229
      %p232 = scmp.ne.s32.totalorder %s217, %s231
      %p233 = scmp.eq.s32.totalorder %s38, 0
      %p234 = por %p232, %p233
      %s236 = sadd.s32 %s235, 1
      %p239 = scmp.eq.s32.totalorder %s32, 1
      %p240 = scmp.ne.s32.totalorder %s235, %s237
      %p241 = scmp.eq.s32.totalorder %s32, 0
      %p242 = por %p240, %p241
      %p243 = scmp.ne.s32.totalorder %s235, %s237
      %p244 = scmp.eq.s32.totalorder %s37, 1
      %p245 = por %p243, %p244
      %p246 = scmp.ne.s32.totalorder %s237, %s238
      %p247 = scmp.eq.s32.totalorder %s37, 0
      %p248 = por %p246, %p247
      %p249 = scmp.ne.s32.totalorder %s237, %s238
      %p250 = scmp.eq.s32.totalorder %s38, 1
      %p251 = por %p249, %p250
      %p253 = scmp.ne.s32.totalorder %s238, %s252
      %p254 = scmp.eq.s32.totalorder %s38, 0
      %p255 = por %p253, %p254
      %s256 = ssub.s32 %s40, %s47
      %p257 = scmp.eq.s32.totalorder %s256, 0
      %s259 = sadd.s32 %s258, 1
      %s260 = scalar_select %p257, %s258, %s259
      %p263 = pneg %p257
      %p264 = scmp.eq.s32.totalorder %s32, 1
      %p265 = por %p263, %p264
      %p266 = scmp.ne.s32.totalorder %s258, %s261
      %p267 = scmp.eq.s32.totalorder %s32, 0
      %p268 = por %p266, %p267
      %p269 = scmp.ne.s32.totalorder %s258, %s261
      %p270 = scmp.eq.s32.totalorder %s37, 1
      %p271 = por %p269, %p270
      %p272 = scmp.ne.s32.totalorder %s261, %s262
      %p273 = scmp.eq.s32.totalorder %s37, 0
      %p274 = por %p272, %p273
      %p275 = scmp.ne.s32.totalorder %s261, %s262
      %p276 = scmp.eq.s32.totalorder %s38, 1
      %p277 = por %p275, %p276
      %p279 = scmp.ne.s32.totalorder %s262, %s278
      %p280 = scmp.eq.s32.totalorder %s38, 0
      %p281 = por %p279, %p280
      %s283 = sadd.s32 %s282, 1
      %p286 = scmp.eq.s32.totalorder %s32, 1
      %p287 = scmp.ne.s32.totalorder %s282, %s284
      %p288 = scmp.eq.s32.totalorder %s32, 0
      %p289 = por %p287, %p288
      %p290 = scmp.ne.s32.totalorder %s282, %s284
      %p291 = scmp.eq.s32.totalorder %s37, 1
      %p292 = por %p290, %p291
      %p293 = scmp.ne.s32.totalorder %s284, %s285
      %p294 = scmp.eq.s32.totalorder %s37, 0
      %p295 = por %p293, %p294
      %p296 = scmp.ne.s32.totalorder %s284, %s285
      %p297 = scmp.eq.s32.totalorder %s38, 1
      %p298 = por %p296, %p297
      %p300 = scmp.ne.s32.totalorder %s285, %s299
      %p301 = scmp.eq.s32.totalorder %s38, 0
      %p302 = por %p300, %p301
      %s303 = ssub.s32 %s40, %s47
      %p304 = scmp.eq.s32.totalorder %s303, 0
      %s306 = sadd.s32 %s305, 1
      %s307 = scalar_select %p304, %s305, %s306
      %p310 = pneg %p304
      %p311 = scmp.eq.s32.totalorder %s32, 1
      %p312 = por %p310, %p311
      %p313 = scmp.ne.s32.totalorder %s305, %s308
      %p314 = scmp.eq.s32.totalorder %s32, 0
      %p315 = por %p313, %p314
      %p316 = scmp.ne.s32.totalorder %s305, %s308
      %p317 = scmp.eq.s32.totalorder %s37, 1
      %p318 = por %p316, %p317
      %p319 = scmp.ne.s32.totalorder %s308, %s309
      %p320 = scmp.eq.s32.totalorder %s37, 0
      %p321 = por %p319, %p320
      %p322 = scmp.ne.s32.totalorder %s308, %s309
      %p323 = scmp.eq.s32.totalorder %s38, 1
      %p324 = por %p322, %p323
      %p326 = scmp.ne.s32.totalorder %s309, %s325
      %p327 = scmp.eq.s32.totalorder %s38, 0
      %p328 = por %p326, %p327
      %s329 = ssub.s32 %s39, %s51
      %s330 = ssub.s32 %s40, %s47
      %s331 = sor.u32 %s329, %s330
      %p332 = scmp.eq.s32.totalorder %s331, 0
      %s334 = sadd.s32 %s333, 1
      %s335 = scalar_select %p332, %s333, %s334
      %p338 = pneg %p332
      %p339 = scmp.eq.s32.totalorder %s32, 1
      %p340 = por %p338, %p339
      %p341 = scmp.ne.s32.totalorder %s333, %s336
      %p342 = scmp.eq.s32.totalorder %s32, 0
      %p343 = por %p341, %p342
      %p344 = scmp.ne.s32.totalorder %s333, %s336
      %p345 = scmp.eq.s32.totalorder %s37, 1
      %p346 = por %p344, %p345
      %p347 = scmp.ne.s32.totalorder %s336, %s337
      %p348 = scmp.eq.s32.totalorder %s37, 0
      %p349 = por %p347, %p348
      %p350 = scmp.ne.s32.totalorder %s336, %s337
      %p351 = scmp.eq.s32.totalorder %s38, 1
      %p352 = por %p350, %p351
      %p354 = scmp.ne.s32.totalorder %s337, %s353
      %p355 = scmp.eq.s32.totalorder %s38, 0
      %p356 = por %p354, %p355
      %p357 = scmp.le.s32.totalorder 1, %s32
      %p358 = scmp.lt.s32.totalorder %s32, 3
      %p359 = pnand %p357, %p358
      %p360 = pneg %p359
      // Predicated region
      $region9: #{tpu_custom_call.1} parent=5 // pred_check
        _
      $region10: #{tpu_custom_call.1} parent=5 // pred_check_branch
        %362 = sbr.rel (%p359) target = $region12
      $region11: #{tpu_custom_call.1} parent=5 // pred_region
        %s363 = ssub.s32 %s32, 1
        // Predicated region
        $region13: #{tpu_custom_call.1} parent=11 // pred_check
          %p364 = pneg %p143
        $region14: #{tpu_custom_call.1} parent=11 // pred_check_branch
          %366 = sbr.rel (%p364) target = $region16
        $region15: #{tpu_custom_call.1} parent=11 // pred_region
          %368 = vsyncadd [#allocation11], 0
          %s369 = sshll.u32 %s3, 4
          %s370 = int_to_ptr.hbm [resolvable:$true] %s369
          %s371 = sshll.u32 [#allocation10], 4
          %s372 = int_to_ptr.vmem [resolvable:$true] %s371
          %377 = dma.hbm_to_vmem [thread:$0]  %s370, 6144, %s372, [#allocation11], 384, 384, 24
        $region16: #{tpu_custom_call.1} parent=11 // pred_fallthru
          _
        // Predicated region
        $region17: #{tpu_custom_call.1} parent=11 // pred_check
          %p378 = pneg %p164
        $region18: #{tpu_custom_call.1} parent=11 // pred_check_branch
          %380 = sbr.rel (%p378) target = $region20
        $region19: #{tpu_custom_call.1} parent=11 // pred_region
          %382 = vsyncadd [#allocation11], 0
          %s384 = sshll.u32 %s4, 4
          %s385 = int_to_ptr.hbm [resolvable:$true] %s384
          %s386 = sshll.u32 [#allocation12], 4
          %s387 = int_to_ptr.vmem [resolvable:$true] %s386
          %389 = dma.hbm_to_vmem [thread:$0]  %s385, 32, %s387, [#allocation11]
        $region20: #{tpu_custom_call.1} parent=11 // pred_fallthru
          _
        // Predicated region
        $region21: #{tpu_custom_call.1} parent=11 // pred_check
          %p390 = pneg %p185
        $region22: #{tpu_custom_call.1} parent=11 // pred_check_branch
          %392 = sbr.rel (%p390) target = $region24
        $region23: #{tpu_custom_call.1} parent=11 // pred_region
          %394 = vsyncadd [#allocation14], 0
          %s395 = sshll.u32 %s5, 4
          %s396 = int_to_ptr.hbm [resolvable:$true] %s395
          %s397 = sshll.u32 [#allocation13], 4
          %s398 = int_to_ptr.vmem [resolvable:$true] %s397
          %403 = dma.hbm_to_vmem [thread:$0]  %s396, 12288, %s398, [#allocation14], 384, 384, 24
        $region24: #{tpu_custom_call.1} parent=11 // pred_fallthru
          _
        // Predicated region
        $region25: #{tpu_custom_call.1} parent=11 // pred_check
          %p404 = pneg %p206
        $region26: #{tpu_custom_call.1} parent=11 // pred_check_branch
          %406 = sbr.rel (%p404) target = $region28
        $region27: #{tpu_custom_call.1} parent=11 // pred_region
          %408 = vsyncadd [#allocation14], 0
          %s410 = sshll.u32 %s6, 4
          %s411 = int_to_ptr.hbm [resolvable:$true] %s410
          %s412 = sshll.u32 [#allocation15], 4
          %s413 = int_to_ptr.vmem [resolvable:$true] %s412
          %415 = dma.hbm_to_vmem [thread:$0]  %s411, 32, %s413, [#allocation14]
        $region28: #{tpu_custom_call.1} parent=11 // pred_fallthru
          _
        // Predicated region
        $region29: #{tpu_custom_call.1} parent=11 // pred_check
          %p416 = pneg %p227
        $region30: #{tpu_custom_call.1} parent=11 // pred_check_branch
          %418 = sbr.rel (%p416) target = $region32
        $region31: #{tpu_custom_call.1} parent=11 // pred_region
          %420 = vsyncadd [#allocation17], 0
          %s421 = sshll.u32 %s7, 4
          %s422 = int_to_ptr.hbm [resolvable:$true] %s421
          %s423 = sshll.u32 [#allocation16], 4
          %s424 = int_to_ptr.vmem [resolvable:$true] %s423
          %429 = dma.hbm_to_vmem [thread:$0]  %s422, 12288, %s424, [#allocation17], 384, 384, 24
        $region32: #{tpu_custom_call.1} parent=11 // pred_fallthru
          _
        // Predicated region
        $region33: #{tpu_custom_call.1} parent=11 // pred_check
          %p430 = pneg %p248
        $region34: #{tpu_custom_call.1} parent=11 // pred_check_branch
          %432 = sbr.rel (%p430) target = $region36
        $region35: #{tpu_custom_call.1} parent=11 // pred_region
          %434 = vsyncadd [#allocation17], 0
          %s436 = sshll.u32 %s8, 4
          %s437 = int_to_ptr.hbm [resolvable:$true] %s436
          %s438 = sshll.u32 [#allocation18], 4
          %s439 = int_to_ptr.vmem [resolvable:$true] %s438
          %441 = dma.hbm_to_vmem [thread:$0]  %s437, 32, %s439, [#allocation17]
        $region36: #{tpu_custom_call.1} parent=11 // pred_fallthru
          _
        // Predicated region
        $region37: #{tpu_custom_call.1} parent=11 // pred_check
          %p442 = pneg %p274
        $region38: #{tpu_custom_call.1} parent=11 // pred_check_branch
          %444 = sbr.rel (%p442) target = $region40
        $region39: #{tpu_custom_call.1} parent=11 // pred_region
          %s445 = smul.u32 16, %s42
          %447 = vsyncadd [#allocation20], 0
          %s448 = smul.addr %s445, 8
          %s449 = scalar_lea.hbm %s9, %s448
          %s450 = sshll.u32 %s449, 4
          %s451 = int_to_ptr.hbm [resolvable:$true] %s450
          %s452 = sshll.u32 [#allocation19], 4
          %s453 = int_to_ptr.vmem [resolvable:$true] %s452
          %458 = dma.hbm_to_vmem [thread:$0]  %s451, 65536, %s453, [#allocation20], 2048, 2048, 128
        $region40: #{tpu_custom_call.1} parent=11 // pred_fallthru
          _
        // Predicated region
        $region41: #{tpu_custom_call.1} parent=11 // pred_check
          %p459 = pneg %p295
        $region42: #{tpu_custom_call.1} parent=11 // pred_check_branch
          %461 = sbr.rel (%p459) target = $region44
        $region43: #{tpu_custom_call.1} parent=11 // pred_region
          %463 = vsyncadd [#allocation20], 0
          %s464 = sshll.u32 %s10, 4
          %s465 = int_to_ptr.hbm [resolvable:$true] %s464
          %s466 = sshll.u32 [#allocation21], 4
          %s467 = int_to_ptr.vmem [resolvable:$true] %s466
          %472 = dma.hbm_to_vmem [thread:$0]  %s465, 32768, %s467, [#allocation20], 128, 128, 8
        $region44: #{tpu_custom_call.1} parent=11 // pred_fallthru
          _
        // Predicated region
        $region45: #{tpu_custom_call.1} parent=11 // pred_check
          %p473 = pneg %p321
        $region46: #{tpu_custom_call.1} parent=11 // pred_check_branch
          %475 = sbr.rel (%p473) target = $region48
        $region47: #{tpu_custom_call.1} parent=11 // pred_region
          %477 = vsyncadd [#allocation23], 0
          %s478 = scalar_lea.hbm %s11, %s42
          %s480 = sshll.u32 %s478, 4
          %s481 = int_to_ptr.hbm [resolvable:$true] %s480
          %s482 = sshll.u32 [#allocation22], 4
          %s483 = int_to_ptr.vmem [resolvable:$true] %s482
          %485 = dma.hbm_to_vmem [thread:$0]  %s481, 16, %s483, [#allocation23]
        $region48: #{tpu_custom_call.1} parent=11 // pred_fallthru
          _
      $region12: #{tpu_custom_call.1} parent=5 // pred_fallthru
        _
      %p486 = scmp.lt.s32.totalorder %s32, 2
      // Predicated region
      $region49: #{tpu_custom_call.1} parent=5 // pred_check
        %p487 = pneg %p486
      $region50: #{tpu_custom_call.1} parent=5 // pred_check_branch
        %489 = sbr.rel (%p487) target = $region52
      $region51: #{tpu_custom_call.1} parent=5 // pred_region
        // Predicated region
        $region53: #{tpu_custom_call.1} parent=51 // pred_check
          %p490 = pneg %p64
        $region54: #{tpu_custom_call.1} parent=51 // pred_check_branch
          %492 = sbr.rel (%p490) target = $region56
        $region55: #{tpu_custom_call.1} parent=51 // pred_region
          %s493 = sand.u32 %s54, 1
          %s494 = scalar_lea.sflag [#allocation5], %s493
          %s495 = sand.u32 %s54, 1
          %s496 = smul.addr %s495, 8
          %s497 = scalar_lea.vmem [#allocation4], %s496
          %499 = vsyncadd %s494, 0
          %s500 = smul.addr %s39, 2
          %s501 = smul.addr %s500, 4
          %s502 = scalar_lea.hbm %s0, %s501
          %s503 = sshll.u32 %s502, 4
          %s504 = int_to_ptr.hbm [resolvable:$true] %s503
          %s505 = sshll.u32 %s497, 4
          %s506 = int_to_ptr.vmem [resolvable:$true] %s505
          %511 = dma.hbm_to_vmem [thread:$0]  %s504, 128, %s506, %s494, 64, 64, 4
        $region56: #{tpu_custom_call.1} parent=51 // pred_fallthru
          _
        // Predicated region
        $region57: #{tpu_custom_call.1} parent=51 // pred_check
          %p512 = pneg %p90
        $region58: #{tpu_custom_call.1} parent=51 // pred_check_branch
          %514 = sbr.rel (%p512) target = $region60
        $region59: #{tpu_custom_call.1} parent=51 // pred_region
          %s515 = sand.u32 %s32, 1
          %s516 = scalar_lea.sflag [#allocation8], %s515
          %s517 = sand.u32 %s80, 1
          %s518 = smul.addr %s517, 8
          %s519 = scalar_lea.vmem [#allocation7], %s518
          %521 = vsyncadd %s516, 0
          %s522 = smul.addr %s39, 2
          %s523 = smul.addr %s522, 4
          %s524 = scalar_lea.hbm %s1, %s523
          %s525 = sshll.u32 %s524, 4
          %s526 = int_to_ptr.hbm [resolvable:$true] %s525
          %s527 = sshll.u32 %s519, 4
          %s528 = int_to_ptr.vmem [resolvable:$true] %s527
          %533 = dma.hbm_to_vmem [thread:$0]  %s526, 128, %s528, %s516, 64, 64, 4
        $region60: #{tpu_custom_call.1} parent=51 // pred_fallthru
          _
        // Predicated region
        $region61: #{tpu_custom_call.1} parent=51 // pred_check
          %p534 = pneg %p116
        $region62: #{tpu_custom_call.1} parent=51 // pred_check_branch
          %536 = sbr.rel (%p534) target = $region64
        $region63: #{tpu_custom_call.1} parent=51 // pred_region
          %s537 = sand.u32 %s32, 1
          %s538 = scalar_lea.sflag [#allocation8], %s537
          %s539 = sand.u32 %s106, 1
          %s540 = smul.addr %s539, 32
          %s541 = scalar_lea.vmem [#allocation9], %s540
          %543 = vsyncadd %s538, 0
          %s544 = smul.addr %s39, 4
          %s545 = smul.addr %s544, 8
          %s546 = scalar_lea.hbm %s2, %s545
          %s547 = sshll.u32 %s546, 4
          %s548 = int_to_ptr.hbm [resolvable:$true] %s547
          %s549 = sshll.u32 %s541, 4
          %s550 = int_to_ptr.vmem [resolvable:$true] %s549
          %555 = dma.hbm_to_vmem [thread:$0]  %s548, 512, %s550, %s538, 256, 256, 16
        $region64: #{tpu_custom_call.1} parent=51 // pred_fallthru
          _
      $region52: #{tpu_custom_call.1} parent=5 // pred_fallthru
        _
      %p556 = scmp.le.s32.totalorder 1, %s32
      %p557 = scmp.lt.s32.totalorder %s32, 3
      %p558 = pnand %p556, %p557
      %p559 = pneg %p558
      // Predicated region
      $region65: #{tpu_custom_call.1} parent=5 // pred_check
        _
      $region66: #{tpu_custom_call.1} parent=5 // pred_check_branch
        %561 = sbr.rel (%p558) target = $region68
      $region67: #{tpu_custom_call.1} parent=5 // pred_region
        %s562 = ssub.s32 %s32, 1
        %s563 = sand.u32 %s57, 1
        %s564 = scalar_lea.sflag [#allocation5], %s563
        %s565 = sand.u32 %s57, 1
        %s566 = smul.addr %s565, 8
        %s567 = scalar_lea.vmem [#allocation4], %s566
        // Predicated region
        $region69: #{tpu_custom_call.1} parent=67 // pred_check
          %p568 = pneg %p70
        $region70: #{tpu_custom_call.1} parent=67 // pred_check_branch
          %570 = sbr.rel (%p568) target = $region72
        $region71: #{tpu_custom_call.1} parent=67 // pred_region
          %572 = dma.done %s564, 128
        $region72: #{tpu_custom_call.1} parent=67 // pred_fallthru
          _
        %s573 = sand.u32 %s37, 1
        %s574 = scalar_lea.sflag [#allocation8], %s573
        %s575 = sand.u32 %s83, 1
        %s576 = smul.addr %s575, 8
        %s577 = scalar_lea.vmem [#allocation7], %s576
        // Predicated region
        $region73: #{tpu_custom_call.1} parent=67 // pred_check
          %p578 = pneg %p96
        $region74: #{tpu_custom_call.1} parent=67 // pred_check_branch
          %580 = sbr.rel (%p578) target = $region76
        $region75: #{tpu_custom_call.1} parent=67 // pred_region
          %582 = dma.done %s574, 128
        $region76: #{tpu_custom_call.1} parent=67 // pred_fallthru
          _
        %s583 = sand.u32 %s37, 1
        %s584 = scalar_lea.sflag [#allocation8], %s583
        %s585 = sand.u32 %s109, 1
        %s586 = smul.addr %s585, 32
        %s587 = scalar_lea.vmem [#allocation9], %s586
        // Predicated region
        $region77: #{tpu_custom_call.1} parent=67 // pred_check
          %p588 = pneg %p122
        $region78: #{tpu_custom_call.1} parent=67 // pred_check_branch
          %590 = sbr.rel (%p588) target = $region80
        $region79: #{tpu_custom_call.1} parent=67 // pred_region
          %592 = dma.done %s584, 512
        $region80: #{tpu_custom_call.1} parent=67 // pred_fallthru
          _
        // Predicated region
        $region81: #{tpu_custom_call.1} parent=67 // pred_check
          %p593 = pneg %p143
        $region82: #{tpu_custom_call.1} parent=67 // pred_check_branch
          %595 = sbr.rel (%p593) target = $region84
        $region83: #{tpu_custom_call.1} parent=67 // pred_region
          %597 = dma.done [#allocation11], 6144
        $region84: #{tpu_custom_call.1} parent=67 // pred_fallthru
          _
        // Predicated region
        $region85: #{tpu_custom_call.1} parent=67 // pred_check
          %p598 = pneg %p164
        $region86: #{tpu_custom_call.1} parent=67 // pred_check_branch
          %600 = sbr.rel (%p598) target = $region88
        $region87: #{tpu_custom_call.1} parent=67 // pred_region
          %602 = dma.done [#allocation11], 32
        $region88: #{tpu_custom_call.1} parent=67 // pred_fallthru
          _
        // Predicated region
        $region89: #{tpu_custom_call.1} parent=67 // pred_check
          %p603 = pneg %p185
        $region90: #{tpu_custom_call.1} parent=67 // pred_check_branch
          %605 = sbr.rel (%p603) target = $region92
        $region91: #{tpu_custom_call.1} parent=67 // pred_region
          %607 = dma.done [#allocation14], 12288
        $region92: #{tpu_custom_call.1} parent=67 // pred_fallthru
          _
        // Predicated region
        $region93: #{tpu_custom_call.1} parent=67 // pred_check
          %p608 = pneg %p206
        $region94: #{tpu_custom_call.1} parent=67 // pred_check_branch
          %610 = sbr.rel (%p608) target = $region96
        $region95: #{tpu_custom_call.1} parent=67 // pred_region
          %612 = dma.done [#allocation14], 32
        $region96: #{tpu_custom_call.1} parent=67 // pred_fallthru
          _
        // Predicated region
        $region97: #{tpu_custom_call.1} parent=67 // pred_check
          %p613 = pneg %p227
        $region98: #{tpu_custom_call.1} parent=67 // pred_check_branch
          %615 = sbr.rel (%p613) target = $region100
        $region99: #{tpu_custom_call.1} parent=67 // pred_region
          %617 = dma.done [#allocation17], 12288
        $region100: #{tpu_custom_call.1} parent=67 // pred_fallthru
          _
        // Predicated region
        $region101: #{tpu_custom_call.1} parent=67 // pred_check
          %p618 = pneg %p248
        $region102: #{tpu_custom_call.1} parent=67 // pred_check_branch
          %620 = sbr.rel (%p618) target = $region104
        $region103: #{tpu_custom_call.1} parent=67 // pred_region
          %622 = dma.done [#allocation17], 32
        $region104: #{tpu_custom_call.1} parent=67 // pred_fallthru
          _
        // Predicated region
        $region105: #{tpu_custom_call.1} parent=67 // pred_check
          %p623 = pneg %p274
        $region106: #{tpu_custom_call.1} parent=67 // pred_check_branch
          %625 = sbr.rel (%p623) target = $region108
        $region107: #{tpu_custom_call.1} parent=67 // pred_region
          %627 = dma.done [#allocation20], 65536
        $region108: #{tpu_custom_call.1} parent=67 // pred_fallthru
          _
        // Predicated region
        $region109: #{tpu_custom_call.1} parent=67 // pred_check
          %p628 = pneg %p295
        $region110: #{tpu_custom_call.1} parent=67 // pred_check_branch
          %630 = sbr.rel (%p628) target = $region112
        $region111: #{tpu_custom_call.1} parent=67 // pred_region
          %632 = dma.done [#allocation20], 32768
        $region112: #{tpu_custom_call.1} parent=67 // pred_fallthru
          _
        // Predicated region
        $region113: #{tpu_custom_call.1} parent=67 // pred_check
          %p633 = pneg %p321
        $region114: #{tpu_custom_call.1} parent=67 // pred_check_branch
          %635 = sbr.rel (%p633) target = $region116
        $region115: #{tpu_custom_call.1} parent=67 // pred_region
          %637 = dma.done [#allocation23], 16
        $region116: #{tpu_custom_call.1} parent=67 // pred_fallthru
          _
        %s638 = sand.u32 %s57, 1
        %s639 = scalar_lea.sflag [#allocation5], %s638
        %s640 = sand.u32 %s57, 1
        %s641 = smul.addr %s640, 8
        %s642 = scalar_lea.vmem [#allocation4], %s641
        %p643 = pneg %p70
        %p644 = pneg %p67
        %s645 = sand.u32 %s37, 1
        %s646 = scalar_lea.sflag [#allocation8], %s645
        %s647 = sand.u32 %s83, 1
        %s648 = smul.addr %s647, 8
        %s649 = scalar_lea.vmem [#allocation7], %s648
        %p650 = pneg %p96
        %p651 = pneg %p93
        %s652 = sand.u32 %s37, 1
        %s653 = scalar_lea.sflag [#allocation8], %s652
        %s654 = sand.u32 %s109, 1
        %s655 = smul.addr %s654, 32
        %s656 = scalar_lea.vmem [#allocation9], %s655
        %p657 = pneg %p122
        %p658 = pneg %p119
        %p659 = pneg %p143
        %p660 = pneg %p140
        %p661 = pneg %p164
        %p662 = pneg %p161
        %p663 = pneg %p185
        %p664 = pneg %p182
        %p665 = pneg %p206
        %p666 = pneg %p203
        %p667 = pneg %p227
        %p668 = pneg %p224
        %p669 = pneg %p248
        %p670 = pneg %p245
        %p671 = pneg %p274
        %p672 = pneg %p271
        %p673 = pneg %p295
        %p674 = pneg %p292
        %p675 = pneg %p321
        %p676 = pneg %p318
        %p677 = pneg %p349
        %p678 = pneg %p346
        %s679 = sand.u32 %s336, 1
        %s680 = scalar_lea.sflag [#allocation6], %s679
        %s681 = sand.u32 %s336, 1
        %s682 = smul.addr %s681, 8
        %s683 = scalar_lea.vmem [#allocation24], %s682
        %s684 = smul.u32 16, %s42
        %v686 = vlaneseq
        %v687 = vshrl.u32 %v686, 7
        %v688 = vadd.s32 %v687, 8
        %vm689 = vcmp.lt.s32.totalorder %v687, 0
        %v690 = vsub.s32 0, %v687
        %v691 = vsel %vm689, %v690, %v687
        %v692 = vshrl.u32 %v691, 4
        %v693 = vand.u32 %v691, 15
        %v694 = vsub.s32 0, %v693
        %v695 = vsel %vm689, %v694, %v693
        %vm696 = vcmp.lt.s32.totalorder %v688, 0
        %v697 = vsub.s32 0, %v688
        %v698 = vsel %vm696, %v697, %v688
        %v699 = vshrl.u32 %v698, 4
        %v700 = vand.u32 %v698, 15
        %v701 = vsub.s32 0, %v700
        %v702 = vsel %vm696, %v701, %v700
        %vm703 = vcmp.ne.s32.totalorder %v695, 0
        %vm704 = vcmp.ne.s32.totalorder %v702, 0
        %vm705 = vcmp.lt.s32.totalorder %v695, 0
        %vm706 = vcmp.lt.s32.totalorder %v702, 0
        %vm707 = vmand %vm705, %vm703
        %vm708 = vmand %vm706, %vm704
        %v709 = vadd.s32 %v695, 16
        %v710 = vadd.s32 %v702, 16
        %v711 = vsel %vm707, %v709, %v695
        %v712 = vsel %vm708, %v710, %v702
        %vm713 = vcmp.eq.s32.totalorder %v711, 0
        %vm714 = vcmp.eq.s32.totalorder %v712, 0
        %vm715 = vcmp.eq.s32.totalorder %v711, 15
        %vm716 = vcmp.eq.s32.totalorder %v712, 15
        %p717 = scmp.eq.s32.totalorder %s42, 0
        // Predicated region
        $region117: #{tpu_custom_call.1} parent=67 // pred_check
          %p718 = pneg %p717
        $region118: #{tpu_custom_call.1} parent=67 // pred_check_branch
          %720 = sbr.rel (%p718) target = $region120
        $region119: #{tpu_custom_call.1} parent=67 // pred_region
          %v721 = vld [vmem:[%s567] sm:$0xf]
          %v722 = vld [vmem:[%s567 + $0x4] sm:$0xf]
          %v723 = vld [vmem:[#allocation10] sm:$0xff]
          %v724 = vld [vmem:[#allocation10 + $0x8] sm:$0xff]
          %v725 = vld [vmem:[#allocation10 + $0x10] sm:$0xff]
          %v726 = vld [vmem:[#allocation10 + $0x18] sm:$0xff]
          %v727 = vld [vmem:[#allocation10 + $0x20] sm:$0xff]
          %v728 = vld [vmem:[#allocation10 + $0x28] sm:$0xff]
          %v729 = vld [vmem:[#allocation10 + $0x30] sm:$0xff]
          %v730 = vld [vmem:[#allocation10 + $0x38] sm:$0xff]
          %v731 = vld [vmem:[#allocation10 + $0x40] sm:$0xff]
          %v732 = vld [vmem:[#allocation10 + $0x48] sm:$0xff]
          %v733 = vld [vmem:[#allocation10 + $0x50] sm:$0xff]
          %v734 = vld [vmem:[#allocation10 + $0x58] sm:$0xff]
          %v735 = vld [vmem:[#allocation10 + $0x60] sm:$0xff]
          %v736 = vld [vmem:[#allocation10 + $0x68] sm:$0xff]
          %v737 = vld [vmem:[#allocation10 + $0x70] sm:$0xff]
          %v738 = vld [vmem:[#allocation10 + $0x78] sm:$0xff]
          %v739 = vld [vmem:[#allocation10 + $0x80] sm:$0xff]
          %v740 = vld [vmem:[#allocation10 + $0x88] sm:$0xff]
          %v741 = vld [vmem:[#allocation10 + $0x90] sm:$0xff]
          %v742 = vld [vmem:[#allocation10 + $0x98] sm:$0xff]
          %v743 = vld [vmem:[#allocation10 + $0xa0] sm:$0xff]
          %v744 = vld [vmem:[#allocation10 + $0xa8] sm:$0xff]
          %v745 = vld [vmem:[#allocation10 + $0xb0] sm:$0xff]
          %v746 = vld [vmem:[#allocation10 + $0xb8] sm:$0xff]
          %v747 = vld [vmem:[#allocation10 + $0xc0] sm:$0xff]
          %v748 = vld [vmem:[#allocation10 + $0xc8] sm:$0xff]
          %v749 = vld [vmem:[#allocation10 + $0xd0] sm:$0xff]
          %v750 = vld [vmem:[#allocation10 + $0xd8] sm:$0xff]
          %v751 = vld [vmem:[#allocation10 + $0xe0] sm:$0xff]
          %v752 = vld [vmem:[#allocation10 + $0xe8] sm:$0xff]
          %v753 = vld [vmem:[#allocation10 + $0xf0] sm:$0xff]
          %v754 = vld [vmem:[#allocation10 + $0xf8] sm:$0xff]
          %v755 = vld [vmem:[#allocation10 + $0x100] sm:$0xff]
          %v756 = vld [vmem:[#allocation10 + $0x108] sm:$0xff]
          %v757 = vld [vmem:[#allocation10 + $0x110] sm:$0xff]
          %v758 = vld [vmem:[#allocation10 + $0x118] sm:$0xff]
          %v759 = vld [vmem:[#allocation10 + $0x120] sm:$0xff]
          %v760 = vld [vmem:[#allocation10 + $0x128] sm:$0xff]
          %v761 = vld [vmem:[#allocation10 + $0x130] sm:$0xff]
          %v762 = vld [vmem:[#allocation10 + $0x138] sm:$0xff]
          %v763 = vld [vmem:[#allocation10 + $0x140] sm:$0xff]
          %v764 = vld [vmem:[#allocation10 + $0x148] sm:$0xff]
          %v765 = vld [vmem:[#allocation10 + $0x150] sm:$0xff]
          %v766 = vld [vmem:[#allocation10 + $0x158] sm:$0xff]
          %v767 = vld [vmem:[#allocation10 + $0x160] sm:$0xff]
          %v768 = vld [vmem:[#allocation10 + $0x168] sm:$0xff]
          %v769 = vld [vmem:[#allocation10 + $0x170] sm:$0xff]
          %v770 = vld [vmem:[#allocation10 + $0x178] sm:$0xff]
          %v773 = vunpack.c.l.b16 %v721
          %v774 = vunpack.c.l.b16 %v722
          %v775 = vpack.c.b16 %v774, %v773
          %v825 = vunpack.c.l.b16 %v723
          %v826 = vunpack.c.h.b16 %v723
          %v827 = vunpack.c.l.b16 %v724
          %v828 = vunpack.c.h.b16 %v724
          %v829 = vunpack.c.l.b16 %v725
          %v830 = vunpack.c.h.b16 %v725
          %v831 = vunpack.c.l.b16 %v726
          %v832 = vunpack.c.h.b16 %v726
          %v833 = vunpack.c.l.b16 %v727
          %v834 = vunpack.c.h.b16 %v727
          %v835 = vunpack.c.l.b16 %v728
          %v836 = vunpack.c.h.b16 %v728
          %v837 = vunpack.c.l.b16 %v729
          %v838 = vunpack.c.h.b16 %v729
          %v839 = vunpack.c.l.b16 %v730
          %v840 = vunpack.c.h.b16 %v730
          %v841 = vunpack.c.l.b16 %v731
          %v842 = vunpack.c.h.b16 %v731
          %v843 = vunpack.c.l.b16 %v732
          %v844 = vunpack.c.h.b16 %v732
          %v845 = vunpack.c.l.b16 %v733
          %v846 = vunpack.c.h.b16 %v733
          %v847 = vunpack.c.l.b16 %v734
          %v848 = vunpack.c.h.b16 %v734
          %v849 = vunpack.c.l.b16 %v735
          %v850 = vunpack.c.h.b16 %v735
          %v851 = vunpack.c.l.b16 %v736
          %v852 = vunpack.c.h.b16 %v736
          %v853 = vunpack.c.l.b16 %v737
          %v854 = vunpack.c.h.b16 %v737
          %v855 = vunpack.c.l.b16 %v738
          %v856 = vunpack.c.h.b16 %v738
          %v857 = vunpack.c.l.b16 %v739
          %v858 = vunpack.c.h.b16 %v739
          %v859 = vunpack.c.l.b16 %v740
          %v860 = vunpack.c.h.b16 %v740
          %v861 = vunpack.c.l.b16 %v741
          %v862 = vunpack.c.h.b16 %v741
          %v863 = vunpack.c.l.b16 %v742
          %v864 = vunpack.c.h.b16 %v742
          %v865 = vunpack.c.l.b16 %v743
          %v866 = vunpack.c.h.b16 %v743
          %v867 = vunpack.c.l.b16 %v744
          %v868 = vunpack.c.h.b16 %v744
          %v869 = vunpack.c.l.b16 %v745
          %v870 = vunpack.c.h.b16 %v745
          %v871 = vunpack.c.l.b16 %v746
          %v872 = vunpack.c.h.b16 %v746
          %v873 = vunpack.c.l.b16 %v747
          %v874 = vunpack.c.h.b16 %v747
          %v875 = vunpack.c.l.b16 %v748
          %v876 = vunpack.c.h.b16 %v748
          %v877 = vunpack.c.l.b16 %v749
          %v878 = vunpack.c.h.b16 %v749
          %v879 = vunpack.c.l.b16 %v750
          %v880 = vunpack.c.h.b16 %v750
          %v881 = vunpack.c.l.b16 %v751
          %v882 = vunpack.c.h.b16 %v751
          %v883 = vunpack.c.l.b16 %v752
          %v884 = vunpack.c.h.b16 %v752
          %v885 = vunpack.c.l.b16 %v753
          %v886 = vunpack.c.h.b16 %v753
          %v887 = vunpack.c.l.b16 %v754
          %v888 = vunpack.c.h.b16 %v754
          %v889 = vunpack.c.l.b16 %v755
          %v890 = vunpack.c.h.b16 %v755
          %v891 = vunpack.c.l.b16 %v756
          %v892 = vunpack.c.h.b16 %v756
          %v893 = vunpack.c.l.b16 %v757
          %v894 = vunpack.c.h.b16 %v757
          %v895 = vunpack.c.l.b16 %v758
          %v896 = vunpack.c.h.b16 %v758
          %v897 = vunpack.c.l.b16 %v759
          %v898 = vunpack.c.h.b16 %v759
          %v899 = vunpack.c.l.b16 %v760
          %v900 = vunpack.c.h.b16 %v760
          %v901 = vunpack.c.l.b16 %v761
          %v902 = vunpack.c.h.b16 %v761
          %v903 = vunpack.c.l.b16 %v762
          %v904 = vunpack.c.h.b16 %v762
          %v905 = vunpack.c.l.b16 %v763
          %v906 = vunpack.c.h.b16 %v763
          %v907 = vunpack.c.l.b16 %v764
          %v908 = vunpack.c.h.b16 %v764
          %v909 = vunpack.c.l.b16 %v765
          %v910 = vunpack.c.h.b16 %v765
          %v911 = vunpack.c.l.b16 %v766
          %v912 = vunpack.c.h.b16 %v766
          %v913 = vunpack.c.l.b16 %v767
          %v914 = vunpack.c.h.b16 %v767
          %v915 = vunpack.c.l.b16 %v768
          %v916 = vunpack.c.h.b16 %v768
          %v917 = vunpack.c.l.b16 %v769
          %v918 = vunpack.c.h.b16 %v769
          %v919 = vunpack.c.l.b16 %v770
          %v920 = vunpack.c.h.b16 %v770
          %v921 = vpack.c.b16 %v831, %v825
          %v922 = vpack.c.b16 %v832, %v826
          %v923 = vpack.c.b16 %v833, %v827
          %v924 = vpack.c.b16 %v834, %v828
          %v925 = vpack.c.b16 %v835, %v829
          %v926 = vpack.c.b16 %v836, %v830
          %v927 = vpack.c.b16 %v843, %v837
          %v928 = vpack.c.b16 %v844, %v838
          %v929 = vpack.c.b16 %v845, %v839
          %v930 = vpack.c.b16 %v846, %v840
          %v931 = vpack.c.b16 %v847, %v841
          %v932 = vpack.c.b16 %v848, %v842
          %v933 = vpack.c.b16 %v855, %v849
          %v934 = vpack.c.b16 %v856, %v850
          %v935 = vpack.c.b16 %v857, %v851
          %v936 = vpack.c.b16 %v858, %v852
          %v937 = vpack.c.b16 %v859, %v853
          %v938 = vpack.c.b16 %v860, %v854
          %v939 = vpack.c.b16 %v867, %v861
          %v940 = vpack.c.b16 %v868, %v862
          %v941 = vpack.c.b16 %v869, %v863
          %v942 = vpack.c.b16 %v870, %v864
          %v943 = vpack.c.b16 %v871, %v865
          %v944 = vpack.c.b16 %v872, %v866
          %v945 = vpack.c.b16 %v879, %v873
          %v946 = vpack.c.b16 %v880, %v874
          %v947 = vpack.c.b16 %v881, %v875
          %v948 = vpack.c.b16 %v882, %v876
          %v949 = vpack.c.b16 %v883, %v877
          %v950 = vpack.c.b16 %v884, %v878
          %v951 = vpack.c.b16 %v891, %v885
          %v952 = vpack.c.b16 %v892, %v886
          %v953 = vpack.c.b16 %v893, %v887
          %v954 = vpack.c.b16 %v894, %v888
          %v955 = vpack.c.b16 %v895, %v889
          %v956 = vpack.c.b16 %v896, %v890
          %v957 = vpack.c.b16 %v903, %v897
          %v958 = vpack.c.b16 %v904, %v898
          %v959 = vpack.c.b16 %v905, %v899
          %v960 = vpack.c.b16 %v906, %v900
          %v961 = vpack.c.b16 %v907, %v901
          %v962 = vpack.c.b16 %v908, %v902
          %v963 = vpack.c.b16 %v915, %v909
          %v964 = vpack.c.b16 %v916, %v910
          %v965 = vpack.c.b16 %v917, %v911
          %v966 = vpack.c.b16 %v918, %v912
          %v967 = vpack.c.b16 %v919, %v913
          %v968 = vpack.c.b16 %v920, %v914
          %1017 = vmatpush.bf16.msra.mxu0 %v963
          %1018 = vmatpush.bf16.msra.mxu0 %v957
          %1019 = vmatpush.bf16.msra.mxu0 %v951
          %1020 = vmatpush.bf16.msra.mxu0 %v945
          %1021 = vmatpush.bf16.msra.mxu0 %v939
          %1022 = vmatpush.bf16.msra.mxu0 %v933
          %1023 = vmatpush.bf16.msra.mxu0 %v927
          %1024 = vmatpush.bf16.msra.mxu0 %v921
          %1025 = vmatmul.bf16.gmra.mxu0 %v775
          %v1026 = vpop.f32.mrf.mxu0
          %v1027 = vadd.f32 0.0, %v1026
          %v1028 = vpop.f32.mrf.mxu0
          %v1029 = vadd.f32 0.0, %v1028
          %1030 = vdwg.mxu0
          %1031 = vmatpush.bf16.msra.mxu0 %v964
          %1032 = vmatpush.bf16.msra.mxu0 %v958
          %1033 = vmatpush.bf16.msra.mxu0 %v952
          %1034 = vmatpush.bf16.msra.mxu0 %v946
          %1035 = vmatpush.bf16.msra.mxu0 %v940
          %1036 = vmatpush.bf16.msra.mxu0 %v934
          %1037 = vmatpush.bf16.msra.mxu0 %v928
          %1038 = vmatpush.bf16.msra.mxu0 %v922
          %1039 = vmatmul.bf16.gmra.mxu0 %v775
          %v1040 = vpop.f32.mrf.mxu0
          %v1041 = vadd.f32 0.0, %v1040
          %v1042 = vpop.f32.mrf.mxu0
          %v1043 = vadd.f32 0.0, %v1042
          %1044 = vdwg.mxu0
          %1045 = vmatpush.bf16.msra.mxu0 %v965
          %1046 = vmatpush.bf16.msra.mxu0 %v959
          %1047 = vmatpush.bf16.msra.mxu0 %v953
          %1048 = vmatpush.bf16.msra.mxu0 %v947
          %1049 = vmatpush.bf16.msra.mxu0 %v941
          %1050 = vmatpush.bf16.msra.mxu0 %v935
          %1051 = vmatpush.bf16.msra.mxu0 %v929
          %1052 = vmatpush.bf16.msra.mxu0 %v923
          %1053 = vmatmul.bf16.gmra.mxu0 %v775
          %v1054 = vpop.f32.mrf.mxu0
          %v1055 = vadd.f32 0.0, %v1054
          %v1056 = vpop.f32.mrf.mxu0
          %v1057 = vadd.f32 0.0, %v1056
          %1058 = vdwg.mxu0
          %1059 = vmatpush.bf16.msra.mxu0 %v966
          %1060 = vmatpush.bf16.msra.mxu0 %v960
          %1061 = vmatpush.bf16.msra.mxu0 %v954
          %1062 = vmatpush.bf16.msra.mxu0 %v948
          %1063 = vmatpush.bf16.msra.mxu0 %v942
          %1064 = vmatpush.bf16.msra.mxu0 %v936
          %1065 = vmatpush.bf16.msra.mxu0 %v930
          %1066 = vmatpush.bf16.msra.mxu0 %v924
          %1067 = vmatmul.bf16.gmra.mxu0 %v775
          %v1068 = vpop.f32.mrf.mxu0
          %v1069 = vadd.f32 0.0, %v1068
          %v1070 = vpop.f32.mrf.mxu0
          %v1071 = vadd.f32 0.0, %v1070
          %1072 = vdwg.mxu0
          %1073 = vmatpush.bf16.msra.mxu0 %v967
          %1074 = vmatpush.bf16.msra.mxu0 %v961
          %1075 = vmatpush.bf16.msra.mxu0 %v955
          %1076 = vmatpush.bf16.msra.mxu0 %v949
          %1077 = vmatpush.bf16.msra.mxu0 %v943
          %1078 = vmatpush.bf16.msra.mxu0 %v937
          %1079 = vmatpush.bf16.msra.mxu0 %v931
          %1080 = vmatpush.bf16.msra.mxu0 %v925
          %1081 = vmatmul.bf16.gmra.mxu0 %v775
          %v1082 = vpop.f32.mrf.mxu0
          %v1083 = vadd.f32 0.0, %v1082
          %v1084 = vpop.f32.mrf.mxu0
          %v1085 = vadd.f32 0.0, %v1084
          %1086 = vdwg.mxu0
          %1087 = vmatpush.bf16.msra.mxu0 %v968
          %1088 = vmatpush.bf16.msra.mxu0 %v962
          %1089 = vmatpush.bf16.msra.mxu0 %v956
          %1090 = vmatpush.bf16.msra.mxu0 %v950
          %1091 = vmatpush.bf16.msra.mxu0 %v944
          %1092 = vmatpush.bf16.msra.mxu0 %v938
          %1093 = vmatpush.bf16.msra.mxu0 %v932
          %1094 = vmatpush.bf16.msra.mxu0 %v926
          %1095 = vmatmul.bf16.gmra.mxu0 %v775
          %v1096 = vpop.f32.mrf.mxu0
          %v1097 = vadd.f32 0.0, %v1096
          %v1098 = vpop.f32.mrf.mxu0
          %v1099 = vadd.f32 0.0, %v1098
          %1100 = vdwg.mxu0
          %v1103 = vrot.slane %v1029, 7
          %v1104 = vrot.slane %v1043, 7
          %vm1109 = vcmask 1040384
          %v1110 = vrot.slane %v1027, 7
          %v1111 = vrot.slane %v1041, 7
          %v1112 = vsel %vm1109, %v1110, %v1103
          %v1113 = vsel %vm1109, %v1111, %v1104
          %v1118 = vsel %vm1109, %v1103, %v1110
          %v1119 = vsel %vm1109, %v1104, %v1111
          %v1120 = vsel %vm713, 1, 0
          %v1121 = vsel %vm714, 1, 0
          %vm1122 = vcmp.eq.s32.totalorder %v1120, 1
          %vm1123 = vcmp.eq.s32.totalorder %v1121, 1
          %v1124 = vsel %vm1122, 0.0, %v1118
          %v1125 = vsel %vm1122, 0.0, %v1119
          %v1126 = vsel %vm1123, 0.0, %v1112
          %v1127 = vsel %vm1123, 0.0, %v1113
          %vm1132 = vcmask 1046528
          %v1133 = vrot.slane %v1083, 1
          %v1134 = vrot.slane %v1085, 1
          %v1135 = vsel %vm1132, %v1133, %v1134
          %v1136 = vrot.slane %v1097, 1
          %v1137 = vrot.slane %v1099, 1
          %v1138 = vsel %vm1132, %v1136, %v1137
          %v1145 = vsel %vm1132, %v1134, %v1133
          %v1146 = vsel %vm1132, %v1137, %v1136
          %v1147 = vsel %vm715, 1, 0
          %v1148 = vsel %vm716, 1, 0
          %vm1149 = vcmp.eq.s32.totalorder %v1147, 1
          %vm1150 = vcmp.eq.s32.totalorder %v1148, 1
          %v1151 = vsel %vm1149, 0.0, %v1135
          %v1152 = vsel %vm1149, 0.0, %v1138
          %v1153 = vsel %vm1150, 0.0, %v1145
          %v1154 = vsel %vm1150, 0.0, %v1146
          %v1155 = vadd.f32 %v1124, %v1055
          %v1156 = vadd.f32 %v1125, %v1069
          %v1157 = vadd.f32 %v1126, %v1057
          %v1158 = vadd.f32 %v1127, %v1071
          %v1159 = vadd.f32 %v1155, %v1151
          %v1160 = vadd.f32 %v1156, %v1152
          %v1161 = vadd.f32 %v1157, %v1153
          %v1162 = vadd.f32 %v1158, %v1154
          %v1163 = vld [vmem:[#allocation12] sm:$0x3]
          %v1165 = vperm.slane %v1163, 0
          %v1166 = vperm.slane %v1163, 1
          %v1169 = vadd.f32 %v1159, %v1165
          %v1170 = vadd.f32 %v1160, %v1166
          %v1171 = vadd.f32 %v1161, %v1165
          %v1172 = vadd.f32 %v1162, %v1166
          %v1175 = vrot.slane %v1171, 7
          %v1176 = vrot.slane %v1172, 7
          %v1181 = vrot.slane %v1169, 7
          %v1182 = vrot.slane %v1170, 7
          %v1183 = vsel %vm1109, %v1181, %v1175
          %v1184 = vsel %vm1109, %v1182, %v1176
          %v1189 = vsel %vm1109, %v1175, %v1181
          %v1190 = vsel %vm1109, %v1176, %v1182
          %v1191 = vsel %vm1122, -inf, %v1189
          %v1192 = vsel %vm1122, -inf, %v1190
          %v1193 = vsel %vm1123, -inf, %v1183
          %v1194 = vsel %vm1123, -inf, %v1184
          %v1195 = vrot.slane %v1169, 1
          %v1196 = vrot.slane %v1171, 1
          %v1197 = vsel %vm1132, %v1195, %v1196
          %v1198 = vrot.slane %v1170, 1
          %v1199 = vrot.slane %v1172, 1
          %v1200 = vsel %vm1132, %v1198, %v1199
          %v1207 = vsel %vm1132, %v1196, %v1195
          %v1208 = vsel %vm1132, %v1199, %v1198
          %v1209 = vsel %vm1149, -inf, %v1197
          %v1210 = vsel %vm1149, -inf, %v1200
          %v1211 = vsel %vm1150, -inf, %v1207
          %v1212 = vsel %vm1150, -inf, %v1208
          %v1213 = vmax.f32 %v1191, %v1169
          %v1214 = vmax.f32 %v1192, %v1170
          %v1215 = vmax.f32 %v1193, %v1171
          %v1216 = vmax.f32 %v1194, %v1172
          %v1217 = vmax.f32 %v1213, %v1209
          %v1218 = vmax.f32 %v1214, %v1210
          %v1219 = vmax.f32 %v1215, %v1211
          %v1220 = vmax.f32 %v1216, %v1212
          %v1221 = vmax.f32 %v1217, 0.0
          %v1222 = vmax.f32 %v1218, 0.0
          %v1223 = vmax.f32 %v1219, 0.0
          %v1224 = vmax.f32 %v1220, 0.0
          %v1225 = vpack.c.bf16 %v1223, %v1221
          %v1226 = vpack.c.bf16 %v1224, %v1222
          %v1227 = vld [vmem:[#allocation13] sm:$0xff]
          %v1228 = vld [vmem:[#allocation13 + $0x8] sm:$0xff]
          %v1229 = vld [vmem:[#allocation13 + $0x10] sm:$0xff]
          %v1230 = vld [vmem:[#allocation13 + $0x18] sm:$0xff]
          %v1231 = vld [vmem:[#allocation13 + $0x20] sm:$0xff]
          %v1232 = vld [vmem:[#allocation13 + $0x28] sm:$0xff]
          %v1233 = vld [vmem:[#allocation13 + $0x30] sm:$0xff]
          %v1234 = vld [vmem:[#allocation13 + $0x38] sm:$0xff]
          %v1235 = vld [vmem:[#allocation13 + $0x40] sm:$0xff]
          %v1236 = vld [vmem:[#allocation13 + $0x48] sm:$0xff]
          %v1237 = vld [vmem:[#allocation13 + $0x50] sm:$0xff]
          %v1238 = vld [vmem:[#allocation13 + $0x58] sm:$0xff]
          %v1239 = vld [vmem:[#allocation13 + $0x60] sm:$0xff]
          %v1240 = vld [vmem:[#allocation13 + $0x68] sm:$0xff]
          %v1241 = vld [vmem:[#allocation13 + $0x70] sm:$0xff]
          %v1242 = vld [vmem:[#allocation13 + $0x78] sm:$0xff]
          %v1243 = vld [vmem:[#allocation13 + $0x80] sm:$0xff]
          %v1244 = vld [vmem:[#allocation13 + $0x88] sm:$0xff]
          %v1245 = vld [vmem:[#allocation13 + $0x90] sm:$0xff]
          %v1246 = vld [vmem:[#allocation13 + $0x98] sm:$0xff]
          %v1247 = vld [vmem:[#allocation13 + $0xa0] sm:$0xff]
          %v1248 = vld [vmem:[#allocation13 + $0xa8] sm:$0xff]
          %v1249 = vld [vmem:[#allocation13 + $0xb0] sm:$0xff]
          %v1250 = vld [vmem:[#allocation13 + $0xb8] sm:$0xff]
          %v1251 = vld [vmem:[#allocation13 + $0xc0] sm:$0xff]
          %v1252 = vld [vmem:[#allocation13 + $0xc8] sm:$0xff]
          %v1253 = vld [vmem:[#allocation13 + $0xd0] sm:$0xff]
          %v1254 = vld [vmem:[#allocation13 + $0xd8] sm:$0xff]
          %v1255 = vld [vmem:[#allocation13 + $0xe0] sm:$0xff]
          %v1256 = vld [vmem:[#allocation13 + $0xe8] sm:$0xff]
          %v1257 = vld [vmem:[#allocation13 + $0xf0] sm:$0xff]
          %v1258 = vld [vmem:[#allocation13 + $0xf8] sm:$0xff]
          %v1259 = vld [vmem:[#allocation13 + $0x100] sm:$0xff]
          %v1260 = vld [vmem:[#allocation13 + $0x108] sm:$0xff]
          %v1261 = vld [vmem:[#allocation13 + $0x110] sm:$0xff]
          %v1262 = vld [vmem:[#allocation13 + $0x118] sm:$0xff]
          %v1263 = vld [vmem:[#allocation13 + $0x120] sm:$0xff]
          %v1264 = vld [vmem:[#allocation13 + $0x128] sm:$0xff]
          %v1265 = vld [vmem:[#allocation13 + $0x130] sm:$0xff]
          %v1266 = vld [vmem:[#allocation13 + $0x138] sm:$0xff]
          %v1267 = vld [vmem:[#allocation13 + $0x140] sm:$0xff]
          %v1268 = vld [vmem:[#allocation13 + $0x148] sm:$0xff]
          %v1269 = vld [vmem:[#allocation13 + $0x150] sm:$0xff]
          %v1270 = vld [vmem:[#allocation13 + $0x158] sm:$0xff]
          %v1271 = vld [vmem:[#allocation13 + $0x160] sm:$0xff]
          %v1272 = vld [vmem:[#allocation13 + $0x168] sm:$0xff]
          %v1273 = vld [vmem:[#allocation13 + $0x170] sm:$0xff]
          %v1274 = vld [vmem:[#allocation13 + $0x178] sm:$0xff]
          %v1275 = vld [vmem:[#allocation13 + $0x180] sm:$0xff]
          %v1276 = vld [vmem:[#allocation13 + $0x188] sm:$0xff]
          %v1277 = vld [vmem:[#allocation13 + $0x190] sm:$0xff]
          %v1278 = vld [vmem:[#allocation13 + $0x198] sm:$0xff]
          %v1279 = vld [vmem:[#allocation13 + $0x1a0] sm:$0xff]
          %v1280 = vld [vmem:[#allocation13 + $0x1a8] sm:$0xff]
          %v1281 = vld [vmem:[#allocation13 + $0x1b0] sm:$0xff]
          %v1282 = vld [vmem:[#allocation13 + $0x1b8] sm:$0xff]
          %v1283 = vld [vmem:[#allocation13 + $0x1c0] sm:$0xff]
          %v1284 = vld [vmem:[#allocation13 + $0x1c8] sm:$0xff]
          %v1285 = vld [vmem:[#allocation13 + $0x1d0] sm:$0xff]
          %v1286 = vld [vmem:[#allocation13 + $0x1d8] sm:$0xff]
          %v1287 = vld [vmem:[#allocation13 + $0x1e0] sm:$0xff]
          %v1288 = vld [vmem:[#allocation13 + $0x1e8] sm:$0xff]
          %v1289 = vld [vmem:[#allocation13 + $0x1f0] sm:$0xff]
          %v1290 = vld [vmem:[#allocation13 + $0x1f8] sm:$0xff]
          %v1291 = vld [vmem:[#allocation13 + $0x200] sm:$0xff]
          %v1292 = vld [vmem:[#allocation13 + $0x208] sm:$0xff]
          %v1293 = vld [vmem:[#allocation13 + $0x210] sm:$0xff]
          %v1294 = vld [vmem:[#allocation13 + $0x218] sm:$0xff]
          %v1295 = vld [vmem:[#allocation13 + $0x220] sm:$0xff]
          %v1296 = vld [vmem:[#allocation13 + $0x228] sm:$0xff]
          %v1297 = vld [vmem:[#allocation13 + $0x230] sm:$0xff]
          %v1298 = vld [vmem:[#allocation13 + $0x238] sm:$0xff]
          %v1299 = vld [vmem:[#allocation13 + $0x240] sm:$0xff]
          %v1300 = vld [vmem:[#allocation13 + $0x248] sm:$0xff]
          %v1301 = vld [vmem:[#allocation13 + $0x250] sm:$0xff]
          %v1302 = vld [vmem:[#allocation13 + $0x258] sm:$0xff]
          %v1303 = vld [vmem:[#allocation13 + $0x260] sm:$0xff]
          %v1304 = vld [vmem:[#allocation13 + $0x268] sm:$0xff]
          %v1305 = vld [vmem:[#allocation13 + $0x270] sm:$0xff]
          %v1306 = vld [vmem:[#allocation13 + $0x278] sm:$0xff]
          %v1307 = vld [vmem:[#allocation13 + $0x280] sm:$0xff]
          %v1308 = vld [vmem:[#allocation13 + $0x288] sm:$0xff]
          %v1309 = vld [vmem:[#allocation13 + $0x290] sm:$0xff]
          %v1310 = vld [vmem:[#allocation13 + $0x298] sm:$0xff]
          %v1311 = vld [vmem:[#allocation13 + $0x2a0] sm:$0xff]
          %v1312 = vld [vmem:[#allocation13 + $0x2a8] sm:$0xff]
          %v1313 = vld [vmem:[#allocation13 + $0x2b0] sm:$0xff]
          %v1314 = vld [vmem:[#allocation13 + $0x2b8] sm:$0xff]
          %v1315 = vld [vmem:[#allocation13 + $0x2c0] sm:$0xff]
          %v1316 = vld [vmem:[#allocation13 + $0x2c8] sm:$0xff]
          %v1317 = vld [vmem:[#allocation13 + $0x2d0] sm:$0xff]
          %v1318 = vld [vmem:[#allocation13 + $0x2d8] sm:$0xff]
          %v1319 = vld [vmem:[#allocation13 + $0x2e0] sm:$0xff]
          %v1320 = vld [vmem:[#allocation13 + $0x2e8] sm:$0xff]
          %v1321 = vld [vmem:[#allocation13 + $0x2f0] sm:$0xff]
          %v1322 = vld [vmem:[#allocation13 + $0x2f8] sm:$0xff]
          %v1419 = vunpack.c.l.b16 %v1227
          %v1420 = vunpack.c.h.b16 %v1227
          %v1421 = vunpack.c.l.b16 %v1228
          %v1422 = vunpack.c.h.b16 %v1228
          %v1423 = vunpack.c.l.b16 %v1229
          %v1424 = vunpack.c.h.b16 %v1229
          %v1425 = vunpack.c.l.b16 %v1230
          %v1426 = vunpack.c.h.b16 %v1230
          %v1427 = vunpack.c.l.b16 %v1231
          %v1428 = vunpack.c.h.b16 %v1231
          %v1429 = vunpack.c.l.b16 %v1232
          %v1430 = vunpack.c.h.b16 %v1232
          %v1431 = vunpack.c.l.b16 %v1233
          %v1432 = vunpack.c.h.b16 %v1233
          %v1433 = vunpack.c.l.b16 %v1234
          %v1434 = vunpack.c.h.b16 %v1234
          %v1435 = vunpack.c.l.b16 %v1235
          %v1436 = vunpack.c.h.b16 %v1235
          %v1437 = vunpack.c.l.b16 %v1236
          %v1438 = vunpack.c.h.b16 %v1236
          %v1439 = vunpack.c.l.b16 %v1237
          %v1440 = vunpack.c.h.b16 %v1237
          %v1441 = vunpack.c.l.b16 %v1238
          %v1442 = vunpack.c.h.b16 %v1238
          %v1443 = vunpack.c.l.b16 %v1239
          %v1444 = vunpack.c.h.b16 %v1239
          %v1445 = vunpack.c.l.b16 %v1240
          %v1446 = vunpack.c.h.b16 %v1240
          %v1447 = vunpack.c.l.b16 %v1241
          %v1448 = vunpack.c.h.b16 %v1241
          %v1449 = vunpack.c.l.b16 %v1242
          %v1450 = vunpack.c.h.b16 %v1242
          %v1451 = vunpack.c.l.b16 %v1243
          %v1452 = vunpack.c.h.b16 %v1243
          %v1453 = vunpack.c.l.b16 %v1244
          %v1454 = vunpack.c.h.b16 %v1244
          %v1455 = vunpack.c.l.b16 %v1245
          %v1456 = vunpack.c.h.b16 %v1245
          %v1457 = vunpack.c.l.b16 %v1246
          %v1458 = vunpack.c.h.b16 %v1246
          %v1459 = vunpack.c.l.b16 %v1247
          %v1460 = vunpack.c.h.b16 %v1247
          %v1461 = vunpack.c.l.b16 %v1248
          %v1462 = vunpack.c.h.b16 %v1248
          %v1463 = vunpack.c.l.b16 %v1249
          %v1464 = vunpack.c.h.b16 %v1249
          %v1465 = vunpack.c.l.b16 %v1250
          %v1466 = vunpack.c.h.b16 %v1250
          %v1467 = vunpack.c.l.b16 %v1251
          %v1468 = vunpack.c.h.b16 %v1251
          %v1469 = vunpack.c.l.b16 %v1252
          %v1470 = vunpack.c.h.b16 %v1252
          %v1471 = vunpack.c.l.b16 %v1253
          %v1472 = vunpack.c.h.b16 %v1253
          %v1473 = vunpack.c.l.b16 %v1254
          %v1474 = vunpack.c.h.b16 %v1254
          %v1475 = vunpack.c.l.b16 %v1255
          %v1476 = vunpack.c.h.b16 %v1255
          %v1477 = vunpack.c.l.b16 %v1256
          %v1478 = vunpack.c.h.b16 %v1256
          %v1479 = vunpack.c.l.b16 %v1257
          %v1480 = vunpack.c.h.b16 %v1257
          %v1481 = vunpack.c.l.b16 %v1258
          %v1482 = vunpack.c.h.b16 %v1258
          %v1483 = vunpack.c.l.b16 %v1259
          %v1484 = vunpack.c.h.b16 %v1259
          %v1485 = vunpack.c.l.b16 %v1260
          %v1486 = vunpack.c.h.b16 %v1260
          %v1487 = vunpack.c.l.b16 %v1261
          %v1488 = vunpack.c.h.b16 %v1261
          %v1489 = vunpack.c.l.b16 %v1262
          %v1490 = vunpack.c.h.b16 %v1262
          %v1491 = vunpack.c.l.b16 %v1263
          %v1492 = vunpack.c.h.b16 %v1263
          %v1493 = vunpack.c.l.b16 %v1264
          %v1494 = vunpack.c.h.b16 %v1264
          %v1495 = vunpack.c.l.b16 %v1265
          %v1496 = vunpack.c.h.b16 %v1265
          %v1497 = vunpack.c.l.b16 %v1266
          %v1498 = vunpack.c.h.b16 %v1266
          %v1499 = vunpack.c.l.b16 %v1267
          %v1500 = vunpack.c.h.b16 %v1267
          %v1501 = vunpack.c.l.b16 %v1268
          %v1502 = vunpack.c.h.b16 %v1268
          %v1503 = vunpack.c.l.b16 %v1269
          %v1504 = vunpack.c.h.b16 %v1269
          %v1505 = vunpack.c.l.b16 %v1270
          %v1506 = vunpack.c.h.b16 %v1270
          %v1507 = vunpack.c.l.b16 %v1271
          %v1508 = vunpack.c.h.b16 %v1271
          %v1509 = vunpack.c.l.b16 %v1272
          %v1510 = vunpack.c.h.b16 %v1272
          %v1511 = vunpack.c.l.b16 %v1273
          %v1512 = vunpack.c.h.b16 %v1273
          %v1513 = vunpack.c.l.b16 %v1274
          %v1514 = vunpack.c.h.b16 %v1274
          %v1515 = vunpack.c.l.b16 %v1275
          %v1516 = vunpack.c.h.b16 %v1275
          %v1517 = vunpack.c.l.b16 %v1276
          %v1518 = vunpack.c.h.b16 %v1276
          %v1519 = vunpack.c.l.b16 %v1277
          %v1520 = vunpack.c.h.b16 %v1277
          %v1521 = vunpack.c.l.b16 %v1278
          %v1522 = vunpack.c.h.b16 %v1278
          %v1523 = vunpack.c.l.b16 %v1279
          %v1524 = vunpack.c.h.b16 %v1279
          %v1525 = vunpack.c.l.b16 %v1280
          %v1526 = vunpack.c.h.b16 %v1280
          %v1527 = vunpack.c.l.b16 %v1281
          %v1528 = vunpack.c.h.b16 %v1281
          %v1529 = vunpack.c.l.b16 %v1282
          %v1530 = vunpack.c.h.b16 %v1282
          %v1531 = vunpack.c.l.b16 %v1283
          %v1532 = vunpack.c.h.b16 %v1283
          %v1533 = vunpack.c.l.b16 %v1284
          %v1534 = vunpack.c.h.b16 %v1284
          %v1535 = vunpack.c.l.b16 %v1285
          %v1536 = vunpack.c.h.b16 %v1285
          %v1537 = vunpack.c.l.b16 %v1286
          %v1538 = vunpack.c.h.b16 %v1286
          %v1539 = vunpack.c.l.b16 %v1287
          %v1540 = vunpack.c.h.b16 %v1287
          %v1541 = vunpack.c.l.b16 %v1288
          %v1542 = vunpack.c.h.b16 %v1288
          %v1543 = vunpack.c.l.b16 %v1289
          %v1544 = vunpack.c.h.b16 %v1289
          %v1545 = vunpack.c.l.b16 %v1290
          %v1546 = vunpack.c.h.b16 %v1290
          %v1547 = vunpack.c.l.b16 %v1291
          %v1548 = vunpack.c.h.b16 %v1291
          %v1549 = vunpack.c.l.b16 %v1292
          %v1550 = vunpack.c.h.b16 %v1292
          %v1551 = vunpack.c.l.b16 %v1293
          %v1552 = vunpack.c.h.b16 %v1293
          %v1553 = vunpack.c.l.b16 %v1294
          %v1554 = vunpack.c.h.b16 %v1294
          %v1555 = vunpack.c.l.b16 %v1295
          %v1556 = vunpack.c.h.b16 %v1295
          %v1557 = vunpack.c.l.b16 %v1296
          %v1558 = vunpack.c.h.b16 %v1296
          %v1559 = vunpack.c.l.b16 %v1297
          %v1560 = vunpack.c.h.b16 %v1297
          %v1561 = vunpack.c.l.b16 %v1298
          %v1562 = vunpack.c.h.b16 %v1298
          %v1563 = vunpack.c.l.b16 %v1299
          %v1564 = vunpack.c.h.b16 %v1299
          %v1565 = vunpack.c.l.b16 %v1300
          %v1566 = vunpack.c.h.b16 %v1300
          %v1567 = vunpack.c.l.b16 %v1301
          %v1568 = vunpack.c.h.b16 %v1301
          %v1569 = vunpack.c.l.b16 %v1302
          %v1570 = vunpack.c.h.b16 %v1302
          %v1571 = vunpack.c.l.b16 %v1303
          %v1572 = vunpack.c.h.b16 %v1303
          %v1573 = vunpack.c.l.b16 %v1304
          %v1574 = vunpack.c.h.b16 %v1304
          %v1575 = vunpack.c.l.b16 %v1305
          %v1576 = vunpack.c.h.b16 %v1305
          %v1577 = vunpack.c.l.b16 %v1306
          %v1578 = vunpack.c.h.b16 %v1306
          %v1579 = vunpack.c.l.b16 %v1307
          %v1580 = vunpack.c.h.b16 %v1307
          %v1581 = vunpack.c.l.b16 %v1308
          %v1582 = vunpack.c.h.b16 %v1308
          %v1583 = vunpack.c.l.b16 %v1309
          %v1584 = vunpack.c.h.b16 %v1309
          %v1585 = vunpack.c.l.b16 %v1310
          %v1586 = vunpack.c.h.b16 %v1310
          %v1587 = vunpack.c.l.b16 %v1311
          %v1588 = vunpack.c.h.b16 %v1311
          %v1589 = vunpack.c.l.b16 %v1312
          %v1590 = vunpack.c.h.b16 %v1312
          %v1591 = vunpack.c.l.b16 %v1313
          %v1592 = vunpack.c.h.b16 %v1313
          %v1593 = vunpack.c.l.b16 %v1314
          %v1594 = vunpack.c.h.b16 %v1314
          %v1595 = vunpack.c.l.b16 %v1315
          %v1596 = vunpack.c.h.b16 %v1315
          %v1597 = vunpack.c.l.b16 %v1316
          %v1598 = vunpack.c.h.b16 %v1316
          %v1599 = vunpack.c.l.b16 %v1317
          %v1600 = vunpack.c.h.b16 %v1317
          %v1601 = vunpack.c.l.b16 %v1318
          %v1602 = vunpack.c.h.b16 %v1318
          %v1603 = vunpack.c.l.b16 %v1319
          %v1604 = vunpack.c.h.b16 %v1319
          %v1605 = vunpack.c.l.b16 %v1320
          %v1606 = vunpack.c.h.b16 %v1320
          %v1607 = vunpack.c.l.b16 %v1321
          %v1608 = vunpack.c.h.b16 %v1321
          %v1609 = vunpack.c.l.b16 %v1322
          %v1610 = vunpack.c.h.b16 %v1322
          %v1611 = vpack.c.b16 %v1425, %v1419
          %v1612 = vpack.c.b16 %v1426, %v1420
          %v1613 = vpack.c.b16 %v1427, %v1421
          %v1614 = vpack.c.b16 %v1428, %v1422
          %v1615 = vpack.c.b16 %v1429, %v1423
          %v1616 = vpack.c.b16 %v1430, %v1424
          %v1617 = vpack.c.b16 %v1437, %v1431
          %v1618 = vpack.c.b16 %v1438, %v1432
          %v1619 = vpack.c.b16 %v1439, %v1433
          %v1620 = vpack.c.b16 %v1440, %v1434
          %v1621 = vpack.c.b16 %v1441, %v1435
          %v1622 = vpack.c.b16 %v1442, %v1436
          %v1623 = vpack.c.b16 %v1449, %v1443
          %v1624 = vpack.c.b16 %v1450, %v1444
          %v1625 = vpack.c.b16 %v1451, %v1445
          %v1626 = vpack.c.b16 %v1452, %v1446
          %v1627 = vpack.c.b16 %v1453, %v1447
          %v1628 = vpack.c.b16 %v1454, %v1448
          %v1629 = vpack.c.b16 %v1461, %v1455
          %v1630 = vpack.c.b16 %v1462, %v1456
          %v1631 = vpack.c.b16 %v1463, %v1457
          %v1632 = vpack.c.b16 %v1464, %v1458
          %v1633 = vpack.c.b16 %v1465, %v1459
          %v1634 = vpack.c.b16 %v1466, %v1460
          %v1635 = vpack.c.b16 %v1473, %v1467
          %v1636 = vpack.c.b16 %v1474, %v1468
          %v1637 = vpack.c.b16 %v1475, %v1469
          %v1638 = vpack.c.b16 %v1476, %v1470
          %v1639 = vpack.c.b16 %v1477, %v1471
          %v1640 = vpack.c.b16 %v1478, %v1472
          %v1641 = vpack.c.b16 %v1485, %v1479
          %v1642 = vpack.c.b16 %v1486, %v1480
          %v1643 = vpack.c.b16 %v1487, %v1481
          %v1644 = vpack.c.b16 %v1488, %v1482
          %v1645 = vpack.c.b16 %v1489, %v1483
          %v1646 = vpack.c.b16 %v1490, %v1484
          %v1647 = vpack.c.b16 %v1497, %v1491
          %v1648 = vpack.c.b16 %v1498, %v1492
          %v1649 = vpack.c.b16 %v1499, %v1493
          %v1650 = vpack.c.b16 %v1500, %v1494
          %v1651 = vpack.c.b16 %v1501, %v1495
          %v1652 = vpack.c.b16 %v1502, %v1496
          %v1653 = vpack.c.b16 %v1509, %v1503
          %v1654 = vpack.c.b16 %v1510, %v1504
          %v1655 = vpack.c.b16 %v1511, %v1505
          %v1656 = vpack.c.b16 %v1512, %v1506
          %v1657 = vpack.c.b16 %v1513, %v1507
          %v1658 = vpack.c.b16 %v1514, %v1508
          %v1659 = vpack.c.b16 %v1521, %v1515
          %v1660 = vpack.c.b16 %v1522, %v1516
          %v1661 = vpack.c.b16 %v1523, %v1517
          %v1662 = vpack.c.b16 %v1524, %v1518
          %v1663 = vpack.c.b16 %v1525, %v1519
          %v1664 = vpack.c.b16 %v1526, %v1520
          %v1665 = vpack.c.b16 %v1533, %v1527
          %v1666 = vpack.c.b16 %v1534, %v1528
          %v1667 = vpack.c.b16 %v1535, %v1529
          %v1668 = vpack.c.b16 %v1536, %v1530
          %v1669 = vpack.c.b16 %v1537, %v1531
          %v1670 = vpack.c.b16 %v1538, %v1532
          %v1671 = vpack.c.b16 %v1545, %v1539
          %v1672 = vpack.c.b16 %v1546, %v1540
          %v1673 = vpack.c.b16 %v1547, %v1541
          %v1674 = vpack.c.b16 %v1548, %v1542
          %v1675 = vpack.c.b16 %v1549, %v1543
          %v1676 = vpack.c.b16 %v1550, %v1544
          %v1677 = vpack.c.b16 %v1557, %v1551
          %v1678 = vpack.c.b16 %v1558, %v1552
          %v1679 = vpack.c.b16 %v1559, %v1553
          %v1680 = vpack.c.b16 %v1560, %v1554
          %v1681 = vpack.c.b16 %v1561, %v1555
          %v1682 = vpack.c.b16 %v1562, %v1556
          %v1683 = vpack.c.b16 %v1569, %v1563
          %v1684 = vpack.c.b16 %v1570, %v1564
          %v1685 = vpack.c.b16 %v1571, %v1565
          %v1686 = vpack.c.b16 %v1572, %v1566
          %v1687 = vpack.c.b16 %v1573, %v1567
          %v1688 = vpack.c.b16 %v1574, %v1568
          %v1689 = vpack.c.b16 %v1581, %v1575
          %v1690 = vpack.c.b16 %v1582, %v1576
          %v1691 = vpack.c.b16 %v1583, %v1577
          %v1692 = vpack.c.b16 %v1584, %v1578
          %v1693 = vpack.c.b16 %v1585, %v1579
          %v1694 = vpack.c.b16 %v1586, %v1580
          %v1695 = vpack.c.b16 %v1593, %v1587
          %v1696 = vpack.c.b16 %v1594, %v1588
          %v1697 = vpack.c.b16 %v1595, %v1589
          %v1698 = vpack.c.b16 %v1596, %v1590
          %v1699 = vpack.c.b16 %v1597, %v1591
          %v1700 = vpack.c.b16 %v1598, %v1592
          %v1701 = vpack.c.b16 %v1605, %v1599
          %v1702 = vpack.c.b16 %v1606, %v1600
          %v1703 = vpack.c.b16 %v1607, %v1601
          %v1704 = vpack.c.b16 %v1608, %v1602
          %v1705 = vpack.c.b16 %v1609, %v1603
          %v1706 = vpack.c.b16 %v1610, %v1604
          %1803 = vmatpush.bf16.msra.mxu0 %v1653
          %1804 = vmatpush.bf16.msra.mxu0 %v1647
          %1805 = vmatpush.bf16.msra.mxu0 %v1641
          %1806 = vmatpush.bf16.msra.mxu0 %v1635
          %1807 = vmatpush.bf16.msra.mxu0 %v1629
          %1808 = vmatpush.bf16.msra.mxu0 %v1623
          %1809 = vmatpush.bf16.msra.mxu0 %v1617
          %1810 = vmatpush.bf16.msra.mxu0 %v1611
          %1811 = vmatmul.bf16.gmra.mxu0 %v1225
          %v1812 = vpop.f32.mrf.mxu0
          %v1813 = vadd.f32 0.0, %v1812
          %v1814 = vpop.f32.mrf.mxu0
          %v1815 = vadd.f32 0.0, %v1814
          %1816 = vdwg.mxu0
          %1817 = vmatpush.bf16.msra.mxu0 %v1701
          %1818 = vmatpush.bf16.msra.mxu0 %v1695
          %1819 = vmatpush.bf16.msra.mxu0 %v1689
          %1820 = vmatpush.bf16.msra.mxu0 %v1683
          %1821 = vmatpush.bf16.msra.mxu0 %v1677
          %1822 = vmatpush.bf16.msra.mxu0 %v1671
          %1823 = vmatpush.bf16.msra.mxu0 %v1665
          %1824 = vmatpush.bf16.msra.mxu0 %v1659
          %1825 = vmatmul.bf16.gmra.mxu0 %v1226
          %v1826 = vpop.f32.mrf.mxu0
          %v1827 = vadd.f32 %v1813, %v1826
          %v1828 = vpop.f32.mrf.mxu0
          %v1829 = vadd.f32 %v1815, %v1828
          %1830 = vdwg.mxu0
          %1831 = vmatpush.bf16.msra.mxu0 %v1654
          %1832 = vmatpush.bf16.msra.mxu0 %v1648
          %1833 = vmatpush.bf16.msra.mxu0 %v1642
          %1834 = vmatpush.bf16.msra.mxu0 %v1636
          %1835 = vmatpush.bf16.msra.mxu0 %v1630
          %1836 = vmatpush.bf16.msra.mxu0 %v1624
          %1837 = vmatpush.bf16.msra.mxu0 %v1618
          %1838 = vmatpush.bf16.msra.mxu0 %v1612
          %1839 = vmatmul.bf16.gmra.mxu0 %v1225
          %v1840 = vpop.f32.mrf.mxu0
          %v1841 = vadd.f32 0.0, %v1840
          %v1842 = vpop.f32.mrf.mxu0
          %v1843 = vadd.f32 0.0, %v1842
          %1844 = vdwg.mxu0
          %1845 = vmatpush.bf16.msra.mxu0 %v1702
          %1846 = vmatpush.bf16.msra.mxu0 %v1696
          %1847 = vmatpush.bf16.msra.mxu0 %v1690
          %1848 = vmatpush.bf16.msra.mxu0 %v1684
          %1849 = vmatpush.bf16.msra.mxu0 %v1678
          %1850 = vmatpush.bf16.msra.mxu0 %v1672
          %1851 = vmatpush.bf16.msra.mxu0 %v1666
          %1852 = vmatpush.bf16.msra.mxu0 %v1660
          %1853 = vmatmul.bf16.gmra.mxu0 %v1226
          %v1854 = vpop.f32.mrf.mxu0
          %v1855 = vadd.f32 %v1841, %v1854
          %v1856 = vpop.f32.mrf.mxu0
          %v1857 = vadd.f32 %v1843, %v1856
          %1858 = vdwg.mxu0
          %1859 = vmatpush.bf16.msra.mxu0 %v1655
          %1860 = vmatpush.bf16.msra.mxu0 %v1649
          %1861 = vmatpush.bf16.msra.mxu0 %v1643
          %1862 = vmatpush.bf16.msra.mxu0 %v1637
          %1863 = vmatpush.bf16.msra.mxu0 %v1631
          %1864 = vmatpush.bf16.msra.mxu0 %v1625
          %1865 = vmatpush.bf16.msra.mxu0 %v1619
          %1866 = vmatpush.bf16.msra.mxu0 %v1613
          %1867 = vmatmul.bf16.gmra.mxu0 %v1225
          %v1868 = vpop.f32.mrf.mxu0
          %v1869 = vadd.f32 0.0, %v1868
          %v1870 = vpop.f32.mrf.mxu0
          %v1871 = vadd.f32 0.0, %v1870
          %1872 = vdwg.mxu0
          %1873 = vmatpush.bf16.msra.mxu0 %v1703
          %1874 = vmatpush.bf16.msra.mxu0 %v1697
          %1875 = vmatpush.bf16.msra.mxu0 %v1691
          %1876 = vmatpush.bf16.msra.mxu0 %v1685
          %1877 = vmatpush.bf16.msra.mxu0 %v1679
          %1878 = vmatpush.bf16.msra.mxu0 %v1673
          %1879 = vmatpush.bf16.msra.mxu0 %v1667
          %1880 = vmatpush.bf16.msra.mxu0 %v1661
          %1881 = vmatmul.bf16.gmra.mxu0 %v1226
          %v1882 = vpop.f32.mrf.mxu0
          %v1883 = vadd.f32 %v1869, %v1882
          %v1884 = vpop.f32.mrf.mxu0
          %v1885 = vadd.f32 %v1871, %v1884
          %1886 = vdwg.mxu0
          %1887 = vmatpush.bf16.msra.mxu0 %v1656
          %1888 = vmatpush.bf16.msra.mxu0 %v1650
          %1889 = vmatpush.bf16.msra.mxu0 %v1644
          %1890 = vmatpush.bf16.msra.mxu0 %v1638
          %1891 = vmatpush.bf16.msra.mxu0 %v1632
          %1892 = vmatpush.bf16.msra.mxu0 %v1626
          %1893 = vmatpush.bf16.msra.mxu0 %v1620
          %1894 = vmatpush.bf16.msra.mxu0 %v1614
          %1895 = vmatmul.bf16.gmra.mxu0 %v1225
          %v1896 = vpop.f32.mrf.mxu0
          %v1897 = vadd.f32 0.0, %v1896
          %v1898 = vpop.f32.mrf.mxu0
          %v1899 = vadd.f32 0.0, %v1898
          %1900 = vdwg.mxu0
          %1901 = vmatpush.bf16.msra.mxu0 %v1704
          %1902 = vmatpush.bf16.msra.mxu0 %v1698
          %1903 = vmatpush.bf16.msra.mxu0 %v1692
          %1904 = vmatpush.bf16.msra.mxu0 %v1686
          %1905 = vmatpush.bf16.msra.mxu0 %v1680
          %1906 = vmatpush.bf16.msra.mxu0 %v1674
          %1907 = vmatpush.bf16.msra.mxu0 %v1668
          %1908 = vmatpush.bf16.msra.mxu0 %v1662
          %1909 = vmatmul.bf16.gmra.mxu0 %v1226
          %v1910 = vpop.f32.mrf.mxu0
          %v1911 = vadd.f32 %v1897, %v1910
          %v1912 = vpop.f32.mrf.mxu0
          %v1913 = vadd.f32 %v1899, %v1912
          %1914 = vdwg.mxu0
          %1915 = vmatpush.bf16.msra.mxu0 %v1657
          %1916 = vmatpush.bf16.msra.mxu0 %v1651
          %1917 = vmatpush.bf16.msra.mxu0 %v1645
          %1918 = vmatpush.bf16.msra.mxu0 %v1639
          %1919 = vmatpush.bf16.msra.mxu0 %v1633
          %1920 = vmatpush.bf16.msra.mxu0 %v1627
          %1921 = vmatpush.bf16.msra.mxu0 %v1621
          %1922 = vmatpush.bf16.msra.mxu0 %v1615
          %1923 = vmatmul.bf16.gmra.mxu0 %v1225
          %v1924 = vpop.f32.mrf.mxu0
          %v1925 = vadd.f32 0.0, %v1924
          %v1926 = vpop.f32.mrf.mxu0
          %v1927 = vadd.f32 0.0, %v1926
          %1928 = vdwg.mxu0
          %1929 = vmatpush.bf16.msra.mxu0 %v1705
          %1930 = vmatpush.bf16.msra.mxu0 %v1699
          %1931 = vmatpush.bf16.msra.mxu0 %v1693
          %1932 = vmatpush.bf16.msra.mxu0 %v1687
          %1933 = vmatpush.bf16.msra.mxu0 %v1681
          %1934 = vmatpush.bf16.msra.mxu0 %v1675
          %1935 = vmatpush.bf16.msra.mxu0 %v1669
          %1936 = vmatpush.bf16.msra.mxu0 %v1663
          %1937 = vmatmul.bf16.gmra.mxu0 %v1226
          %v1938 = vpop.f32.mrf.mxu0
          %v1939 = vadd.f32 %v1925, %v1938
          %v1940 = vpop.f32.mrf.mxu0
          %v1941 = vadd.f32 %v1927, %v1940
          %1942 = vdwg.mxu0
          %1943 = vmatpush.bf16.msra.mxu0 %v1658
          %1944 = vmatpush.bf16.msra.mxu0 %v1652
          %1945 = vmatpush.bf16.msra.mxu0 %v1646
          %1946 = vmatpush.bf16.msra.mxu0 %v1640
          %1947 = vmatpush.bf16.msra.mxu0 %v1634
          %1948 = vmatpush.bf16.msra.mxu0 %v1628
          %1949 = vmatpush.bf16.msra.mxu0 %v1622
          %1950 = vmatpush.bf16.msra.mxu0 %v1616
          %1951 = vmatmul.bf16.gmra.mxu0 %v1225
          %v1952 = vpop.f32.mrf.mxu0
          %v1953 = vadd.f32 0.0, %v1952
          %v1954 = vpop.f32.mrf.mxu0
          %v1955 = vadd.f32 0.0, %v1954
          %1956 = vdwg.mxu0
          %1957 = vmatpush.bf16.msra.mxu0 %v1706
          %1958 = vmatpush.bf16.msra.mxu0 %v1700
          %1959 = vmatpush.bf16.msra.mxu0 %v1694
          %1960 = vmatpush.bf16.msra.mxu0 %v1688
          %1961 = vmatpush.bf16.msra.mxu0 %v1682
          %1962 = vmatpush.bf16.msra.mxu0 %v1676
          %1963 = vmatpush.bf16.msra.mxu0 %v1670
          %1964 = vmatpush.bf16.msra.mxu0 %v1664
          %1965 = vmatmul.bf16.gmra.mxu0 %v1226
          %v1966 = vpop.f32.mrf.mxu0
          %v1967 = vadd.f32 %v1953, %v1966
          %v1968 = vpop.f32.mrf.mxu0
          %v1969 = vadd.f32 %v1955, %v1968
          %1970 = vdwg.mxu0
          %v1973 = vrot.slane %v1829, 7
          %v1974 = vrot.slane %v1857, 7
          %v1979 = vrot.slane %v1827, 7
          %v1980 = vrot.slane %v1855, 7
          %v1981 = vsel %vm1109, %v1979, %v1973
          %v1982 = vsel %vm1109, %v1980, %v1974
          %v1987 = vsel %vm1109, %v1973, %v1979
          %v1988 = vsel %vm1109, %v1974, %v1980
          %v1989 = vsel %vm1122, 0.0, %v1987
          %v1990 = vsel %vm1122, 0.0, %v1988
          %v1991 = vsel %vm1123, 0.0, %v1981
          %v1992 = vsel %vm1123, 0.0, %v1982
          %v1997 = vrot.slane %v1939, 1
          %v1998 = vrot.slane %v1941, 1
          %v1999 = vsel %vm1132, %v1997, %v1998
          %v2000 = vrot.slane %v1967, 1
          %v2001 = vrot.slane %v1969, 1
          %v2002 = vsel %vm1132, %v2000, %v2001
          %v2009 = vsel %vm1132, %v1998, %v1997
          %v2010 = vsel %vm1132, %v2001, %v2000
          %v2011 = vsel %vm1149, 0.0, %v1999
          %v2012 = vsel %vm1149, 0.0, %v2002
          %v2013 = vsel %vm1150, 0.0, %v2009
          %v2014 = vsel %vm1150, 0.0, %v2010
          %v2015 = vadd.f32 %v1989, %v1883
          %v2016 = vadd.f32 %v1990, %v1911
          %v2017 = vadd.f32 %v1991, %v1885
          %v2018 = vadd.f32 %v1992, %v1913
          %v2019 = vadd.f32 %v2015, %v2011
          %v2020 = vadd.f32 %v2016, %v2012
          %v2021 = vadd.f32 %v2017, %v2013
          %v2022 = vadd.f32 %v2018, %v2014
          %v2023 = vld [vmem:[#allocation15] sm:$0x3]
          %v2025 = vperm.slane %v2023, 0
          %v2026 = vperm.slane %v2023, 1
          %v2029 = vadd.f32 %v2019, %v2025
          %v2030 = vadd.f32 %v2020, %v2026
          %v2031 = vadd.f32 %v2021, %v2025
          %v2032 = vadd.f32 %v2022, %v2026
          %v2035 = vrot.slane %v2031, 7
          %v2036 = vrot.slane %v2032, 7
          %v2041 = vrot.slane %v2029, 7
          %v2042 = vrot.slane %v2030, 7
          %v2043 = vsel %vm1109, %v2041, %v2035
          %v2044 = vsel %vm1109, %v2042, %v2036
          %v2049 = vsel %vm1109, %v2035, %v2041
          %v2050 = vsel %vm1109, %v2036, %v2042
          %v2051 = vsel %vm1122, -inf, %v2049
          %v2052 = vsel %vm1122, -inf, %v2050
          %v2053 = vsel %vm1123, -inf, %v2043
          %v2054 = vsel %vm1123, -inf, %v2044
          %v2055 = vrot.slane %v2029, 1
          %v2056 = vrot.slane %v2031, 1
          %v2057 = vsel %vm1132, %v2055, %v2056
          %v2058 = vrot.slane %v2030, 1
          %v2059 = vrot.slane %v2032, 1
          %v2060 = vsel %vm1132, %v2058, %v2059
          %v2067 = vsel %vm1132, %v2056, %v2055
          %v2068 = vsel %vm1132, %v2059, %v2058
          %v2069 = vsel %vm1149, -inf, %v2057
          %v2070 = vsel %vm1149, -inf, %v2060
          %v2071 = vsel %vm1150, -inf, %v2067
          %v2072 = vsel %vm1150, -inf, %v2068
          %v2073 = vmax.f32 %v2051, %v2029
          %v2074 = vmax.f32 %v2052, %v2030
          %v2075 = vmax.f32 %v2053, %v2031
          %v2076 = vmax.f32 %v2054, %v2032
          %v2077 = vmax.f32 %v2073, %v2069
          %v2078 = vmax.f32 %v2074, %v2070
          %v2079 = vmax.f32 %v2075, %v2071
          %v2080 = vmax.f32 %v2076, %v2072
          %v2081 = vmax.f32 %v2077, 0.0
          %v2082 = vmax.f32 %v2078, 0.0
          %v2083 = vmax.f32 %v2079, 0.0
          %v2084 = vmax.f32 %v2080, 0.0
          %v2085 = vpack.c.bf16 %v2083, %v2081
          %v2086 = vpack.c.bf16 %v2084, %v2082
          %v2087 = vld [vmem:[#allocation16] sm:$0xff]
          %v2088 = vld [vmem:[#allocation16 + $0x8] sm:$0xff]
          %v2089 = vld [vmem:[#allocation16 + $0x10] sm:$0xff]
          %v2090 = vld [vmem:[#allocation16 + $0x18] sm:$0xff]
          %v2091 = vld [vmem:[#allocation16 + $0x20] sm:$0xff]
          %v2092 = vld [vmem:[#allocation16 + $0x28] sm:$0xff]
          %v2093 = vld [vmem:[#allocation16 + $0x30] sm:$0xff]
          %v2094 = vld [vmem:[#allocation16 + $0x38] sm:$0xff]
          %v2095 = vld [vmem:[#allocation16 + $0x40] sm:$0xff]
          %v2096 = vld [vmem:[#allocation16 + $0x48] sm:$0xff]
          %v2097 = vld [vmem:[#allocation16 + $0x50] sm:$0xff]
          %v2098 = vld [vmem:[#allocation16 + $0x58] sm:$0xff]
          %v2099 = vld [vmem:[#allocation16 + $0x60] sm:$0xff]
          %v2100 = vld [vmem:[#allocation16 + $0x68] sm:$0xff]
          %v2101 = vld [vmem:[#allocation16 + $0x70] sm:$0xff]
          %v2102 = vld [vmem:[#allocation16 + $0x78] sm:$0xff]
          %v2103 = vld [vmem:[#allocation16 + $0x80] sm:$0xff]
          %v2104 = vld [vmem:[#allocation16 + $0x88] sm:$0xff]
          %v2105 = vld [vmem:[#allocation16 + $0x90] sm:$0xff]
          %v2106 = vld [vmem:[#allocation16 + $0x98] sm:$0xff]
          %v2107 = vld [vmem:[#allocation16 + $0xa0] sm:$0xff]
          %v2108 = vld [vmem:[#allocation16 + $0xa8] sm:$0xff]
          %v2109 = vld [vmem:[#allocation16 + $0xb0] sm:$0xff]
          %v2110 = vld [vmem:[#allocation16 + $0xb8] sm:$0xff]
          %v2111 = vld [vmem:[#allocation16 + $0xc0] sm:$0xff]
          %v2112 = vld [vmem:[#allocation16 + $0xc8] sm:$0xff]
          %v2113 = vld [vmem:[#allocation16 + $0xd0] sm:$0xff]
          %v2114 = vld [vmem:[#allocation16 + $0xd8] sm:$0xff]
          %v2115 = vld [vmem:[#allocation16 + $0xe0] sm:$0xff]
          %v2116 = vld [vmem:[#allocation16 + $0xe8] sm:$0xff]
          %v2117 = vld [vmem:[#allocation16 + $0xf0] sm:$0xff]
          %v2118 = vld [vmem:[#allocation16 + $0xf8] sm:$0xff]
          %v2119 = vld [vmem:[#allocation16 + $0x100] sm:$0xff]
          %v2120 = vld [vmem:[#allocation16 + $0x108] sm:$0xff]
          %v2121 = vld [vmem:[#allocation16 + $0x110] sm:$0xff]
          %v2122 = vld [vmem:[#allocation16 + $0x118] sm:$0xff]
          %v2123 = vld [vmem:[#allocation16 + $0x120] sm:$0xff]
          %v2124 = vld [vmem:[#allocation16 + $0x128] sm:$0xff]
          %v2125 = vld [vmem:[#allocation16 + $0x130] sm:$0xff]
          %v2126 = vld [vmem:[#allocation16 + $0x138] sm:$0xff]
          %v2127 = vld [vmem:[#allocation16 + $0x140] sm:$0xff]
          %v2128 = vld [vmem:[#allocation16 + $0x148] sm:$0xff]
          %v2129 = vld [vmem:[#allocation16 + $0x150] sm:$0xff]
          %v2130 = vld [vmem:[#allocation16 + $0x158] sm:$0xff]
          %v2131 = vld [vmem:[#allocation16 + $0x160] sm:$0xff]
          %v2132 = vld [vmem:[#allocation16 + $0x168] sm:$0xff]
          %v2133 = vld [vmem:[#allocation16 + $0x170] sm:$0xff]
          %v2134 = vld [vmem:[#allocation16 + $0x178] sm:$0xff]
          %v2135 = vld [vmem:[#allocation16 + $0x180] sm:$0xff]
          %v2136 = vld [vmem:[#allocation16 + $0x188] sm:$0xff]
          %v2137 = vld [vmem:[#allocation16 + $0x190] sm:$0xff]
          %v2138 = vld [vmem:[#allocation16 + $0x198] sm:$0xff]
          %v2139 = vld [vmem:[#allocation16 + $0x1a0] sm:$0xff]
          %v2140 = vld [vmem:[#allocation16 + $0x1a8] sm:$0xff]
          %v2141 = vld [vmem:[#allocation16 + $0x1b0] sm:$0xff]
          %v2142 = vld [vmem:[#allocation16 + $0x1b8] sm:$0xff]
          %v2143 = vld [vmem:[#allocation16 + $0x1c0] sm:$0xff]
          %v2144 = vld [vmem:[#allocation16 + $0x1c8] sm:$0xff]
          %v2145 = vld [vmem:[#allocation16 + $0x1d0] sm:$0xff]
          %v2146 = vld [vmem:[#allocation16 + $0x1d8] sm:$0xff]
          %v2147 = vld [vmem:[#allocation16 + $0x1e0] sm:$0xff]
          %v2148 = vld [vmem:[#allocation16 + $0x1e8] sm:$0xff]
          %v2149 = vld [vmem:[#allocation16 + $0x1f0] sm:$0xff]
          %v2150 = vld [vmem:[#allocation16 + $0x1f8] sm:$0xff]
          %v2151 = vld [vmem:[#allocation16 + $0x200] sm:$0xff]
          %v2152 = vld [vmem:[#allocation16 + $0x208] sm:$0xff]
          %v2153 = vld [vmem:[#allocation16 + $0x210] sm:$0xff]
          %v2154 = vld [vmem:[#allocation16 + $0x218] sm:$0xff]
          %v2155 = vld [vmem:[#allocation16 + $0x220] sm:$0xff]
          %v2156 = vld [vmem:[#allocation16 + $0x228] sm:$0xff]
          %v2157 = vld [vmem:[#allocation16 + $0x230] sm:$0xff]
          %v2158 = vld [vmem:[#allocation16 + $0x238] sm:$0xff]
          %v2159 = vld [vmem:[#allocation16 + $0x240] sm:$0xff]
          %v2160 = vld [vmem:[#allocation16 + $0x248] sm:$0xff]
          %v2161 = vld [vmem:[#allocation16 + $0x250] sm:$0xff]
          %v2162 = vld [vmem:[#allocation16 + $0x258] sm:$0xff]
          %v2163 = vld [vmem:[#allocation16 + $0x260] sm:$0xff]
          %v2164 = vld [vmem:[#allocation16 + $0x268] sm:$0xff]
          %v2165 = vld [vmem:[#allocation16 + $0x270] sm:$0xff]
          %v2166 = vld [vmem:[#allocation16 + $0x278] sm:$0xff]
          %v2167 = vld [vmem:[#allocation16 + $0x280] sm:$0xff]
          %v2168 = vld [vmem:[#allocation16 + $0x288] sm:$0xff]
          %v2169 = vld [vmem:[#allocation16 + $0x290] sm:$0xff]
          %v2170 = vld [vmem:[#allocation16 + $0x298] sm:$0xff]
          %v2171 = vld [vmem:[#allocation16 + $0x2a0] sm:$0xff]
          %v2172 = vld [vmem:[#allocation16 + $0x2a8] sm:$0xff]
          %v2173 = vld [vmem:[#allocation16 + $0x2b0] sm:$0xff]
          %v2174 = vld [vmem:[#allocation16 + $0x2b8] sm:$0xff]
          %v2175 = vld [vmem:[#allocation16 + $0x2c0] sm:$0xff]
          %v2176 = vld [vmem:[#allocation16 + $0x2c8] sm:$0xff]
          %v2177 = vld [vmem:[#allocation16 + $0x2d0] sm:$0xff]
          %v2178 = vld [vmem:[#allocation16 + $0x2d8] sm:$0xff]
          %v2179 = vld [vmem:[#allocation16 + $0x2e0] sm:$0xff]
          %v2180 = vld [vmem:[#allocation16 + $0x2e8] sm:$0xff]
          %v2181 = vld [vmem:[#allocation16 + $0x2f0] sm:$0xff]
          %v2182 = vld [vmem:[#allocation16 + $0x2f8] sm:$0xff]
          %v2279 = vunpack.c.l.b16 %v2087
          %v2280 = vunpack.c.h.b16 %v2087
          %v2281 = vunpack.c.l.b16 %v2088
          %v2282 = vunpack.c.h.b16 %v2088
          %v2283 = vunpack.c.l.b16 %v2089
          %v2284 = vunpack.c.h.b16 %v2089
          %v2285 = vunpack.c.l.b16 %v2090
          %v2286 = vunpack.c.h.b16 %v2090
          %v2287 = vunpack.c.l.b16 %v2091
          %v2288 = vunpack.c.h.b16 %v2091
          %v2289 = vunpack.c.l.b16 %v2092
          %v2290 = vunpack.c.h.b16 %v2092
          %v2291 = vunpack.c.l.b16 %v2093
          %v2292 = vunpack.c.h.b16 %v2093
          %v2293 = vunpack.c.l.b16 %v2094
          %v2294 = vunpack.c.h.b16 %v2094
          %v2295 = vunpack.c.l.b16 %v2095
          %v2296 = vunpack.c.h.b16 %v2095
          %v2297 = vunpack.c.l.b16 %v2096
          %v2298 = vunpack.c.h.b16 %v2096
          %v2299 = vunpack.c.l.b16 %v2097
          %v2300 = vunpack.c.h.b16 %v2097
          %v2301 = vunpack.c.l.b16 %v2098
          %v2302 = vunpack.c.h.b16 %v2098
          %v2303 = vunpack.c.l.b16 %v2099
          %v2304 = vunpack.c.h.b16 %v2099
          %v2305 = vunpack.c.l.b16 %v2100
          %v2306 = vunpack.c.h.b16 %v2100
          %v2307 = vunpack.c.l.b16 %v2101
          %v2308 = vunpack.c.h.b16 %v2101
          %v2309 = vunpack.c.l.b16 %v2102
          %v2310 = vunpack.c.h.b16 %v2102
          %v2311 = vunpack.c.l.b16 %v2103
          %v2312 = vunpack.c.h.b16 %v2103
          %v2313 = vunpack.c.l.b16 %v2104
          %v2314 = vunpack.c.h.b16 %v2104
          %v2315 = vunpack.c.l.b16 %v2105
          %v2316 = vunpack.c.h.b16 %v2105
          %v2317 = vunpack.c.l.b16 %v2106
          %v2318 = vunpack.c.h.b16 %v2106
          %v2319 = vunpack.c.l.b16 %v2107
          %v2320 = vunpack.c.h.b16 %v2107
          %v2321 = vunpack.c.l.b16 %v2108
          %v2322 = vunpack.c.h.b16 %v2108
          %v2323 = vunpack.c.l.b16 %v2109
          %v2324 = vunpack.c.h.b16 %v2109
          %v2325 = vunpack.c.l.b16 %v2110
          %v2326 = vunpack.c.h.b16 %v2110
          %v2327 = vunpack.c.l.b16 %v2111
          %v2328 = vunpack.c.h.b16 %v2111
          %v2329 = vunpack.c.l.b16 %v2112
          %v2330 = vunpack.c.h.b16 %v2112
          %v2331 = vunpack.c.l.b16 %v2113
          %v2332 = vunpack.c.h.b16 %v2113
          %v2333 = vunpack.c.l.b16 %v2114
          %v2334 = vunpack.c.h.b16 %v2114
          %v2335 = vunpack.c.l.b16 %v2115
          %v2336 = vunpack.c.h.b16 %v2115
          %v2337 = vunpack.c.l.b16 %v2116
          %v2338 = vunpack.c.h.b16 %v2116
          %v2339 = vunpack.c.l.b16 %v2117
          %v2340 = vunpack.c.h.b16 %v2117
          %v2341 = vunpack.c.l.b16 %v2118
          %v2342 = vunpack.c.h.b16 %v2118
          %v2343 = vunpack.c.l.b16 %v2119
          %v2344 = vunpack.c.h.b16 %v2119
          %v2345 = vunpack.c.l.b16 %v2120
          %v2346 = vunpack.c.h.b16 %v2120
          %v2347 = vunpack.c.l.b16 %v2121
          %v2348 = vunpack.c.h.b16 %v2121
          %v2349 = vunpack.c.l.b16 %v2122
          %v2350 = vunpack.c.h.b16 %v2122
          %v2351 = vunpack.c.l.b16 %v2123
          %v2352 = vunpack.c.h.b16 %v2123
          %v2353 = vunpack.c.l.b16 %v2124
          %v2354 = vunpack.c.h.b16 %v2124
          %v2355 = vunpack.c.l.b16 %v2125
          %v2356 = vunpack.c.h.b16 %v2125
          %v2357 = vunpack.c.l.b16 %v2126
          %v2358 = vunpack.c.h.b16 %v2126
          %v2359 = vunpack.c.l.b16 %v2127
          %v2360 = vunpack.c.h.b16 %v2127
          %v2361 = vunpack.c.l.b16 %v2128
          %v2362 = vunpack.c.h.b16 %v2128
          %v2363 = vunpack.c.l.b16 %v2129
          %v2364 = vunpack.c.h.b16 %v2129
          %v2365 = vunpack.c.l.b16 %v2130
          %v2366 = vunpack.c.h.b16 %v2130
          %v2367 = vunpack.c.l.b16 %v2131
          %v2368 = vunpack.c.h.b16 %v2131
          %v2369 = vunpack.c.l.b16 %v2132
          %v2370 = vunpack.c.h.b16 %v2132
          %v2371 = vunpack.c.l.b16 %v2133
          %v2372 = vunpack.c.h.b16 %v2133
          %v2373 = vunpack.c.l.b16 %v2134
          %v2374 = vunpack.c.h.b16 %v2134
          %v2375 = vunpack.c.l.b16 %v2135
          %v2376 = vunpack.c.h.b16 %v2135
          %v2377 = vunpack.c.l.b16 %v2136
          %v2378 = vunpack.c.h.b16 %v2136
          %v2379 = vunpack.c.l.b16 %v2137
          %v2380 = vunpack.c.h.b16 %v2137
          %v2381 = vunpack.c.l.b16 %v2138
          %v2382 = vunpack.c.h.b16 %v2138
          %v2383 = vunpack.c.l.b16 %v2139
          %v2384 = vunpack.c.h.b16 %v2139
          %v2385 = vunpack.c.l.b16 %v2140
          %v2386 = vunpack.c.h.b16 %v2140
          %v2387 = vunpack.c.l.b16 %v2141
          %v2388 = vunpack.c.h.b16 %v2141
          %v2389 = vunpack.c.l.b16 %v2142
          %v2390 = vunpack.c.h.b16 %v2142
          %v2391 = vunpack.c.l.b16 %v2143
          %v2392 = vunpack.c.h.b16 %v2143
          %v2393 = vunpack.c.l.b16 %v2144
          %v2394 = vunpack.c.h.b16 %v2144
          %v2395 = vunpack.c.l.b16 %v2145
          %v2396 = vunpack.c.h.b16 %v2145
          %v2397 = vunpack.c.l.b16 %v2146
          %v2398 = vunpack.c.h.b16 %v2146
          %v2399 = vunpack.c.l.b16 %v2147
          %v2400 = vunpack.c.h.b16 %v2147
          %v2401 = vunpack.c.l.b16 %v2148
          %v2402 = vunpack.c.h.b16 %v2148
          %v2403 = vunpack.c.l.b16 %v2149
          %v2404 = vunpack.c.h.b16 %v2149
          %v2405 = vunpack.c.l.b16 %v2150
          %v2406 = vunpack.c.h.b16 %v2150
          %v2407 = vunpack.c.l.b16 %v2151
          %v2408 = vunpack.c.h.b16 %v2151
          %v2409 = vunpack.c.l.b16 %v2152
          %v2410 = vunpack.c.h.b16 %v2152
          %v2411 = vunpack.c.l.b16 %v2153
          %v2412 = vunpack.c.h.b16 %v2153
          %v2413 = vunpack.c.l.b16 %v2154
          %v2414 = vunpack.c.h.b16 %v2154
          %v2415 = vunpack.c.l.b16 %v2155
          %v2416 = vunpack.c.h.b16 %v2155
          %v2417 = vunpack.c.l.b16 %v2156
          %v2418 = vunpack.c.h.b16 %v2156
          %v2419 = vunpack.c.l.b16 %v2157
          %v2420 = vunpack.c.h.b16 %v2157
          %v2421 = vunpack.c.l.b16 %v2158
          %v2422 = vunpack.c.h.b16 %v2158
          %v2423 = vunpack.c.l.b16 %v2159
          %v2424 = vunpack.c.h.b16 %v2159
          %v2425 = vunpack.c.l.b16 %v2160
          %v2426 = vunpack.c.h.b16 %v2160
          %v2427 = vunpack.c.l.b16 %v2161
          %v2428 = vunpack.c.h.b16 %v2161
          %v2429 = vunpack.c.l.b16 %v2162
          %v2430 = vunpack.c.h.b16 %v2162
          %v2431 = vunpack.c.l.b16 %v2163
          %v2432 = vunpack.c.h.b16 %v2163
          %v2433 = vunpack.c.l.b16 %v2164
          %v2434 = vunpack.c.h.b16 %v2164
          %v2435 = vunpack.c.l.b16 %v2165
          %v2436 = vunpack.c.h.b16 %v2165
          %v2437 = vunpack.c.l.b16 %v2166
          %v2438 = vunpack.c.h.b16 %v2166
          %v2439 = vunpack.c.l.b16 %v2167
          %v2440 = vunpack.c.h.b16 %v2167
          %v2441 = vunpack.c.l.b16 %v2168
          %v2442 = vunpack.c.h.b16 %v2168
          %v2443 = vunpack.c.l.b16 %v2169
          %v2444 = vunpack.c.h.b16 %v2169
          %v2445 = vunpack.c.l.b16 %v2170
          %v2446 = vunpack.c.h.b16 %v2170
          %v2447 = vunpack.c.l.b16 %v2171
          %v2448 = vunpack.c.h.b16 %v2171
          %v2449 = vunpack.c.l.b16 %v2172
          %v2450 = vunpack.c.h.b16 %v2172
          %v2451 = vunpack.c.l.b16 %v2173
          %v2452 = vunpack.c.h.b16 %v2173
          %v2453 = vunpack.c.l.b16 %v2174
          %v2454 = vunpack.c.h.b16 %v2174
          %v2455 = vunpack.c.l.b16 %v2175
          %v2456 = vunpack.c.h.b16 %v2175
          %v2457 = vunpack.c.l.b16 %v2176
          %v2458 = vunpack.c.h.b16 %v2176
          %v2459 = vunpack.c.l.b16 %v2177
          %v2460 = vunpack.c.h.b16 %v2177
          %v2461 = vunpack.c.l.b16 %v2178
          %v2462 = vunpack.c.h.b16 %v2178
          %v2463 = vunpack.c.l.b16 %v2179
          %v2464 = vunpack.c.h.b16 %v2179
          %v2465 = vunpack.c.l.b16 %v2180
          %v2466 = vunpack.c.h.b16 %v2180
          %v2467 = vunpack.c.l.b16 %v2181
          %v2468 = vunpack.c.h.b16 %v2181
          %v2469 = vunpack.c.l.b16 %v2182
          %v2470 = vunpack.c.h.b16 %v2182
          %v2471 = vpack.c.b16 %v2285, %v2279
          %v2472 = vpack.c.b16 %v2286, %v2280
          %v2473 = vpack.c.b16 %v2287, %v2281
          %v2474 = vpack.c.b16 %v2288, %v2282
          %v2475 = vpack.c.b16 %v2289, %v2283
          %v2476 = vpack.c.b16 %v2290, %v2284
          %v2477 = vpack.c.b16 %v2297, %v2291
          %v2478 = vpack.c.b16 %v2298, %v2292
          %v2479 = vpack.c.b16 %v2299, %v2293
          %v2480 = vpack.c.b16 %v2300, %v2294
          %v2481 = vpack.c.b16 %v2301, %v2295
          %v2482 = vpack.c.b16 %v2302, %v2296
          %v2483 = vpack.c.b16 %v2309, %v2303
          %v2484 = vpack.c.b16 %v2310, %v2304
          %v2485 = vpack.c.b16 %v2311, %v2305
          %v2486 = vpack.c.b16 %v2312, %v2306
          %v2487 = vpack.c.b16 %v2313, %v2307
          %v2488 = vpack.c.b16 %v2314, %v2308
          %v2489 = vpack.c.b16 %v2321, %v2315
          %v2490 = vpack.c.b16 %v2322, %v2316
          %v2491 = vpack.c.b16 %v2323, %v2317
          %v2492 = vpack.c.b16 %v2324, %v2318
          %v2493 = vpack.c.b16 %v2325, %v2319
          %v2494 = vpack.c.b16 %v2326, %v2320
          %v2495 = vpack.c.b16 %v2333, %v2327
          %v2496 = vpack.c.b16 %v2334, %v2328
          %v2497 = vpack.c.b16 %v2335, %v2329
          %v2498 = vpack.c.b16 %v2336, %v2330
          %v2499 = vpack.c.b16 %v2337, %v2331
          %v2500 = vpack.c.b16 %v2338, %v2332
          %v2501 = vpack.c.b16 %v2345, %v2339
          %v2502 = vpack.c.b16 %v2346, %v2340
          %v2503 = vpack.c.b16 %v2347, %v2341
          %v2504 = vpack.c.b16 %v2348, %v2342
          %v2505 = vpack.c.b16 %v2349, %v2343
          %v2506 = vpack.c.b16 %v2350, %v2344
          %v2507 = vpack.c.b16 %v2357, %v2351
          %v2508 = vpack.c.b16 %v2358, %v2352
          %v2509 = vpack.c.b16 %v2359, %v2353
          %v2510 = vpack.c.b16 %v2360, %v2354
          %v2511 = vpack.c.b16 %v2361, %v2355
          %v2512 = vpack.c.b16 %v2362, %v2356
          %v2513 = vpack.c.b16 %v2369, %v2363
          %v2514 = vpack.c.b16 %v2370, %v2364
          %v2515 = vpack.c.b16 %v2371, %v2365
          %v2516 = vpack.c.b16 %v2372, %v2366
          %v2517 = vpack.c.b16 %v2373, %v2367
          %v2518 = vpack.c.b16 %v2374, %v2368
          %v2519 = vpack.c.b16 %v2381, %v2375
          %v2520 = vpack.c.b16 %v2382, %v2376
          %v2521 = vpack.c.b16 %v2383, %v2377
          %v2522 = vpack.c.b16 %v2384, %v2378
          %v2523 = vpack.c.b16 %v2385, %v2379
          %v2524 = vpack.c.b16 %v2386, %v2380
          %v2525 = vpack.c.b16 %v2393, %v2387
          %v2526 = vpack.c.b16 %v2394, %v2388
          %v2527 = vpack.c.b16 %v2395, %v2389
          %v2528 = vpack.c.b16 %v2396, %v2390
          %v2529 = vpack.c.b16 %v2397, %v2391
          %v2530 = vpack.c.b16 %v2398, %v2392
          %v2531 = vpack.c.b16 %v2405, %v2399
          %v2532 = vpack.c.b16 %v2406, %v2400
          %v2533 = vpack.c.b16 %v2407, %v2401
          %v2534 = vpack.c.b16 %v2408, %v2402
          %v2535 = vpack.c.b16 %v2409, %v2403
          %v2536 = vpack.c.b16 %v2410, %v2404
          %v2537 = vpack.c.b16 %v2417, %v2411
          %v2538 = vpack.c.b16 %v2418, %v2412
          %v2539 = vpack.c.b16 %v2419, %v2413
          %v2540 = vpack.c.b16 %v2420, %v2414
          %v2541 = vpack.c.b16 %v2421, %v2415
          %v2542 = vpack.c.b16 %v2422, %v2416
          %v2543 = vpack.c.b16 %v2429, %v2423
          %v2544 = vpack.c.b16 %v2430, %v2424
          %v2545 = vpack.c.b16 %v2431, %v2425
          %v2546 = vpack.c.b16 %v2432, %v2426
          %v2547 = vpack.c.b16 %v2433, %v2427
          %v2548 = vpack.c.b16 %v2434, %v2428
          %v2549 = vpack.c.b16 %v2441, %v2435
          %v2550 = vpack.c.b16 %v2442, %v2436
          %v2551 = vpack.c.b16 %v2443, %v2437
          %v2552 = vpack.c.b16 %v2444, %v2438
          %v2553 = vpack.c.b16 %v2445, %v2439
          %v2554 = vpack.c.b16 %v2446, %v2440
          %v2555 = vpack.c.b16 %v2453, %v2447
          %v2556 = vpack.c.b16 %v2454, %v2448
          %v2557 = vpack.c.b16 %v2455, %v2449
          %v2558 = vpack.c.b16 %v2456, %v2450
          %v2559 = vpack.c.b16 %v2457, %v2451
          %v2560 = vpack.c.b16 %v2458, %v2452
          %v2561 = vpack.c.b16 %v2465, %v2459
          %v2562 = vpack.c.b16 %v2466, %v2460
          %v2563 = vpack.c.b16 %v2467, %v2461
          %v2564 = vpack.c.b16 %v2468, %v2462
          %v2565 = vpack.c.b16 %v2469, %v2463
          %v2566 = vpack.c.b16 %v2470, %v2464
          %2663 = vmatpush.bf16.msra.mxu0 %v2513
          %2664 = vmatpush.bf16.msra.mxu0 %v2507
          %2665 = vmatpush.bf16.msra.mxu0 %v2501
          %2666 = vmatpush.bf16.msra.mxu0 %v2495
          %2667 = vmatpush.bf16.msra.mxu0 %v2489
          %2668 = vmatpush.bf16.msra.mxu0 %v2483
          %2669 = vmatpush.bf16.msra.mxu0 %v2477
          %2670 = vmatpush.bf16.msra.mxu0 %v2471
          %2671 = vmatmul.bf16.gmra.mxu0 %v2085
          %v2672 = vpop.f32.mrf.mxu0
          %v2673 = vadd.f32 0.0, %v2672
          %v2674 = vpop.f32.mrf.mxu0
          %v2675 = vadd.f32 0.0, %v2674
          %2676 = vdwg.mxu0
          %2677 = vmatpush.bf16.msra.mxu0 %v2561
          %2678 = vmatpush.bf16.msra.mxu0 %v2555
          %2679 = vmatpush.bf16.msra.mxu0 %v2549
          %2680 = vmatpush.bf16.msra.mxu0 %v2543
          %2681 = vmatpush.bf16.msra.mxu0 %v2537
          %2682 = vmatpush.bf16.msra.mxu0 %v2531
          %2683 = vmatpush.bf16.msra.mxu0 %v2525
          %2684 = vmatpush.bf16.msra.mxu0 %v2519
          %2685 = vmatmul.bf16.gmra.mxu0 %v2086
          %v2686 = vpop.f32.mrf.mxu0
          %v2687 = vadd.f32 %v2673, %v2686
          %v2688 = vpop.f32.mrf.mxu0
          %v2689 = vadd.f32 %v2675, %v2688
          %2690 = vdwg.mxu0
          %2691 = vmatpush.bf16.msra.mxu0 %v2514
          %2692 = vmatpush.bf16.msra.mxu0 %v2508
          %2693 = vmatpush.bf16.msra.mxu0 %v2502
          %2694 = vmatpush.bf16.msra.mxu0 %v2496
          %2695 = vmatpush.bf16.msra.mxu0 %v2490
          %2696 = vmatpush.bf16.msra.mxu0 %v2484
          %2697 = vmatpush.bf16.msra.mxu0 %v2478
          %2698 = vmatpush.bf16.msra.mxu0 %v2472
          %2699 = vmatmul.bf16.gmra.mxu0 %v2085
          %v2700 = vpop.f32.mrf.mxu0
          %v2701 = vadd.f32 0.0, %v2700
          %v2702 = vpop.f32.mrf.mxu0
          %v2703 = vadd.f32 0.0, %v2702
          %2704 = vdwg.mxu0
          %2705 = vmatpush.bf16.msra.mxu0 %v2562
          %2706 = vmatpush.bf16.msra.mxu0 %v2556
          %2707 = vmatpush.bf16.msra.mxu0 %v2550
          %2708 = vmatpush.bf16.msra.mxu0 %v2544
          %2709 = vmatpush.bf16.msra.mxu0 %v2538
          %2710 = vmatpush.bf16.msra.mxu0 %v2532
          %2711 = vmatpush.bf16.msra.mxu0 %v2526
          %2712 = vmatpush.bf16.msra.mxu0 %v2520
          %2713 = vmatmul.bf16.gmra.mxu0 %v2086
          %v2714 = vpop.f32.mrf.mxu0
          %v2715 = vadd.f32 %v2701, %v2714
          %v2716 = vpop.f32.mrf.mxu0
          %v2717 = vadd.f32 %v2703, %v2716
          %2718 = vdwg.mxu0
          %2719 = vmatpush.bf16.msra.mxu0 %v2515
          %2720 = vmatpush.bf16.msra.mxu0 %v2509
          %2721 = vmatpush.bf16.msra.mxu0 %v2503
          %2722 = vmatpush.bf16.msra.mxu0 %v2497
          %2723 = vmatpush.bf16.msra.mxu0 %v2491
          %2724 = vmatpush.bf16.msra.mxu0 %v2485
          %2725 = vmatpush.bf16.msra.mxu0 %v2479
          %2726 = vmatpush.bf16.msra.mxu0 %v2473
          %2727 = vmatmul.bf16.gmra.mxu0 %v2085
          %v2728 = vpop.f32.mrf.mxu0
          %v2729 = vadd.f32 0.0, %v2728
          %v2730 = vpop.f32.mrf.mxu0
          %v2731 = vadd.f32 0.0, %v2730
          %2732 = vdwg.mxu0
          %2733 = vmatpush.bf16.msra.mxu0 %v2563
          %2734 = vmatpush.bf16.msra.mxu0 %v2557
          %2735 = vmatpush.bf16.msra.mxu0 %v2551
          %2736 = vmatpush.bf16.msra.mxu0 %v2545
          %2737 = vmatpush.bf16.msra.mxu0 %v2539
          %2738 = vmatpush.bf16.msra.mxu0 %v2533
          %2739 = vmatpush.bf16.msra.mxu0 %v2527
          %2740 = vmatpush.bf16.msra.mxu0 %v2521
          %2741 = vmatmul.bf16.gmra.mxu0 %v2086
          %v2742 = vpop.f32.mrf.mxu0
          %v2743 = vadd.f32 %v2729, %v2742
          %v2744 = vpop.f32.mrf.mxu0
          %v2745 = vadd.f32 %v2731, %v2744
          %2746 = vdwg.mxu0
          %2747 = vmatpush.bf16.msra.mxu0 %v2516
          %2748 = vmatpush.bf16.msra.mxu0 %v2510
          %2749 = vmatpush.bf16.msra.mxu0 %v2504
          %2750 = vmatpush.bf16.msra.mxu0 %v2498
          %2751 = vmatpush.bf16.msra.mxu0 %v2492
          %2752 = vmatpush.bf16.msra.mxu0 %v2486
          %2753 = vmatpush.bf16.msra.mxu0 %v2480
          %2754 = vmatpush.bf16.msra.mxu0 %v2474
          %2755 = vmatmul.bf16.gmra.mxu0 %v2085
          %v2756 = vpop.f32.mrf.mxu0
          %v2757 = vadd.f32 0.0, %v2756
          %v2758 = vpop.f32.mrf.mxu0
          %v2759 = vadd.f32 0.0, %v2758
          %2760 = vdwg.mxu0
          %2761 = vmatpush.bf16.msra.mxu0 %v2564
          %2762 = vmatpush.bf16.msra.mxu0 %v2558
          %2763 = vmatpush.bf16.msra.mxu0 %v2552
          %2764 = vmatpush.bf16.msra.mxu0 %v2546
          %2765 = vmatpush.bf16.msra.mxu0 %v2540
          %2766 = vmatpush.bf16.msra.mxu0 %v2534
          %2767 = vmatpush.bf16.msra.mxu0 %v2528
          %2768 = vmatpush.bf16.msra.mxu0 %v2522
          %2769 = vmatmul.bf16.gmra.mxu0 %v2086
          %v2770 = vpop.f32.mrf.mxu0
          %v2771 = vadd.f32 %v2757, %v2770
          %v2772 = vpop.f32.mrf.mxu0
          %v2773 = vadd.f32 %v2759, %v2772
          %2774 = vdwg.mxu0
          %2775 = vmatpush.bf16.msra.mxu0 %v2517
          %2776 = vmatpush.bf16.msra.mxu0 %v2511
          %2777 = vmatpush.bf16.msra.mxu0 %v2505
          %2778 = vmatpush.bf16.msra.mxu0 %v2499
          %2779 = vmatpush.bf16.msra.mxu0 %v2493
          %2780 = vmatpush.bf16.msra.mxu0 %v2487
          %2781 = vmatpush.bf16.msra.mxu0 %v2481
          %2782 = vmatpush.bf16.msra.mxu0 %v2475
          %2783 = vmatmul.bf16.gmra.mxu0 %v2085
          %v2784 = vpop.f32.mrf.mxu0
          %v2785 = vadd.f32 0.0, %v2784
          %v2786 = vpop.f32.mrf.mxu0
          %v2787 = vadd.f32 0.0, %v2786
          %2788 = vdwg.mxu0
          %2789 = vmatpush.bf16.msra.mxu0 %v2565
          %2790 = vmatpush.bf16.msra.mxu0 %v2559
          %2791 = vmatpush.bf16.msra.mxu0 %v2553
          %2792 = vmatpush.bf16.msra.mxu0 %v2547
          %2793 = vmatpush.bf16.msra.mxu0 %v2541
          %2794 = vmatpush.bf16.msra.mxu0 %v2535
          %2795 = vmatpush.bf16.msra.mxu0 %v2529
          %2796 = vmatpush.bf16.msra.mxu0 %v2523
          %2797 = vmatmul.bf16.gmra.mxu0 %v2086
          %v2798 = vpop.f32.mrf.mxu0
          %v2799 = vadd.f32 %v2785, %v2798
          %v2800 = vpop.f32.mrf.mxu0
          %v2801 = vadd.f32 %v2787, %v2800
          %2802 = vdwg.mxu0
          %2803 = vmatpush.bf16.msra.mxu0 %v2518
          %2804 = vmatpush.bf16.msra.mxu0 %v2512
          %2805 = vmatpush.bf16.msra.mxu0 %v2506
          %2806 = vmatpush.bf16.msra.mxu0 %v2500
          %2807 = vmatpush.bf16.msra.mxu0 %v2494
          %2808 = vmatpush.bf16.msra.mxu0 %v2488
          %2809 = vmatpush.bf16.msra.mxu0 %v2482
          %2810 = vmatpush.bf16.msra.mxu0 %v2476
          %2811 = vmatmul.bf16.gmra.mxu0 %v2085
          %v2812 = vpop.f32.mrf.mxu0
          %v2813 = vadd.f32 0.0, %v2812
          %v2814 = vpop.f32.mrf.mxu0
          %v2815 = vadd.f32 0.0, %v2814
          %2816 = vdwg.mxu0
          %2817 = vmatpush.bf16.msra.mxu0 %v2566
          %2818 = vmatpush.bf16.msra.mxu0 %v2560
          %2819 = vmatpush.bf16.msra.mxu0 %v2554
          %2820 = vmatpush.bf16.msra.mxu0 %v2548
          %2821 = vmatpush.bf16.msra.mxu0 %v2542
          %2822 = vmatpush.bf16.msra.mxu0 %v2536
          %2823 = vmatpush.bf16.msra.mxu0 %v2530
          %2824 = vmatpush.bf16.msra.mxu0 %v2524
          %2825 = vmatmul.bf16.gmra.mxu0 %v2086
          %v2826 = vpop.f32.mrf.mxu0
          %v2827 = vadd.f32 %v2813, %v2826
          %v2828 = vpop.f32.mrf.mxu0
          %v2829 = vadd.f32 %v2815, %v2828
          %2830 = vdwg.mxu0
          %v2833 = vrot.slane %v2689, 7
          %v2834 = vrot.slane %v2717, 7
          %v2839 = vrot.slane %v2687, 7
          %v2840 = vrot.slane %v2715, 7
          %v2841 = vsel %vm1109, %v2839, %v2833
          %v2842 = vsel %vm1109, %v2840, %v2834
          %v2847 = vsel %vm1109, %v2833, %v2839
          %v2848 = vsel %vm1109, %v2834, %v2840
          %v2849 = vsel %vm1122, 0.0, %v2847
          %v2850 = vsel %vm1122, 0.0, %v2848
          %v2851 = vsel %vm1123, 0.0, %v2841
          %v2852 = vsel %vm1123, 0.0, %v2842
          %v2857 = vrot.slane %v2799, 1
          %v2858 = vrot.slane %v2801, 1
          %v2859 = vsel %vm1132, %v2857, %v2858
          %v2860 = vrot.slane %v2827, 1
          %v2861 = vrot.slane %v2829, 1
          %v2862 = vsel %vm1132, %v2860, %v2861
          %v2869 = vsel %vm1132, %v2858, %v2857
          %v2870 = vsel %vm1132, %v2861, %v2860
          %v2871 = vsel %vm1149, 0.0, %v2859
          %v2872 = vsel %vm1149, 0.0, %v2862
          %v2873 = vsel %vm1150, 0.0, %v2869
          %v2874 = vsel %vm1150, 0.0, %v2870
          %v2875 = vadd.f32 %v2849, %v2743
          %v2876 = vadd.f32 %v2850, %v2771
          %v2877 = vadd.f32 %v2851, %v2745
          %v2878 = vadd.f32 %v2852, %v2773
          %v2879 = vadd.f32 %v2875, %v2871
          %v2880 = vadd.f32 %v2876, %v2872
          %v2881 = vadd.f32 %v2877, %v2873
          %v2882 = vadd.f32 %v2878, %v2874
          %v2883 = vld [vmem:[#allocation18] sm:$0x3]
          %v2885 = vperm.slane %v2883, 0
          %v2886 = vperm.slane %v2883, 1
          %v2889 = vadd.f32 %v2879, %v2885
          %v2890 = vadd.f32 %v2880, %v2886
          %v2891 = vadd.f32 %v2881, %v2885
          %v2892 = vadd.f32 %v2882, %v2886
          %v2895 = vrot.slane %v2891, 7
          %v2896 = vrot.slane %v2892, 7
          %v2901 = vrot.slane %v2889, 7
          %v2902 = vrot.slane %v2890, 7
          %v2903 = vsel %vm1109, %v2901, %v2895
          %v2904 = vsel %vm1109, %v2902, %v2896
          %v2909 = vsel %vm1109, %v2895, %v2901
          %v2910 = vsel %vm1109, %v2896, %v2902
          %v2911 = vsel %vm1122, -inf, %v2909
          %v2912 = vsel %vm1122, -inf, %v2910
          %v2913 = vsel %vm1123, -inf, %v2903
          %v2914 = vsel %vm1123, -inf, %v2904
          %v2915 = vrot.slane %v2889, 1
          %v2916 = vrot.slane %v2891, 1
          %v2917 = vsel %vm1132, %v2915, %v2916
          %v2918 = vrot.slane %v2890, 1
          %v2919 = vrot.slane %v2892, 1
          %v2920 = vsel %vm1132, %v2918, %v2919
          %v2927 = vsel %vm1132, %v2916, %v2915
          %v2928 = vsel %vm1132, %v2919, %v2918
          %v2929 = vsel %vm1149, -inf, %v2917
          %v2930 = vsel %vm1149, -inf, %v2920
          %v2931 = vsel %vm1150, -inf, %v2927
          %v2932 = vsel %vm1150, -inf, %v2928
          %v2933 = vmax.f32 %v2911, %v2889
          %v2934 = vmax.f32 %v2912, %v2890
          %v2935 = vmax.f32 %v2913, %v2891
          %v2936 = vmax.f32 %v2914, %v2892
          %v2937 = vmax.f32 %v2933, %v2929
          %v2938 = vmax.f32 %v2934, %v2930
          %v2939 = vmax.f32 %v2935, %v2931
          %v2940 = vmax.f32 %v2936, %v2932
          %v2941 = vmax.f32 %v2937, 0.0
          %v2942 = vmax.f32 %v2938, 0.0
          %v2943 = vmax.f32 %v2939, 0.0
          %v2944 = vmax.f32 %v2940, 0.0
          %v2945 = vld [vmem:[%s577] sm:$0xf]
          %v2946 = vld [vmem:[%s577 + $0x4] sm:$0xf]
          %v2947 = vpack.c.bf16 %v2943, %v2941
          %v2948 = vpack.c.bf16 %v2944, %v2942
          %v2949 = vld [vmem:[%s587] sm:$0xff]
          %v2950 = vld [vmem:[%s587 + $0x8] sm:$0xff]
          %v2951 = vld [vmem:[%s587 + $0x10] sm:$0xff]
          %v2952 = vld [vmem:[%s587 + $0x18] sm:$0xff]
          %v2955 = vunpack.c.l.b16 %v2945
          %v2956 = vunpack.c.l.b16 %v2946
          %v2957 = vpack.c.b16 %v2956, %v2955
          %vm2958 = vcmask 130048
          %v2960 = vsel %vm2958, %v2957, 0
          %2962 = vmatpush.bf16.msra.mxu0 0
          %2963 = vmatpush.bf16.msra.mxu0 0
          %2964 = vmatpush.bf16.msra.mxu0 0
          %2965 = vmatpush.bf16.msra.mxu0 0
          %2966 = vmatpush.bf16.msra.mxu0 0
          %2967 = vmatpush.bf16.msra.mxu0 0
          %2968 = vmatpush.bf16.msra.mxu0 0
          %2969 = vmatpush.bf16.msra.mxu0 %v2947
          %2970 = vmatmul.bf16.gmra.mxu0 %v2960
          %v2971 = vpop.f32.mrf.mxu0
          %v2972 = vadd.f32 %v2949, %v2971
          %v2973 = vpop.f32.mrf.mxu0
          %v2974 = vadd.f32 %v2951, %v2973
          %2975 = vdwg.mxu0
          %2976 = vmatpush.bf16.msra.mxu0 0
          %2977 = vmatpush.bf16.msra.mxu0 0
          %2978 = vmatpush.bf16.msra.mxu0 0
          %2979 = vmatpush.bf16.msra.mxu0 0
          %2980 = vmatpush.bf16.msra.mxu0 0
          %2981 = vmatpush.bf16.msra.mxu0 0
          %2982 = vmatpush.bf16.msra.mxu0 0
          %2983 = vmatpush.bf16.msra.mxu0 %v2948
          %2984 = vmatmul.bf16.gmra.mxu0 %v2960
          %v2985 = vpop.f32.mrf.mxu0
          %v2986 = vadd.f32 %v2950, %v2985
          %v2987 = vpop.f32.mrf.mxu0
          %v2988 = vadd.f32 %v2952, %v2987
          %2989 = vdwg.mxu0
          %2990 = vst [vmem:[#allocation2] sm:$0xff] %v2972
          %2991 = vst [vmem:[#allocation2 + $0x8] sm:$0xff] %v2986
          %2992 = vst [vmem:[#allocation2 + $0x10] sm:$0xff] %v2974
          %2993 = vst [vmem:[#allocation2 + $0x18] sm:$0xff] %v2988
        $region120: #{tpu_custom_call.1} parent=67 // pred_fallthru
          _
        %v2994 = vld [vmem:[#allocation2] sm:$0xff]
        %v2995 = vld [vmem:[#allocation2 + $0x8] sm:$0xff]
        %v2996 = vld [vmem:[#allocation2 + $0x10] sm:$0xff]
        %v2997 = vld [vmem:[#allocation2 + $0x18] sm:$0xff]
        %v2998 = vld [vmem:[#allocation19] sm:$0xff]
        %v2999 = vld [vmem:[#allocation19 + $0x8] sm:$0xff]
        %v3000 = vld [vmem:[#allocation19 + $0x10] sm:$0xff]
        %v3001 = vld [vmem:[#allocation19 + $0x18] sm:$0xff]
        %v3002 = vld [vmem:[#allocation19 + $0x20] sm:$0xff]
        %v3003 = vld [vmem:[#allocation19 + $0x28] sm:$0xff]
        %v3004 = vld [vmem:[#allocation19 + $0x30] sm:$0xff]
        %v3005 = vld [vmem:[#allocation19 + $0x38] sm:$0xff]
        %v3006 = vld [vmem:[#allocation19 + $0x40] sm:$0xff]
        %v3007 = vld [vmem:[#allocation19 + $0x48] sm:$0xff]
        %v3008 = vld [vmem:[#allocation19 + $0x50] sm:$0xff]
        %v3009 = vld [vmem:[#allocation19 + $0x58] sm:$0xff]
        %v3010 = vld [vmem:[#allocation19 + $0x60] sm:$0xff]
        %v3011 = vld [vmem:[#allocation19 + $0x68] sm:$0xff]
        %v3012 = vld [vmem:[#allocation19 + $0x70] sm:$0xff]
        %v3013 = vld [vmem:[#allocation19 + $0x78] sm:$0xff]
        %v3014 = vld [vmem:[#allocation19 + $0x80] sm:$0xff]
        %v3015 = vld [vmem:[#allocation19 + $0x88] sm:$0xff]
        %v3016 = vld [vmem:[#allocation19 + $0x90] sm:$0xff]
        %v3017 = vld [vmem:[#allocation19 + $0x98] sm:$0xff]
        %v3018 = vld [vmem:[#allocation19 + $0xa0] sm:$0xff]
        %v3019 = vld [vmem:[#allocation19 + $0xa8] sm:$0xff]
        %v3020 = vld [vmem:[#allocation19 + $0xb0] sm:$0xff]
        %v3021 = vld [vmem:[#allocation19 + $0xb8] sm:$0xff]
        %v3022 = vld [vmem:[#allocation19 + $0xc0] sm:$0xff]
        %v3023 = vld [vmem:[#allocation19 + $0xc8] sm:$0xff]
        %v3024 = vld [vmem:[#allocation19 + $0xd0] sm:$0xff]
        %v3025 = vld [vmem:[#allocation19 + $0xd8] sm:$0xff]
        %v3026 = vld [vmem:[#allocation19 + $0xe0] sm:$0xff]
        %v3027 = vld [vmem:[#allocation19 + $0xe8] sm:$0xff]
        %v3028 = vld [vmem:[#allocation19 + $0xf0] sm:$0xff]
        %v3029 = vld [vmem:[#allocation19 + $0xf8] sm:$0xff]
        %v3030 = vld [vmem:[#allocation19 + $0x100] sm:$0xff]
        %v3031 = vld [vmem:[#allocation19 + $0x108] sm:$0xff]
        %v3032 = vld [vmem:[#allocation19 + $0x110] sm:$0xff]
        %v3033 = vld [vmem:[#allocation19 + $0x118] sm:$0xff]
        %v3034 = vld [vmem:[#allocation19 + $0x120] sm:$0xff]
        %v3035 = vld [vmem:[#allocation19 + $0x128] sm:$0xff]
        %v3036 = vld [vmem:[#allocation19 + $0x130] sm:$0xff]
        %v3037 = vld [vmem:[#allocation19 + $0x138] sm:$0xff]
        %v3038 = vld [vmem:[#allocation19 + $0x140] sm:$0xff]
        %v3039 = vld [vmem:[#allocation19 + $0x148] sm:$0xff]
        %v3040 = vld [vmem:[#allocation19 + $0x150] sm:$0xff]
        %v3041 = vld [vmem:[#allocation19 + $0x158] sm:$0xff]
        %v3042 = vld [vmem:[#allocation19 + $0x160] sm:$0xff]
        %v3043 = vld [vmem:[#allocation19 + $0x168] sm:$0xff]
        %v3044 = vld [vmem:[#allocation19 + $0x170] sm:$0xff]
        %v3045 = vld [vmem:[#allocation19 + $0x178] sm:$0xff]
        %v3046 = vld [vmem:[#allocation19 + $0x180] sm:$0xff]
        %v3047 = vld [vmem:[#allocation19 + $0x188] sm:$0xff]
        %v3048 = vld [vmem:[#allocation19 + $0x190] sm:$0xff]
        %v3049 = vld [vmem:[#allocation19 + $0x198] sm:$0xff]
        %v3050 = vld [vmem:[#allocation19 + $0x1a0] sm:$0xff]
        %v3051 = vld [vmem:[#allocation19 + $0x1a8] sm:$0xff]
        %v3052 = vld [vmem:[#allocation19 + $0x1b0] sm:$0xff]
        %v3053 = vld [vmem:[#allocation19 + $0x1b8] sm:$0xff]
        %v3054 = vld [vmem:[#allocation19 + $0x1c0] sm:$0xff]
        %v3055 = vld [vmem:[#allocation19 + $0x1c8] sm:$0xff]
        %v3056 = vld [vmem:[#allocation19 + $0x1d0] sm:$0xff]
        %v3057 = vld [vmem:[#allocation19 + $0x1d8] sm:$0xff]
        %v3058 = vld [vmem:[#allocation19 + $0x1e0] sm:$0xff]
        %v3059 = vld [vmem:[#allocation19 + $0x1e8] sm:$0xff]
        %v3060 = vld [vmem:[#allocation19 + $0x1f0] sm:$0xff]
        %v3061 = vld [vmem:[#allocation19 + $0x1f8] sm:$0xff]
        %v3062 = vld [vmem:[#allocation19 + $0x200] sm:$0xff]
        %v3063 = vld [vmem:[#allocation19 + $0x208] sm:$0xff]
        %v3064 = vld [vmem:[#allocation19 + $0x210] sm:$0xff]
        %v3065 = vld [vmem:[#allocation19 + $0x218] sm:$0xff]
        %v3066 = vld [vmem:[#allocation19 + $0x220] sm:$0xff]
        %v3067 = vld [vmem:[#allocation19 + $0x228] sm:$0xff]
        %v3068 = vld [vmem:[#allocation19 + $0x230] sm:$0xff]
        %v3069 = vld [vmem:[#allocation19 + $0x238] sm:$0xff]
        %v3070 = vld [vmem:[#allocation19 + $0x240] sm:$0xff]
        %v3071 = vld [vmem:[#allocation19 + $0x248] sm:$0xff]
        %v3072 = vld [vmem:[#allocation19 + $0x250] sm:$0xff]
        %v3073 = vld [vmem:[#allocation19 + $0x258] sm:$0xff]
        %v3074 = vld [vmem:[#allocation19 + $0x260] sm:$0xff]
        %v3075 = vld [vmem:[#allocation19 + $0x268] sm:$0xff]
        %v3076 = vld [vmem:[#allocation19 + $0x270] sm:$0xff]
        %v3077 = vld [vmem:[#allocation19 + $0x278] sm:$0xff]
        %v3078 = vld [vmem:[#allocation19 + $0x280] sm:$0xff]
        %v3079 = vld [vmem:[#allocation19 + $0x288] sm:$0xff]
        %v3080 = vld [vmem:[#allocation19 + $0x290] sm:$0xff]
        %v3081 = vld [vmem:[#allocation19 + $0x298] sm:$0xff]
        %v3082 = vld [vmem:[#allocation19 + $0x2a0] sm:$0xff]
        %v3083 = vld [vmem:[#allocation19 + $0x2a8] sm:$0xff]
        %v3084 = vld [vmem:[#allocation19 + $0x2b0] sm:$0xff]
        %v3085 = vld [vmem:[#allocation19 + $0x2b8] sm:$0xff]
        %v3086 = vld [vmem:[#allocation19 + $0x2c0] sm:$0xff]
        %v3087 = vld [vmem:[#allocation19 + $0x2c8] sm:$0xff]
        %v3088 = vld [vmem:[#allocation19 + $0x2d0] sm:$0xff]
        %v3089 = vld [vmem:[#allocation19 + $0x2d8] sm:$0xff]
        %v3090 = vld [vmem:[#allocation19 + $0x2e0] sm:$0xff]
        %v3091 = vld [vmem:[#allocation19 + $0x2e8] sm:$0xff]
        %v3092 = vld [vmem:[#allocation19 + $0x2f0] sm:$0xff]
        %v3093 = vld [vmem:[#allocation19 + $0x2f8] sm:$0xff]
        %v3094 = vld [vmem:[#allocation19 + $0x300] sm:$0xff]
        %v3095 = vld [vmem:[#allocation19 + $0x308] sm:$0xff]
        %v3096 = vld [vmem:[#allocation19 + $0x310] sm:$0xff]
        %v3097 = vld [vmem:[#allocation19 + $0x318] sm:$0xff]
        %v3098 = vld [vmem:[#allocation19 + $0x320] sm:$0xff]
        %v3099 = vld [vmem:[#allocation19 + $0x328] sm:$0xff]
        %v3100 = vld [vmem:[#allocation19 + $0x330] sm:$0xff]
        %v3101 = vld [vmem:[#allocation19 + $0x338] sm:$0xff]
        %v3102 = vld [vmem:[#allocation19 + $0x340] sm:$0xff]
        %v3103 = vld [vmem:[#allocation19 + $0x348] sm:$0xff]
        %v3104 = vld [vmem:[#allocation19 + $0x350] sm:$0xff]
        %v3105 = vld [vmem:[#allocation19 + $0x358] sm:$0xff]
        %v3106 = vld [vmem:[#allocation19 + $0x360] sm:$0xff]
        %v3107 = vld [vmem:[#allocation19 + $0x368] sm:$0xff]
        %v3108 = vld [vmem:[#allocation19 + $0x370] sm:$0xff]
        %v3109 = vld [vmem:[#allocation19 + $0x378] sm:$0xff]
        %v3110 = vld [vmem:[#allocation19 + $0x380] sm:$0xff]
        %v3111 = vld [vmem:[#allocation19 + $0x388] sm:$0xff]
        %v3112 = vld [vmem:[#allocation19 + $0x390] sm:$0xff]
        %v3113 = vld [vmem:[#allocation19 + $0x398] sm:$0xff]
        %v3114 = vld [vmem:[#allocation19 + $0x3a0] sm:$0xff]
        %v3115 = vld [vmem:[#allocation19 + $0x3a8] sm:$0xff]
        %v3116 = vld [vmem:[#allocation19 + $0x3b0] sm:$0xff]
        %v3117 = vld [vmem:[#allocation19 + $0x3b8] sm:$0xff]
        %v3118 = vld [vmem:[#allocation19 + $0x3c0] sm:$0xff]
        %v3119 = vld [vmem:[#allocation19 + $0x3c8] sm:$0xff]
        %v3120 = vld [vmem:[#allocation19 + $0x3d0] sm:$0xff]
        %v3121 = vld [vmem:[#allocation19 + $0x3d8] sm:$0xff]
        %v3122 = vld [vmem:[#allocation19 + $0x3e0] sm:$0xff]
        %v3123 = vld [vmem:[#allocation19 + $0x3e8] sm:$0xff]
        %v3124 = vld [vmem:[#allocation19 + $0x3f0] sm:$0xff]
        %v3125 = vld [vmem:[#allocation19 + $0x3f8] sm:$0xff]
        %v3126 = vld [vmem:[#allocation19 + $0x400] sm:$0xff]
        %v3127 = vld [vmem:[#allocation19 + $0x408] sm:$0xff]
        %v3128 = vld [vmem:[#allocation19 + $0x410] sm:$0xff]
        %v3129 = vld [vmem:[#allocation19 + $0x418] sm:$0xff]
        %v3130 = vld [vmem:[#allocation19 + $0x420] sm:$0xff]
        %v3131 = vld [vmem:[#allocation19 + $0x428] sm:$0xff]
        %v3132 = vld [vmem:[#allocation19 + $0x430] sm:$0xff]
        %v3133 = vld [vmem:[#allocation19 + $0x438] sm:$0xff]
        %v3134 = vld [vmem:[#allocation19 + $0x440] sm:$0xff]
        %v3135 = vld [vmem:[#allocation19 + $0x448] sm:$0xff]
        %v3136 = vld [vmem:[#allocation19 + $0x450] sm:$0xff]
        %v3137 = vld [vmem:[#allocation19 + $0x458] sm:$0xff]
        %v3138 = vld [vmem:[#allocation19 + $0x460] sm:$0xff]
        %v3139 = vld [vmem:[#allocation19 + $0x468] sm:$0xff]
        %v3140 = vld [vmem:[#allocation19 + $0x470] sm:$0xff]
        %v3141 = vld [vmem:[#allocation19 + $0x478] sm:$0xff]
        %v3142 = vld [vmem:[#allocation19 + $0x480] sm:$0xff]
        %v3143 = vld [vmem:[#allocation19 + $0x488] sm:$0xff]
        %v3144 = vld [vmem:[#allocation19 + $0x490] sm:$0xff]
        %v3145 = vld [vmem:[#allocation19 + $0x498] sm:$0xff]
        %v3146 = vld [vmem:[#allocation19 + $0x4a0] sm:$0xff]
        %v3147 = vld [vmem:[#allocation19 + $0x4a8] sm:$0xff]
        %v3148 = vld [vmem:[#allocation19 + $0x4b0] sm:$0xff]
        %v3149 = vld [vmem:[#allocation19 + $0x4b8] sm:$0xff]
        %v3150 = vld [vmem:[#allocation19 + $0x4c0] sm:$0xff]
        %v3151 = vld [vmem:[#allocation19 + $0x4c8] sm:$0xff]
        %v3152 = vld [vmem:[#allocation19 + $0x4d0] sm:$0xff]
        %v3153 = vld [vmem:[#allocation19 + $0x4d8] sm:$0xff]
        %v3154 = vld [vmem:[#allocation19 + $0x4e0] sm:$0xff]
        %v3155 = vld [vmem:[#allocation19 + $0x4e8] sm:$0xff]
        %v3156 = vld [vmem:[#allocation19 + $0x4f0] sm:$0xff]
        %v3157 = vld [vmem:[#allocation19 + $0x4f8] sm:$0xff]
        %v3158 = vld [vmem:[#allocation19 + $0x500] sm:$0xff]
        %v3159 = vld [vmem:[#allocation19 + $0x508] sm:$0xff]
        %v3160 = vld [vmem:[#allocation19 + $0x510] sm:$0xff]
        %v3161 = vld [vmem:[#allocation19 + $0x518] sm:$0xff]
        %v3162 = vld [vmem:[#allocation19 + $0x520] sm:$0xff]
        %v3163 = vld [vmem:[#allocation19 + $0x528] sm:$0xff]
        %v3164 = vld [vmem:[#allocation19 + $0x530] sm:$0xff]
        %v3165 = vld [vmem:[#allocation19 + $0x538] sm:$0xff]
        %v3166 = vld [vmem:[#allocation19 + $0x540] sm:$0xff]
        %v3167 = vld [vmem:[#allocation19 + $0x548] sm:$0xff]
        %v3168 = vld [vmem:[#allocation19 + $0x550] sm:$0xff]
        %v3169 = vld [vmem:[#allocation19 + $0x558] sm:$0xff]
        %v3170 = vld [vmem:[#allocation19 + $0x560] sm:$0xff]
        %v3171 = vld [vmem:[#allocation19 + $0x568] sm:$0xff]
        %v3172 = vld [vmem:[#allocation19 + $0x570] sm:$0xff]
        %v3173 = vld [vmem:[#allocation19 + $0x578] sm:$0xff]
        %v3174 = vld [vmem:[#allocation19 + $0x580] sm:$0xff]
        %v3175 = vld [vmem:[#allocation19 + $0x588] sm:$0xff]
        %v3176 = vld [vmem:[#allocation19 + $0x590] sm:$0xff]
        %v3177 = vld [vmem:[#allocation19 + $0x598] sm:$0xff]
        %v3178 = vld [vmem:[#allocation19 + $0x5a0] sm:$0xff]
        %v3179 = vld [vmem:[#allocation19 + $0x5a8] sm:$0xff]
        %v3180 = vld [vmem:[#allocation19 + $0x5b0] sm:$0xff]
        %v3181 = vld [vmem:[#allocation19 + $0x5b8] sm:$0xff]
        %v3182 = vld [vmem:[#allocation19 + $0x5c0] sm:$0xff]
        %v3183 = vld [vmem:[#allocation19 + $0x5c8] sm:$0xff]
        %v3184 = vld [vmem:[#allocation19 + $0x5d0] sm:$0xff]
        %v3185 = vld [vmem:[#allocation19 + $0x5d8] sm:$0xff]
        %v3186 = vld [vmem:[#allocation19 + $0x5e0] sm:$0xff]
        %v3187 = vld [vmem:[#allocation19 + $0x5e8] sm:$0xff]
        %v3188 = vld [vmem:[#allocation19 + $0x5f0] sm:$0xff]
        %v3189 = vld [vmem:[#allocation19 + $0x5f8] sm:$0xff]
        %v3190 = vld [vmem:[#allocation19 + $0x600] sm:$0xff]
        %v3191 = vld [vmem:[#allocation19 + $0x608] sm:$0xff]
        %v3192 = vld [vmem:[#allocation19 + $0x610] sm:$0xff]
        %v3193 = vld [vmem:[#allocation19 + $0x618] sm:$0xff]
        %v3194 = vld [vmem:[#allocation19 + $0x620] sm:$0xff]
        %v3195 = vld [vmem:[#allocation19 + $0x628] sm:$0xff]
        %v3196 = vld [vmem:[#allocation19 + $0x630] sm:$0xff]
        %v3197 = vld [vmem:[#allocation19 + $0x638] sm:$0xff]
        %v3198 = vld [vmem:[#allocation19 + $0x640] sm:$0xff]
        %v3199 = vld [vmem:[#allocation19 + $0x648] sm:$0xff]
        %v3200 = vld [vmem:[#allocation19 + $0x650] sm:$0xff]
        %v3201 = vld [vmem:[#allocation19 + $0x658] sm:$0xff]
        %v3202 = vld [vmem:[#allocation19 + $0x660] sm:$0xff]
        %v3203 = vld [vmem:[#allocation19 + $0x668] sm:$0xff]
        %v3204 = vld [vmem:[#allocation19 + $0x670] sm:$0xff]
        %v3205 = vld [vmem:[#allocation19 + $0x678] sm:$0xff]
        %v3206 = vld [vmem:[#allocation19 + $0x680] sm:$0xff]
        %v3207 = vld [vmem:[#allocation19 + $0x688] sm:$0xff]
        %v3208 = vld [vmem:[#allocation19 + $0x690] sm:$0xff]
        %v3209 = vld [vmem:[#allocation19 + $0x698] sm:$0xff]
        %v3210 = vld [vmem:[#allocation19 + $0x6a0] sm:$0xff]
        %v3211 = vld [vmem:[#allocation19 + $0x6a8] sm:$0xff]
        %v3212 = vld [vmem:[#allocation19 + $0x6b0] sm:$0xff]
        %v3213 = vld [vmem:[#allocation19 + $0x6b8] sm:$0xff]
        %v3214 = vld [vmem:[#allocation19 + $0x6c0] sm:$0xff]
        %v3215 = vld [vmem:[#allocation19 + $0x6c8] sm:$0xff]
        %v3216 = vld [vmem:[#allocation19 + $0x6d0] sm:$0xff]
        %v3217 = vld [vmem:[#allocation19 + $0x6d8] sm:$0xff]
        %v3218 = vld [vmem:[#allocation19 + $0x6e0] sm:$0xff]
        %v3219 = vld [vmem:[#allocation19 + $0x6e8] sm:$0xff]
        %v3220 = vld [vmem:[#allocation19 + $0x6f0] sm:$0xff]
        %v3221 = vld [vmem:[#allocation19 + $0x6f8] sm:$0xff]
        %v3222 = vld [vmem:[#allocation19 + $0x700] sm:$0xff]
        %v3223 = vld [vmem:[#allocation19 + $0x708] sm:$0xff]
        %v3224 = vld [vmem:[#allocation19 + $0x710] sm:$0xff]
        %v3225 = vld [vmem:[#allocation19 + $0x718] sm:$0xff]
        %v3226 = vld [vmem:[#allocation19 + $0x720] sm:$0xff]
        %v3227 = vld [vmem:[#allocation19 + $0x728] sm:$0xff]
        %v3228 = vld [vmem:[#allocation19 + $0x730] sm:$0xff]
        %v3229 = vld [vmem:[#allocation19 + $0x738] sm:$0xff]
        %v3230 = vld [vmem:[#allocation19 + $0x740] sm:$0xff]
        %v3231 = vld [vmem:[#allocation19 + $0x748] sm:$0xff]
        %v3232 = vld [vmem:[#allocation19 + $0x750] sm:$0xff]
        %v3233 = vld [vmem:[#allocation19 + $0x758] sm:$0xff]
        %v3234 = vld [vmem:[#allocation19 + $0x760] sm:$0xff]
        %v3235 = vld [vmem:[#allocation19 + $0x768] sm:$0xff]
        %v3236 = vld [vmem:[#allocation19 + $0x770] sm:$0xff]
        %v3237 = vld [vmem:[#allocation19 + $0x778] sm:$0xff]
        %v3238 = vld [vmem:[#allocation19 + $0x780] sm:$0xff]
        %v3239 = vld [vmem:[#allocation19 + $0x788] sm:$0xff]
        %v3240 = vld [vmem:[#allocation19 + $0x790] sm:$0xff]
        %v3241 = vld [vmem:[#allocation19 + $0x798] sm:$0xff]
        %v3242 = vld [vmem:[#allocation19 + $0x7a0] sm:$0xff]
        %v3243 = vld [vmem:[#allocation19 + $0x7a8] sm:$0xff]
        %v3244 = vld [vmem:[#allocation19 + $0x7b0] sm:$0xff]
        %v3245 = vld [vmem:[#allocation19 + $0x7b8] sm:$0xff]
        %v3246 = vld [vmem:[#allocation19 + $0x7c0] sm:$0xff]
        %v3247 = vld [vmem:[#allocation19 + $0x7c8] sm:$0xff]
        %v3248 = vld [vmem:[#allocation19 + $0x7d0] sm:$0xff]
        %v3249 = vld [vmem:[#allocation19 + $0x7d8] sm:$0xff]
        %v3250 = vld [vmem:[#allocation19 + $0x7e0] sm:$0xff]
        %v3251 = vld [vmem:[#allocation19 + $0x7e8] sm:$0xff]
        %v3252 = vld [vmem:[#allocation19 + $0x7f0] sm:$0xff]
        %v3253 = vld [vmem:[#allocation19 + $0x7f8] sm:$0xff]
        %v3254 = vld [vmem:[#allocation19 + $0x800] sm:$0xff]
        %v3255 = vld [vmem:[#allocation19 + $0x808] sm:$0xff]
        %v3256 = vld [vmem:[#allocation19 + $0x810] sm:$0xff]
        %v3257 = vld [vmem:[#allocation19 + $0x818] sm:$0xff]
        %v3258 = vld [vmem:[#allocation19 + $0x820] sm:$0xff]
        %v3259 = vld [vmem:[#allocation19 + $0x828] sm:$0xff]
        %v3260 = vld [vmem:[#allocation19 + $0x830] sm:$0xff]
        %v3261 = vld [vmem:[#allocation19 + $0x838] sm:$0xff]
        %v3262 = vld [vmem:[#allocation19 + $0x840] sm:$0xff]
        %v3263 = vld [vmem:[#allocation19 + $0x848] sm:$0xff]
        %v3264 = vld [vmem:[#allocation19 + $0x850] sm:$0xff]
        %v3265 = vld [vmem:[#allocation19 + $0x858] sm:$0xff]
        %v3266 = vld [vmem:[#allocation19 + $0x860] sm:$0xff]
        %v3267 = vld [vmem:[#allocation19 + $0x868] sm:$0xff]
        %v3268 = vld [vmem:[#allocation19 + $0x870] sm:$0xff]
        %v3269 = vld [vmem:[#allocation19 + $0x878] sm:$0xff]
        %v3270 = vld [vmem:[#allocation19 + $0x880] sm:$0xff]
        %v3271 = vld [vmem:[#allocation19 + $0x888] sm:$0xff]
        %v3272 = vld [vmem:[#allocation19 + $0x890] sm:$0xff]
        %v3273 = vld [vmem:[#allocation19 + $0x898] sm:$0xff]
        %v3274 = vld [vmem:[#allocation19 + $0x8a0] sm:$0xff]
        %v3275 = vld [vmem:[#allocation19 + $0x8a8] sm:$0xff]
        %v3276 = vld [vmem:[#allocation19 + $0x8b0] sm:$0xff]
        %v3277 = vld [vmem:[#allocation19 + $0x8b8] sm:$0xff]
        %v3278 = vld [vmem:[#allocation19 + $0x8c0] sm:$0xff]
        %v3279 = vld [vmem:[#allocation19 + $0x8c8] sm:$0xff]
        %v3280 = vld [vmem:[#allocation19 + $0x8d0] sm:$0xff]
        %v3281 = vld [vmem:[#allocation19 + $0x8d8] sm:$0xff]
        %v3282 = vld [vmem:[#allocation19 + $0x8e0] sm:$0xff]
        %v3283 = vld [vmem:[#allocation19 + $0x8e8] sm:$0xff]
        %v3284 = vld [vmem:[#allocation19 + $0x8f0] sm:$0xff]
        %v3285 = vld [vmem:[#allocation19 + $0x8f8] sm:$0xff]
        %v3286 = vld [vmem:[#allocation19 + $0x900] sm:$0xff]
        %v3287 = vld [vmem:[#allocation19 + $0x908] sm:$0xff]
        %v3288 = vld [vmem:[#allocation19 + $0x910] sm:$0xff]
        %v3289 = vld [vmem:[#allocation19 + $0x918] sm:$0xff]
        %v3290 = vld [vmem:[#allocation19 + $0x920] sm:$0xff]
        %v3291 = vld [vmem:[#allocation19 + $0x928] sm:$0xff]
        %v3292 = vld [vmem:[#allocation19 + $0x930] sm:$0xff]
        %v3293 = vld [vmem:[#allocation19 + $0x938] sm:$0xff]
        %v3294 = vld [vmem:[#allocation19 + $0x940] sm:$0xff]
        %v3295 = vld [vmem:[#allocation19 + $0x948] sm:$0xff]
        %v3296 = vld [vmem:[#allocation19 + $0x950] sm:$0xff]
        %v3297 = vld [vmem:[#allocation19 + $0x958] sm:$0xff]
        %v3298 = vld [vmem:[#allocation19 + $0x960] sm:$0xff]
        %v3299 = vld [vmem:[#allocation19 + $0x968] sm:$0xff]
        %v3300 = vld [vmem:[#allocation19 + $0x970] sm:$0xff]
        %v3301 = vld [vmem:[#allocation19 + $0x978] sm:$0xff]
        %v3302 = vld [vmem:[#allocation19 + $0x980] sm:$0xff]
        %v3303 = vld [vmem:[#allocation19 + $0x988] sm:$0xff]
        %v3304 = vld [vmem:[#allocation19 + $0x990] sm:$0xff]
        %v3305 = vld [vmem:[#allocation19 + $0x998] sm:$0xff]
        %v3306 = vld [vmem:[#allocation19 + $0x9a0] sm:$0xff]
        %v3307 = vld [vmem:[#allocation19 + $0x9a8] sm:$0xff]
        %v3308 = vld [vmem:[#allocation19 + $0x9b0] sm:$0xff]
        %v3309 = vld [vmem:[#allocation19 + $0x9b8] sm:$0xff]
        %v3310 = vld [vmem:[#allocation19 + $0x9c0] sm:$0xff]
        %v3311 = vld [vmem:[#allocation19 + $0x9c8] sm:$0xff]
        %v3312 = vld [vmem:[#allocation19 + $0x9d0] sm:$0xff]
        %v3313 = vld [vmem:[#allocation19 + $0x9d8] sm:$0xff]
        %v3314 = vld [vmem:[#allocation19 + $0x9e0] sm:$0xff]
        %v3315 = vld [vmem:[#allocation19 + $0x9e8] sm:$0xff]
        %v3316 = vld [vmem:[#allocation19 + $0x9f0] sm:$0xff]
        %v3317 = vld [vmem:[#allocation19 + $0x9f8] sm:$0xff]
        %v3318 = vld [vmem:[#allocation19 + $0xa00] sm:$0xff]
        %v3319 = vld [vmem:[#allocation19 + $0xa08] sm:$0xff]
        %v3320 = vld [vmem:[#allocation19 + $0xa10] sm:$0xff]
        %v3321 = vld [vmem:[#allocation19 + $0xa18] sm:$0xff]
        %v3322 = vld [vmem:[#allocation19 + $0xa20] sm:$0xff]
        %v3323 = vld [vmem:[#allocation19 + $0xa28] sm:$0xff]
        %v3324 = vld [vmem:[#allocation19 + $0xa30] sm:$0xff]
        %v3325 = vld [vmem:[#allocation19 + $0xa38] sm:$0xff]
        %v3326 = vld [vmem:[#allocation19 + $0xa40] sm:$0xff]
        %v3327 = vld [vmem:[#allocation19 + $0xa48] sm:$0xff]
        %v3328 = vld [vmem:[#allocation19 + $0xa50] sm:$0xff]
        %v3329 = vld [vmem:[#allocation19 + $0xa58] sm:$0xff]
        %v3330 = vld [vmem:[#allocation19 + $0xa60] sm:$0xff]
        %v3331 = vld [vmem:[#allocation19 + $0xa68] sm:$0xff]
        %v3332 = vld [vmem:[#allocation19 + $0xa70] sm:$0xff]
        %v3333 = vld [vmem:[#allocation19 + $0xa78] sm:$0xff]
        %v3334 = vld [vmem:[#allocation19 + $0xa80] sm:$0xff]
        %v3335 = vld [vmem:[#allocation19 + $0xa88] sm:$0xff]
        %v3336 = vld [vmem:[#allocation19 + $0xa90] sm:$0xff]
        %v3337 = vld [vmem:[#allocation19 + $0xa98] sm:$0xff]
        %v3338 = vld [vmem:[#allocation19 + $0xaa0] sm:$0xff]
        %v3339 = vld [vmem:[#allocation19 + $0xaa8] sm:$0xff]
        %v3340 = vld [vmem:[#allocation19 + $0xab0] sm:$0xff]
        %v3341 = vld [vmem:[#allocation19 + $0xab8] sm:$0xff]
        %v3342 = vld [vmem:[#allocation19 + $0xac0] sm:$0xff]
        %v3343 = vld [vmem:[#allocation19 + $0xac8] sm:$0xff]
        %v3344 = vld [vmem:[#allocation19 + $0xad0] sm:$0xff]
        %v3345 = vld [vmem:[#allocation19 + $0xad8] sm:$0xff]
        %v3346 = vld [vmem:[#allocation19 + $0xae0] sm:$0xff]
        %v3347 = vld [vmem:[#allocation19 + $0xae8] sm:$0xff]
        %v3348 = vld [vmem:[#allocation19 + $0xaf0] sm:$0xff]
        %v3349 = vld [vmem:[#allocation19 + $0xaf8] sm:$0xff]
        %v3350 = vld [vmem:[#allocation19 + $0xb00] sm:$0xff]
        %v3351 = vld [vmem:[#allocation19 + $0xb08] sm:$0xff]
        %v3352 = vld [vmem:[#allocation19 + $0xb10] sm:$0xff]
        %v3353 = vld [vmem:[#allocation19 + $0xb18] sm:$0xff]
        %v3354 = vld [vmem:[#allocation19 + $0xb20] sm:$0xff]
        %v3355 = vld [vmem:[#allocation19 + $0xb28] sm:$0xff]
        %v3356 = vld [vmem:[#allocation19 + $0xb30] sm:$0xff]
        %v3357 = vld [vmem:[#allocation19 + $0xb38] sm:$0xff]
        %v3358 = vld [vmem:[#allocation19 + $0xb40] sm:$0xff]
        %v3359 = vld [vmem:[#allocation19 + $0xb48] sm:$0xff]
        %v3360 = vld [vmem:[#allocation19 + $0xb50] sm:$0xff]
        %v3361 = vld [vmem:[#allocation19 + $0xb58] sm:$0xff]
        %v3362 = vld [vmem:[#allocation19 + $0xb60] sm:$0xff]
        %v3363 = vld [vmem:[#allocation19 + $0xb68] sm:$0xff]
        %v3364 = vld [vmem:[#allocation19 + $0xb70] sm:$0xff]
        %v3365 = vld [vmem:[#allocation19 + $0xb78] sm:$0xff]
        %v3366 = vld [vmem:[#allocation19 + $0xb80] sm:$0xff]
        %v3367 = vld [vmem:[#allocation19 + $0xb88] sm:$0xff]
        %v3368 = vld [vmem:[#allocation19 + $0xb90] sm:$0xff]
        %v3369 = vld [vmem:[#allocation19 + $0xb98] sm:$0xff]
        %v3370 = vld [vmem:[#allocation19 + $0xba0] sm:$0xff]
        %v3371 = vld [vmem:[#allocation19 + $0xba8] sm:$0xff]
        %v3372 = vld [vmem:[#allocation19 + $0xbb0] sm:$0xff]
        %v3373 = vld [vmem:[#allocation19 + $0xbb8] sm:$0xff]
        %v3374 = vld [vmem:[#allocation19 + $0xbc0] sm:$0xff]
        %v3375 = vld [vmem:[#allocation19 + $0xbc8] sm:$0xff]
        %v3376 = vld [vmem:[#allocation19 + $0xbd0] sm:$0xff]
        %v3377 = vld [vmem:[#allocation19 + $0xbd8] sm:$0xff]
        %v3378 = vld [vmem:[#allocation19 + $0xbe0] sm:$0xff]
        %v3379 = vld [vmem:[#allocation19 + $0xbe8] sm:$0xff]
        %v3380 = vld [vmem:[#allocation19 + $0xbf0] sm:$0xff]
        %v3381 = vld [vmem:[#allocation19 + $0xbf8] sm:$0xff]
        %v3382 = vld [vmem:[#allocation19 + $0xc00] sm:$0xff]
        %v3383 = vld [vmem:[#allocation19 + $0xc08] sm:$0xff]
        %v3384 = vld [vmem:[#allocation19 + $0xc10] sm:$0xff]
        %v3385 = vld [vmem:[#allocation19 + $0xc18] sm:$0xff]
        %v3386 = vld [vmem:[#allocation19 + $0xc20] sm:$0xff]
        %v3387 = vld [vmem:[#allocation19 + $0xc28] sm:$0xff]
        %v3388 = vld [vmem:[#allocation19 + $0xc30] sm:$0xff]
        %v3389 = vld [vmem:[#allocation19 + $0xc38] sm:$0xff]
        %v3390 = vld [vmem:[#allocation19 + $0xc40] sm:$0xff]
        %v3391 = vld [vmem:[#allocation19 + $0xc48] sm:$0xff]
        %v3392 = vld [vmem:[#allocation19 + $0xc50] sm:$0xff]
        %v3393 = vld [vmem:[#allocation19 + $0xc58] sm:$0xff]
        %v3394 = vld [vmem:[#allocation19 + $0xc60] sm:$0xff]
        %v3395 = vld [vmem:[#allocation19 + $0xc68] sm:$0xff]
        %v3396 = vld [vmem:[#allocation19 + $0xc70] sm:$0xff]
        %v3397 = vld [vmem:[#allocation19 + $0xc78] sm:$0xff]
        %v3398 = vld [vmem:[#allocation19 + $0xc80] sm:$0xff]
        %v3399 = vld [vmem:[#allocation19 + $0xc88] sm:$0xff]
        %v3400 = vld [vmem:[#allocation19 + $0xc90] sm:$0xff]
        %v3401 = vld [vmem:[#allocation19 + $0xc98] sm:$0xff]
        %v3402 = vld [vmem:[#allocation19 + $0xca0] sm:$0xff]
        %v3403 = vld [vmem:[#allocation19 + $0xca8] sm:$0xff]
        %v3404 = vld [vmem:[#allocation19 + $0xcb0] sm:$0xff]
        %v3405 = vld [vmem:[#allocation19 + $0xcb8] sm:$0xff]
        %v3406 = vld [vmem:[#allocation19 + $0xcc0] sm:$0xff]
        %v3407 = vld [vmem:[#allocation19 + $0xcc8] sm:$0xff]
        %v3408 = vld [vmem:[#allocation19 + $0xcd0] sm:$0xff]
        %v3409 = vld [vmem:[#allocation19 + $0xcd8] sm:$0xff]
        %v3410 = vld [vmem:[#allocation19 + $0xce0] sm:$0xff]
        %v3411 = vld [vmem:[#allocation19 + $0xce8] sm:$0xff]
        %v3412 = vld [vmem:[#allocation19 + $0xcf0] sm:$0xff]
        %v3413 = vld [vmem:[#allocation19 + $0xcf8] sm:$0xff]
        %v3414 = vld [vmem:[#allocation19 + $0xd00] sm:$0xff]
        %v3415 = vld [vmem:[#allocation19 + $0xd08] sm:$0xff]
        %v3416 = vld [vmem:[#allocation19 + $0xd10] sm:$0xff]
        %v3417 = vld [vmem:[#allocation19 + $0xd18] sm:$0xff]
        %v3418 = vld [vmem:[#allocation19 + $0xd20] sm:$0xff]
        %v3419 = vld [vmem:[#allocation19 + $0xd28] sm:$0xff]
        %v3420 = vld [vmem:[#allocation19 + $0xd30] sm:$0xff]
        %v3421 = vld [vmem:[#allocation19 + $0xd38] sm:$0xff]
        %v3422 = vld [vmem:[#allocation19 + $0xd40] sm:$0xff]
        %v3423 = vld [vmem:[#allocation19 + $0xd48] sm:$0xff]
        %v3424 = vld [vmem:[#allocation19 + $0xd50] sm:$0xff]
        %v3425 = vld [vmem:[#allocation19 + $0xd58] sm:$0xff]
        %v3426 = vld [vmem:[#allocation19 + $0xd60] sm:$0xff]
        %v3427 = vld [vmem:[#allocation19 + $0xd68] sm:$0xff]
        %v3428 = vld [vmem:[#allocation19 + $0xd70] sm:$0xff]
        %v3429 = vld [vmem:[#allocation19 + $0xd78] sm:$0xff]
        %v3430 = vld [vmem:[#allocation19 + $0xd80] sm:$0xff]
        %v3431 = vld [vmem:[#allocation19 + $0xd88] sm:$0xff]
        %v3432 = vld [vmem:[#allocation19 + $0xd90] sm:$0xff]
        %v3433 = vld [vmem:[#allocation19 + $0xd98] sm:$0xff]
        %v3434 = vld [vmem:[#allocation19 + $0xda0] sm:$0xff]
        %v3435 = vld [vmem:[#allocation19 + $0xda8] sm:$0xff]
        %v3436 = vld [vmem:[#allocation19 + $0xdb0] sm:$0xff]
        %v3437 = vld [vmem:[#allocation19 + $0xdb8] sm:$0xff]
        %v3438 = vld [vmem:[#allocation19 + $0xdc0] sm:$0xff]
        %v3439 = vld [vmem:[#allocation19 + $0xdc8] sm:$0xff]
        %v3440 = vld [vmem:[#allocation19 + $0xdd0] sm:$0xff]
        %v3441 = vld [vmem:[#allocation19 + $0xdd8] sm:$0xff]
        %v3442 = vld [vmem:[#allocation19 + $0xde0] sm:$0xff]
        %v3443 = vld [vmem:[#allocation19 + $0xde8] sm:$0xff]
        %v3444 = vld [vmem:[#allocation19 + $0xdf0] sm:$0xff]
        %v3445 = vld [vmem:[#allocation19 + $0xdf8] sm:$0xff]
        %v3446 = vld [vmem:[#allocation19 + $0xe00] sm:$0xff]
        %v3447 = vld [vmem:[#allocation19 + $0xe08] sm:$0xff]
        %v3448 = vld [vmem:[#allocation19 + $0xe10] sm:$0xff]
        %v3449 = vld [vmem:[#allocation19 + $0xe18] sm:$0xff]
        %v3450 = vld [vmem:[#allocation19 + $0xe20] sm:$0xff]
        %v3451 = vld [vmem:[#allocation19 + $0xe28] sm:$0xff]
        %v3452 = vld [vmem:[#allocation19 + $0xe30] sm:$0xff]
        %v3453 = vld [vmem:[#allocation19 + $0xe38] sm:$0xff]
        %v3454 = vld [vmem:[#allocation19 + $0xe40] sm:$0xff]
        %v3455 = vld [vmem:[#allocation19 + $0xe48] sm:$0xff]
        %v3456 = vld [vmem:[#allocation19 + $0xe50] sm:$0xff]
        %v3457 = vld [vmem:[#allocation19 + $0xe58] sm:$0xff]
        %v3458 = vld [vmem:[#allocation19 + $0xe60] sm:$0xff]
        %v3459 = vld [vmem:[#allocation19 + $0xe68] sm:$0xff]
        %v3460 = vld [vmem:[#allocation19 + $0xe70] sm:$0xff]
        %v3461 = vld [vmem:[#allocation19 + $0xe78] sm:$0xff]
        %v3462 = vld [vmem:[#allocation19 + $0xe80] sm:$0xff]
        %v3463 = vld [vmem:[#allocation19 + $0xe88] sm:$0xff]
        %v3464 = vld [vmem:[#allocation19 + $0xe90] sm:$0xff]
        %v3465 = vld [vmem:[#allocation19 + $0xe98] sm:$0xff]
        %v3466 = vld [vmem:[#allocation19 + $0xea0] sm:$0xff]
        %v3467 = vld [vmem:[#allocation19 + $0xea8] sm:$0xff]
        %v3468 = vld [vmem:[#allocation19 + $0xeb0] sm:$0xff]
        %v3469 = vld [vmem:[#allocation19 + $0xeb8] sm:$0xff]
        %v3470 = vld [vmem:[#allocation19 + $0xec0] sm:$0xff]
        %v3471 = vld [vmem:[#allocation19 + $0xec8] sm:$0xff]
        %v3472 = vld [vmem:[#allocation19 + $0xed0] sm:$0xff]
        %v3473 = vld [vmem:[#allocation19 + $0xed8] sm:$0xff]
        %v3474 = vld [vmem:[#allocation19 + $0xee0] sm:$0xff]
        %v3475 = vld [vmem:[#allocation19 + $0xee8] sm:$0xff]
        %v3476 = vld [vmem:[#allocation19 + $0xef0] sm:$0xff]
        %v3477 = vld [vmem:[#allocation19 + $0xef8] sm:$0xff]
        %v3478 = vld [vmem:[#allocation19 + $0xf00] sm:$0xff]
        %v3479 = vld [vmem:[#allocation19 + $0xf08] sm:$0xff]
        %v3480 = vld [vmem:[#allocation19 + $0xf10] sm:$0xff]
        %v3481 = vld [vmem:[#allocation19 + $0xf18] sm:$0xff]
        %v3482 = vld [vmem:[#allocation19 + $0xf20] sm:$0xff]
        %v3483 = vld [vmem:[#allocation19 + $0xf28] sm:$0xff]
        %v3484 = vld [vmem:[#allocation19 + $0xf30] sm:$0xff]
        %v3485 = vld [vmem:[#allocation19 + $0xf38] sm:$0xff]
        %v3486 = vld [vmem:[#allocation19 + $0xf40] sm:$0xff]
        %v3487 = vld [vmem:[#allocation19 + $0xf48] sm:$0xff]
        %v3488 = vld [vmem:[#allocation19 + $0xf50] sm:$0xff]
        %v3489 = vld [vmem:[#allocation19 + $0xf58] sm:$0xff]
        %v3490 = vld [vmem:[#allocation19 + $0xf60] sm:$0xff]
        %v3491 = vld [vmem:[#allocation19 + $0xf68] sm:$0xff]
        %v3492 = vld [vmem:[#allocation19 + $0xf70] sm:$0xff]
        %v3493 = vld [vmem:[#allocation19 + $0xf78] sm:$0xff]
        %v3494 = vld [vmem:[#allocation19 + $0xf80] sm:$0xff]
        %v3495 = vld [vmem:[#allocation19 + $0xf88] sm:$0xff]
        %v3496 = vld [vmem:[#allocation19 + $0xf90] sm:$0xff]
        %v3497 = vld [vmem:[#allocation19 + $0xf98] sm:$0xff]
        %v3498 = vld [vmem:[#allocation19 + $0xfa0] sm:$0xff]
        %v3499 = vld [vmem:[#allocation19 + $0xfa8] sm:$0xff]
        %v3500 = vld [vmem:[#allocation19 + $0xfb0] sm:$0xff]
        %v3501 = vld [vmem:[#allocation19 + $0xfb8] sm:$0xff]
        %v3502 = vld [vmem:[#allocation19 + $0xfc0] sm:$0xff]
        %v3503 = vld [vmem:[#allocation19 + $0xfc8] sm:$0xff]
        %v3504 = vld [vmem:[#allocation19 + $0xfd0] sm:$0xff]
        %v3505 = vld [vmem:[#allocation19 + $0xfd8] sm:$0xff]
        %v3506 = vld [vmem:[#allocation19 + $0xfe0] sm:$0xff]
        %v3507 = vld [vmem:[#allocation19 + $0xfe8] sm:$0xff]
        %v3508 = vld [vmem:[#allocation19 + $0xff0] sm:$0xff]
        %v3509 = vld [vmem:[#allocation19 + $0xff8] sm:$0xff]
        %3510 = vmatpush.msra.mxu0 %v3238
        %3511 = vmatpush.msra.mxu0 %v3222
        %3512 = vmatpush.msra.mxu0 %v3206
        %3513 = vmatpush.msra.mxu0 %v3190
        %3514 = vmatpush.msra.mxu0 %v3174
        %3515 = vmatpush.msra.mxu0 %v3158
        %3516 = vmatpush.msra.mxu0 %v3142
        %3517 = vmatpush.msra.mxu0 %v3126
        %3518 = vmatpush.msra.mxu0 %v3110
        %3519 = vmatpush.msra.mxu0 %v3094
        %3520 = vmatpush.msra.mxu0 %v3078
        %3521 = vmatpush.msra.mxu0 %v3062
        %3522 = vmatpush.msra.mxu0 %v3046
        %3523 = vmatpush.msra.mxu0 %v3030
        %3524 = vmatpush.msra.mxu0 %v3014
        %3525 = vmatpush.msra.mxu0 %v2998
        %3526 = vmatmul.f32.gmra.mxu0 %v2994
        %v3527 = vpop.f32.mrf.mxu0
        %v3528 = vadd.f32 0.0, %v3527
        %3529 = vdwg.mxu0
        %3530 = vmatpush.msra.mxu0 %v3494
        %3531 = vmatpush.msra.mxu0 %v3478
        %3532 = vmatpush.msra.mxu0 %v3462
        %3533 = vmatpush.msra.mxu0 %v3446
        %3534 = vmatpush.msra.mxu0 %v3430
        %3535 = vmatpush.msra.mxu0 %v3414
        %3536 = vmatpush.msra.mxu0 %v3398
        %3537 = vmatpush.msra.mxu0 %v3382
        %3538 = vmatpush.msra.mxu0 %v3366
        %3539 = vmatpush.msra.mxu0 %v3350
        %3540 = vmatpush.msra.mxu0 %v3334
        %3541 = vmatpush.msra.mxu0 %v3318
        %3542 = vmatpush.msra.mxu0 %v3302
        %3543 = vmatpush.msra.mxu0 %v3286
        %3544 = vmatpush.msra.mxu0 %v3270
        %3545 = vmatpush.msra.mxu0 %v3254
        %3546 = vmatmul.f32.gmra.mxu0 %v2995
        %v3547 = vpop.f32.mrf.mxu0
        %v3548 = vadd.f32 %v3528, %v3547
        %3549 = vdwg.mxu0
        %3550 = vmatpush.msra.mxu0 %v3239
        %3551 = vmatpush.msra.mxu0 %v3223
        %3552 = vmatpush.msra.mxu0 %v3207
        %3553 = vmatpush.msra.mxu0 %v3191
        %3554 = vmatpush.msra.mxu0 %v3175
        %3555 = vmatpush.msra.mxu0 %v3159
        %3556 = vmatpush.msra.mxu0 %v3143
        %3557 = vmatpush.msra.mxu0 %v3127
        %3558 = vmatpush.msra.mxu0 %v3111
        %3559 = vmatpush.msra.mxu0 %v3095
        %3560 = vmatpush.msra.mxu0 %v3079
        %3561 = vmatpush.msra.mxu0 %v3063
        %3562 = vmatpush.msra.mxu0 %v3047
        %3563 = vmatpush.msra.mxu0 %v3031
        %3564 = vmatpush.msra.mxu0 %v3015
        %3565 = vmatpush.msra.mxu0 %v2999
        %3566 = vmatmul.f32.gmra.mxu0 %v2994
        %v3567 = vpop.f32.mrf.mxu0
        %v3568 = vadd.f32 0.0, %v3567
        %3569 = vdwg.mxu0
        %3570 = vmatpush.msra.mxu0 %v3495
        %3571 = vmatpush.msra.mxu0 %v3479
        %3572 = vmatpush.msra.mxu0 %v3463
        %3573 = vmatpush.msra.mxu0 %v3447
        %3574 = vmatpush.msra.mxu0 %v3431
        %3575 = vmatpush.msra.mxu0 %v3415
        %3576 = vmatpush.msra.mxu0 %v3399
        %3577 = vmatpush.msra.mxu0 %v3383
        %3578 = vmatpush.msra.mxu0 %v3367
        %3579 = vmatpush.msra.mxu0 %v3351
        %3580 = vmatpush.msra.mxu0 %v3335
        %3581 = vmatpush.msra.mxu0 %v3319
        %3582 = vmatpush.msra.mxu0 %v3303
        %3583 = vmatpush.msra.mxu0 %v3287
        %3584 = vmatpush.msra.mxu0 %v3271
        %3585 = vmatpush.msra.mxu0 %v3255
        %3586 = vmatmul.f32.gmra.mxu0 %v2995
        %v3587 = vpop.f32.mrf.mxu0
        %v3588 = vadd.f32 %v3568, %v3587
        %3589 = vdwg.mxu0
        %3590 = vmatpush.msra.mxu0 %v3240
        %3591 = vmatpush.msra.mxu0 %v3224
        %3592 = vmatpush.msra.mxu0 %v3208
        %3593 = vmatpush.msra.mxu0 %v3192
        %3594 = vmatpush.msra.mxu0 %v3176
        %3595 = vmatpush.msra.mxu0 %v3160
        %3596 = vmatpush.msra.mxu0 %v3144
        %3597 = vmatpush.msra.mxu0 %v3128
        %3598 = vmatpush.msra.mxu0 %v3112
        %3599 = vmatpush.msra.mxu0 %v3096
        %3600 = vmatpush.msra.mxu0 %v3080
        %3601 = vmatpush.msra.mxu0 %v3064
        %3602 = vmatpush.msra.mxu0 %v3048
        %3603 = vmatpush.msra.mxu0 %v3032
        %3604 = vmatpush.msra.mxu0 %v3016
        %3605 = vmatpush.msra.mxu0 %v3000
        %3606 = vmatmul.f32.gmra.mxu0 %v2994
        %v3607 = vpop.f32.mrf.mxu0
        %v3608 = vadd.f32 0.0, %v3607
        %3609 = vdwg.mxu0
        %3610 = vmatpush.msra.mxu0 %v3496
        %3611 = vmatpush.msra.mxu0 %v3480
        %3612 = vmatpush.msra.mxu0 %v3464
        %3613 = vmatpush.msra.mxu0 %v3448
        %3614 = vmatpush.msra.mxu0 %v3432
        %3615 = vmatpush.msra.mxu0 %v3416
        %3616 = vmatpush.msra.mxu0 %v3400
        %3617 = vmatpush.msra.mxu0 %v3384
        %3618 = vmatpush.msra.mxu0 %v3368
        %3619 = vmatpush.msra.mxu0 %v3352
        %3620 = vmatpush.msra.mxu0 %v3336
        %3621 = vmatpush.msra.mxu0 %v3320
        %3622 = vmatpush.msra.mxu0 %v3304
        %3623 = vmatpush.msra.mxu0 %v3288
        %3624 = vmatpush.msra.mxu0 %v3272
        %3625 = vmatpush.msra.mxu0 %v3256
        %3626 = vmatmul.f32.gmra.mxu0 %v2995
        %v3627 = vpop.f32.mrf.mxu0
        %v3628 = vadd.f32 %v3608, %v3627
        %3629 = vdwg.mxu0
        %3630 = vmatpush.msra.mxu0 %v3241
        %3631 = vmatpush.msra.mxu0 %v3225
        %3632 = vmatpush.msra.mxu0 %v3209
        %3633 = vmatpush.msra.mxu0 %v3193
        %3634 = vmatpush.msra.mxu0 %v3177
        %3635 = vmatpush.msra.mxu0 %v3161
        %3636 = vmatpush.msra.mxu0 %v3145
        %3637 = vmatpush.msra.mxu0 %v3129
        %3638 = vmatpush.msra.mxu0 %v3113
        %3639 = vmatpush.msra.mxu0 %v3097
        %3640 = vmatpush.msra.mxu0 %v3081
        %3641 = vmatpush.msra.mxu0 %v3065
        %3642 = vmatpush.msra.mxu0 %v3049
        %3643 = vmatpush.msra.mxu0 %v3033
        %3644 = vmatpush.msra.mxu0 %v3017
        %3645 = vmatpush.msra.mxu0 %v3001
        %3646 = vmatmul.f32.gmra.mxu0 %v2994
        %v3647 = vpop.f32.mrf.mxu0
        %v3648 = vadd.f32 0.0, %v3647
        %3649 = vdwg.mxu0
        %3650 = vmatpush.msra.mxu0 %v3497
        %3651 = vmatpush.msra.mxu0 %v3481
        %3652 = vmatpush.msra.mxu0 %v3465
        %3653 = vmatpush.msra.mxu0 %v3449
        %3654 = vmatpush.msra.mxu0 %v3433
        %3655 = vmatpush.msra.mxu0 %v3417
        %3656 = vmatpush.msra.mxu0 %v3401
        %3657 = vmatpush.msra.mxu0 %v3385
        %3658 = vmatpush.msra.mxu0 %v3369
        %3659 = vmatpush.msra.mxu0 %v3353
        %3660 = vmatpush.msra.mxu0 %v3337
        %3661 = vmatpush.msra.mxu0 %v3321
        %3662 = vmatpush.msra.mxu0 %v3305
        %3663 = vmatpush.msra.mxu0 %v3289
        %3664 = vmatpush.msra.mxu0 %v3273
        %3665 = vmatpush.msra.mxu0 %v3257
        %3666 = vmatmul.f32.gmra.mxu0 %v2995
        %v3667 = vpop.f32.mrf.mxu0
        %v3668 = vadd.f32 %v3648, %v3667
        %3669 = vdwg.mxu0
        %3670 = vmatpush.msra.mxu0 %v3242
        %3671 = vmatpush.msra.mxu0 %v3226
        %3672 = vmatpush.msra.mxu0 %v3210
        %3673 = vmatpush.msra.mxu0 %v3194
        %3674 = vmatpush.msra.mxu0 %v3178
        %3675 = vmatpush.msra.mxu0 %v3162
        %3676 = vmatpush.msra.mxu0 %v3146
        %3677 = vmatpush.msra.mxu0 %v3130
        %3678 = vmatpush.msra.mxu0 %v3114
        %3679 = vmatpush.msra.mxu0 %v3098
        %3680 = vmatpush.msra.mxu0 %v3082
        %3681 = vmatpush.msra.mxu0 %v3066
        %3682 = vmatpush.msra.mxu0 %v3050
        %3683 = vmatpush.msra.mxu0 %v3034
        %3684 = vmatpush.msra.mxu0 %v3018
        %3685 = vmatpush.msra.mxu0 %v3002
        %3686 = vmatmul.f32.gmra.mxu0 %v2994
        %v3687 = vpop.f32.mrf.mxu0
        %v3688 = vadd.f32 0.0, %v3687
        %3689 = vdwg.mxu0
        %3690 = vmatpush.msra.mxu0 %v3498
        %3691 = vmatpush.msra.mxu0 %v3482
        %3692 = vmatpush.msra.mxu0 %v3466
        %3693 = vmatpush.msra.mxu0 %v3450
        %3694 = vmatpush.msra.mxu0 %v3434
        %3695 = vmatpush.msra.mxu0 %v3418
        %3696 = vmatpush.msra.mxu0 %v3402
        %3697 = vmatpush.msra.mxu0 %v3386
        %3698 = vmatpush.msra.mxu0 %v3370
        %3699 = vmatpush.msra.mxu0 %v3354
        %3700 = vmatpush.msra.mxu0 %v3338
        %3701 = vmatpush.msra.mxu0 %v3322
        %3702 = vmatpush.msra.mxu0 %v3306
        %3703 = vmatpush.msra.mxu0 %v3290
        %3704 = vmatpush.msra.mxu0 %v3274
        %3705 = vmatpush.msra.mxu0 %v3258
        %3706 = vmatmul.f32.gmra.mxu0 %v2995
        %v3707 = vpop.f32.mrf.mxu0
        %v3708 = vadd.f32 %v3688, %v3707
        %3709 = vdwg.mxu0
        %3710 = vmatpush.msra.mxu0 %v3243
        %3711 = vmatpush.msra.mxu0 %v3227
        %3712 = vmatpush.msra.mxu0 %v3211
        %3713 = vmatpush.msra.mxu0 %v3195
        %3714 = vmatpush.msra.mxu0 %v3179
        %3715 = vmatpush.msra.mxu0 %v3163
        %3716 = vmatpush.msra.mxu0 %v3147
        %3717 = vmatpush.msra.mxu0 %v3131
        %3718 = vmatpush.msra.mxu0 %v3115
        %3719 = vmatpush.msra.mxu0 %v3099
        %3720 = vmatpush.msra.mxu0 %v3083
        %3721 = vmatpush.msra.mxu0 %v3067
        %3722 = vmatpush.msra.mxu0 %v3051
        %3723 = vmatpush.msra.mxu0 %v3035
        %3724 = vmatpush.msra.mxu0 %v3019
        %3725 = vmatpush.msra.mxu0 %v3003
        %3726 = vmatmul.f32.gmra.mxu0 %v2994
        %v3727 = vpop.f32.mrf.mxu0
        %v3728 = vadd.f32 0.0, %v3727
        %3729 = vdwg.mxu0
        %3730 = vmatpush.msra.mxu0 %v3499
        %3731 = vmatpush.msra.mxu0 %v3483
        %3732 = vmatpush.msra.mxu0 %v3467
        %3733 = vmatpush.msra.mxu0 %v3451
        %3734 = vmatpush.msra.mxu0 %v3435
        %3735 = vmatpush.msra.mxu0 %v3419
        %3736 = vmatpush.msra.mxu0 %v3403
        %3737 = vmatpush.msra.mxu0 %v3387
        %3738 = vmatpush.msra.mxu0 %v3371
        %3739 = vmatpush.msra.mxu0 %v3355
        %3740 = vmatpush.msra.mxu0 %v3339
        %3741 = vmatpush.msra.mxu0 %v3323
        %3742 = vmatpush.msra.mxu0 %v3307
        %3743 = vmatpush.msra.mxu0 %v3291
        %3744 = vmatpush.msra.mxu0 %v3275
        %3745 = vmatpush.msra.mxu0 %v3259
        %3746 = vmatmul.f32.gmra.mxu0 %v2995
        %v3747 = vpop.f32.mrf.mxu0
        %v3748 = vadd.f32 %v3728, %v3747
        %3749 = vdwg.mxu0
        %3750 = vmatpush.msra.mxu0 %v3244
        %3751 = vmatpush.msra.mxu0 %v3228
        %3752 = vmatpush.msra.mxu0 %v3212
        %3753 = vmatpush.msra.mxu0 %v3196
        %3754 = vmatpush.msra.mxu0 %v3180
        %3755 = vmatpush.msra.mxu0 %v3164
        %3756 = vmatpush.msra.mxu0 %v3148
        %3757 = vmatpush.msra.mxu0 %v3132
        %3758 = vmatpush.msra.mxu0 %v3116
        %3759 = vmatpush.msra.mxu0 %v3100
        %3760 = vmatpush.msra.mxu0 %v3084
        %3761 = vmatpush.msra.mxu0 %v3068
        %3762 = vmatpush.msra.mxu0 %v3052
        %3763 = vmatpush.msra.mxu0 %v3036
        %3764 = vmatpush.msra.mxu0 %v3020
        %3765 = vmatpush.msra.mxu0 %v3004
        %3766 = vmatmul.f32.gmra.mxu0 %v2994
        %v3767 = vpop.f32.mrf.mxu0
        %v3768 = vadd.f32 0.0, %v3767
        %3769 = vdwg.mxu0
        %3770 = vmatpush.msra.mxu0 %v3500
        %3771 = vmatpush.msra.mxu0 %v3484
        %3772 = vmatpush.msra.mxu0 %v3468
        %3773 = vmatpush.msra.mxu0 %v3452
        %3774 = vmatpush.msra.mxu0 %v3436
        %3775 = vmatpush.msra.mxu0 %v3420
        %3776 = vmatpush.msra.mxu0 %v3404
        %3777 = vmatpush.msra.mxu0 %v3388
        %3778 = vmatpush.msra.mxu0 %v3372
        %3779 = vmatpush.msra.mxu0 %v3356
        %3780 = vmatpush.msra.mxu0 %v3340
        %3781 = vmatpush.msra.mxu0 %v3324
        %3782 = vmatpush.msra.mxu0 %v3308
        %3783 = vmatpush.msra.mxu0 %v3292
        %3784 = vmatpush.msra.mxu0 %v3276
        %3785 = vmatpush.msra.mxu0 %v3260
        %3786 = vmatmul.f32.gmra.mxu0 %v2995
        %v3787 = vpop.f32.mrf.mxu0
        %v3788 = vadd.f32 %v3768, %v3787
        %3789 = vdwg.mxu0
        %3790 = vmatpush.msra.mxu0 %v3245
        %3791 = vmatpush.msra.mxu0 %v3229
        %3792 = vmatpush.msra.mxu0 %v3213
        %3793 = vmatpush.msra.mxu0 %v3197
        %3794 = vmatpush.msra.mxu0 %v3181
        %3795 = vmatpush.msra.mxu0 %v3165
        %3796 = vmatpush.msra.mxu0 %v3149
        %3797 = vmatpush.msra.mxu0 %v3133
        %3798 = vmatpush.msra.mxu0 %v3117
        %3799 = vmatpush.msra.mxu0 %v3101
        %3800 = vmatpush.msra.mxu0 %v3085
        %3801 = vmatpush.msra.mxu0 %v3069
        %3802 = vmatpush.msra.mxu0 %v3053
        %3803 = vmatpush.msra.mxu0 %v3037
        %3804 = vmatpush.msra.mxu0 %v3021
        %3805 = vmatpush.msra.mxu0 %v3005
        %3806 = vmatmul.f32.gmra.mxu0 %v2994
        %v3807 = vpop.f32.mrf.mxu0
        %v3808 = vadd.f32 0.0, %v3807
        %3809 = vdwg.mxu0
        %3810 = vmatpush.msra.mxu0 %v3501
        %3811 = vmatpush.msra.mxu0 %v3485
        %3812 = vmatpush.msra.mxu0 %v3469
        %3813 = vmatpush.msra.mxu0 %v3453
        %3814 = vmatpush.msra.mxu0 %v3437
        %3815 = vmatpush.msra.mxu0 %v3421
        %3816 = vmatpush.msra.mxu0 %v3405
        %3817 = vmatpush.msra.mxu0 %v3389
        %3818 = vmatpush.msra.mxu0 %v3373
        %3819 = vmatpush.msra.mxu0 %v3357
        %3820 = vmatpush.msra.mxu0 %v3341
        %3821 = vmatpush.msra.mxu0 %v3325
        %3822 = vmatpush.msra.mxu0 %v3309
        %3823 = vmatpush.msra.mxu0 %v3293
        %3824 = vmatpush.msra.mxu0 %v3277
        %3825 = vmatpush.msra.mxu0 %v3261
        %3826 = vmatmul.f32.gmra.mxu0 %v2995
        %v3827 = vpop.f32.mrf.mxu0
        %v3828 = vadd.f32 %v3808, %v3827
        %3829 = vdwg.mxu0
        %3830 = vmatpush.msra.mxu0 %v3246
        %3831 = vmatpush.msra.mxu0 %v3230
        %3832 = vmatpush.msra.mxu0 %v3214
        %3833 = vmatpush.msra.mxu0 %v3198
        %3834 = vmatpush.msra.mxu0 %v3182
        %3835 = vmatpush.msra.mxu0 %v3166
        %3836 = vmatpush.msra.mxu0 %v3150
        %3837 = vmatpush.msra.mxu0 %v3134
        %3838 = vmatpush.msra.mxu0 %v3118
        %3839 = vmatpush.msra.mxu0 %v3102
        %3840 = vmatpush.msra.mxu0 %v3086
        %3841 = vmatpush.msra.mxu0 %v3070
        %3842 = vmatpush.msra.mxu0 %v3054
        %3843 = vmatpush.msra.mxu0 %v3038
        %3844 = vmatpush.msra.mxu0 %v3022
        %3845 = vmatpush.msra.mxu0 %v3006
        %3846 = vmatmul.f32.gmra.mxu0 %v2994
        %v3847 = vpop.f32.mrf.mxu0
        %v3848 = vadd.f32 0.0, %v3847
        %3849 = vdwg.mxu0
        %3850 = vmatpush.msra.mxu0 %v3502
        %3851 = vmatpush.msra.mxu0 %v3486
        %3852 = vmatpush.msra.mxu0 %v3470
        %3853 = vmatpush.msra.mxu0 %v3454
        %3854 = vmatpush.msra.mxu0 %v3438
        %3855 = vmatpush.msra.mxu0 %v3422
        %3856 = vmatpush.msra.mxu0 %v3406
        %3857 = vmatpush.msra.mxu0 %v3390
        %3858 = vmatpush.msra.mxu0 %v3374
        %3859 = vmatpush.msra.mxu0 %v3358
        %3860 = vmatpush.msra.mxu0 %v3342
        %3861 = vmatpush.msra.mxu0 %v3326
        %3862 = vmatpush.msra.mxu0 %v3310
        %3863 = vmatpush.msra.mxu0 %v3294
        %3864 = vmatpush.msra.mxu0 %v3278
        %3865 = vmatpush.msra.mxu0 %v3262
        %3866 = vmatmul.f32.gmra.mxu0 %v2995
        %v3867 = vpop.f32.mrf.mxu0
        %v3868 = vadd.f32 %v3848, %v3867
        %3869 = vdwg.mxu0
        %3870 = vmatpush.msra.mxu0 %v3247
        %3871 = vmatpush.msra.mxu0 %v3231
        %3872 = vmatpush.msra.mxu0 %v3215
        %3873 = vmatpush.msra.mxu0 %v3199
        %3874 = vmatpush.msra.mxu0 %v3183
        %3875 = vmatpush.msra.mxu0 %v3167
        %3876 = vmatpush.msra.mxu0 %v3151
        %3877 = vmatpush.msra.mxu0 %v3135
        %3878 = vmatpush.msra.mxu0 %v3119
        %3879 = vmatpush.msra.mxu0 %v3103
        %3880 = vmatpush.msra.mxu0 %v3087
        %3881 = vmatpush.msra.mxu0 %v3071
        %3882 = vmatpush.msra.mxu0 %v3055
        %3883 = vmatpush.msra.mxu0 %v3039
        %3884 = vmatpush.msra.mxu0 %v3023
        %3885 = vmatpush.msra.mxu0 %v3007
        %3886 = vmatmul.f32.gmra.mxu0 %v2994
        %v3887 = vpop.f32.mrf.mxu0
        %v3888 = vadd.f32 0.0, %v3887
        %3889 = vdwg.mxu0
        %3890 = vmatpush.msra.mxu0 %v3503
        %3891 = vmatpush.msra.mxu0 %v3487
        %3892 = vmatpush.msra.mxu0 %v3471
        %3893 = vmatpush.msra.mxu0 %v3455
        %3894 = vmatpush.msra.mxu0 %v3439
        %3895 = vmatpush.msra.mxu0 %v3423
        %3896 = vmatpush.msra.mxu0 %v3407
        %3897 = vmatpush.msra.mxu0 %v3391
        %3898 = vmatpush.msra.mxu0 %v3375
        %3899 = vmatpush.msra.mxu0 %v3359
        %3900 = vmatpush.msra.mxu0 %v3343
        %3901 = vmatpush.msra.mxu0 %v3327
        %3902 = vmatpush.msra.mxu0 %v3311
        %3903 = vmatpush.msra.mxu0 %v3295
        %3904 = vmatpush.msra.mxu0 %v3279
        %3905 = vmatpush.msra.mxu0 %v3263
        %3906 = vmatmul.f32.gmra.mxu0 %v2995
        %v3907 = vpop.f32.mrf.mxu0
        %v3908 = vadd.f32 %v3888, %v3907
        %3909 = vdwg.mxu0
        %3910 = vmatpush.msra.mxu0 %v3248
        %3911 = vmatpush.msra.mxu0 %v3232
        %3912 = vmatpush.msra.mxu0 %v3216
        %3913 = vmatpush.msra.mxu0 %v3200
        %3914 = vmatpush.msra.mxu0 %v3184
        %3915 = vmatpush.msra.mxu0 %v3168
        %3916 = vmatpush.msra.mxu0 %v3152
        %3917 = vmatpush.msra.mxu0 %v3136
        %3918 = vmatpush.msra.mxu0 %v3120
        %3919 = vmatpush.msra.mxu0 %v3104
        %3920 = vmatpush.msra.mxu0 %v3088
        %3921 = vmatpush.msra.mxu0 %v3072
        %3922 = vmatpush.msra.mxu0 %v3056
        %3923 = vmatpush.msra.mxu0 %v3040
        %3924 = vmatpush.msra.mxu0 %v3024
        %3925 = vmatpush.msra.mxu0 %v3008
        %3926 = vmatmul.f32.gmra.mxu0 %v2994
        %v3927 = vpop.f32.mrf.mxu0
        %v3928 = vadd.f32 0.0, %v3927
        %3929 = vdwg.mxu0
        %3930 = vmatpush.msra.mxu0 %v3504
        %3931 = vmatpush.msra.mxu0 %v3488
        %3932 = vmatpush.msra.mxu0 %v3472
        %3933 = vmatpush.msra.mxu0 %v3456
        %3934 = vmatpush.msra.mxu0 %v3440
        %3935 = vmatpush.msra.mxu0 %v3424
        %3936 = vmatpush.msra.mxu0 %v3408
        %3937 = vmatpush.msra.mxu0 %v3392
        %3938 = vmatpush.msra.mxu0 %v3376
        %3939 = vmatpush.msra.mxu0 %v3360
        %3940 = vmatpush.msra.mxu0 %v3344
        %3941 = vmatpush.msra.mxu0 %v3328
        %3942 = vmatpush.msra.mxu0 %v3312
        %3943 = vmatpush.msra.mxu0 %v3296
        %3944 = vmatpush.msra.mxu0 %v3280
        %3945 = vmatpush.msra.mxu0 %v3264
        %3946 = vmatmul.f32.gmra.mxu0 %v2995
        %v3947 = vpop.f32.mrf.mxu0
        %v3948 = vadd.f32 %v3928, %v3947
        %3949 = vdwg.mxu0
        %3950 = vmatpush.msra.mxu0 %v3249
        %3951 = vmatpush.msra.mxu0 %v3233
        %3952 = vmatpush.msra.mxu0 %v3217
        %3953 = vmatpush.msra.mxu0 %v3201
        %3954 = vmatpush.msra.mxu0 %v3185
        %3955 = vmatpush.msra.mxu0 %v3169
        %3956 = vmatpush.msra.mxu0 %v3153
        %3957 = vmatpush.msra.mxu0 %v3137
        %3958 = vmatpush.msra.mxu0 %v3121
        %3959 = vmatpush.msra.mxu0 %v3105
        %3960 = vmatpush.msra.mxu0 %v3089
        %3961 = vmatpush.msra.mxu0 %v3073
        %3962 = vmatpush.msra.mxu0 %v3057
        %3963 = vmatpush.msra.mxu0 %v3041
        %3964 = vmatpush.msra.mxu0 %v3025
        %3965 = vmatpush.msra.mxu0 %v3009
        %3966 = vmatmul.f32.gmra.mxu0 %v2994
        %v3967 = vpop.f32.mrf.mxu0
        %v3968 = vadd.f32 0.0, %v3967
        %3969 = vdwg.mxu0
        %3970 = vmatpush.msra.mxu0 %v3505
        %3971 = vmatpush.msra.mxu0 %v3489
        %3972 = vmatpush.msra.mxu0 %v3473
        %3973 = vmatpush.msra.mxu0 %v3457
        %3974 = vmatpush.msra.mxu0 %v3441
        %3975 = vmatpush.msra.mxu0 %v3425
        %3976 = vmatpush.msra.mxu0 %v3409
        %3977 = vmatpush.msra.mxu0 %v3393
        %3978 = vmatpush.msra.mxu0 %v3377
        %3979 = vmatpush.msra.mxu0 %v3361
        %3980 = vmatpush.msra.mxu0 %v3345
        %3981 = vmatpush.msra.mxu0 %v3329
        %3982 = vmatpush.msra.mxu0 %v3313
        %3983 = vmatpush.msra.mxu0 %v3297
        %3984 = vmatpush.msra.mxu0 %v3281
        %3985 = vmatpush.msra.mxu0 %v3265
        %3986 = vmatmul.f32.gmra.mxu0 %v2995
        %v3987 = vpop.f32.mrf.mxu0
        %v3988 = vadd.f32 %v3968, %v3987
        %3989 = vdwg.mxu0
        %3990 = vmatpush.msra.mxu0 %v3250
        %3991 = vmatpush.msra.mxu0 %v3234
        %3992 = vmatpush.msra.mxu0 %v3218
        %3993 = vmatpush.msra.mxu0 %v3202
        %3994 = vmatpush.msra.mxu0 %v3186
        %3995 = vmatpush.msra.mxu0 %v3170
        %3996 = vmatpush.msra.mxu0 %v3154
        %3997 = vmatpush.msra.mxu0 %v3138
        %3998 = vmatpush.msra.mxu0 %v3122
        %3999 = vmatpush.msra.mxu0 %v3106
        %4000 = vmatpush.msra.mxu0 %v3090
        %4001 = vmatpush.msra.mxu0 %v3074
        %4002 = vmatpush.msra.mxu0 %v3058
        %4003 = vmatpush.msra.mxu0 %v3042
        %4004 = vmatpush.msra.mxu0 %v3026
        %4005 = vmatpush.msra.mxu0 %v3010
        %4006 = vmatmul.f32.gmra.mxu0 %v2994
        %v4007 = vpop.f32.mrf.mxu0
        %v4008 = vadd.f32 0.0, %v4007
        %4009 = vdwg.mxu0
        %4010 = vmatpush.msra.mxu0 %v3506
        %4011 = vmatpush.msra.mxu0 %v3490
        %4012 = vmatpush.msra.mxu0 %v3474
        %4013 = vmatpush.msra.mxu0 %v3458
        %4014 = vmatpush.msra.mxu0 %v3442
        %4015 = vmatpush.msra.mxu0 %v3426
        %4016 = vmatpush.msra.mxu0 %v3410
        %4017 = vmatpush.msra.mxu0 %v3394
        %4018 = vmatpush.msra.mxu0 %v3378
        %4019 = vmatpush.msra.mxu0 %v3362
        %4020 = vmatpush.msra.mxu0 %v3346
        %4021 = vmatpush.msra.mxu0 %v3330
        %4022 = vmatpush.msra.mxu0 %v3314
        %4023 = vmatpush.msra.mxu0 %v3298
        %4024 = vmatpush.msra.mxu0 %v3282
        %4025 = vmatpush.msra.mxu0 %v3266
        %4026 = vmatmul.f32.gmra.mxu0 %v2995
        %v4027 = vpop.f32.mrf.mxu0
        %v4028 = vadd.f32 %v4008, %v4027
        %4029 = vdwg.mxu0
        %4030 = vmatpush.msra.mxu0 %v3251
        %4031 = vmatpush.msra.mxu0 %v3235
        %4032 = vmatpush.msra.mxu0 %v3219
        %4033 = vmatpush.msra.mxu0 %v3203
        %4034 = vmatpush.msra.mxu0 %v3187
        %4035 = vmatpush.msra.mxu0 %v3171
        %4036 = vmatpush.msra.mxu0 %v3155
        %4037 = vmatpush.msra.mxu0 %v3139
        %4038 = vmatpush.msra.mxu0 %v3123
        %4039 = vmatpush.msra.mxu0 %v3107
        %4040 = vmatpush.msra.mxu0 %v3091
        %4041 = vmatpush.msra.mxu0 %v3075
        %4042 = vmatpush.msra.mxu0 %v3059
        %4043 = vmatpush.msra.mxu0 %v3043
        %4044 = vmatpush.msra.mxu0 %v3027
        %4045 = vmatpush.msra.mxu0 %v3011
        %4046 = vmatmul.f32.gmra.mxu0 %v2994
        %v4047 = vpop.f32.mrf.mxu0
        %v4048 = vadd.f32 0.0, %v4047
        %4049 = vdwg.mxu0
        %4050 = vmatpush.msra.mxu0 %v3507
        %4051 = vmatpush.msra.mxu0 %v3491
        %4052 = vmatpush.msra.mxu0 %v3475
        %4053 = vmatpush.msra.mxu0 %v3459
        %4054 = vmatpush.msra.mxu0 %v3443
        %4055 = vmatpush.msra.mxu0 %v3427
        %4056 = vmatpush.msra.mxu0 %v3411
        %4057 = vmatpush.msra.mxu0 %v3395
        %4058 = vmatpush.msra.mxu0 %v3379
        %4059 = vmatpush.msra.mxu0 %v3363
        %4060 = vmatpush.msra.mxu0 %v3347
        %4061 = vmatpush.msra.mxu0 %v3331
        %4062 = vmatpush.msra.mxu0 %v3315
        %4063 = vmatpush.msra.mxu0 %v3299
        %4064 = vmatpush.msra.mxu0 %v3283
        %4065 = vmatpush.msra.mxu0 %v3267
        %4066 = vmatmul.f32.gmra.mxu0 %v2995
        %v4067 = vpop.f32.mrf.mxu0
        %v4068 = vadd.f32 %v4048, %v4067
        %4069 = vdwg.mxu0
        %4070 = vmatpush.msra.mxu0 %v3252
        %4071 = vmatpush.msra.mxu0 %v3236
        %4072 = vmatpush.msra.mxu0 %v3220
        %4073 = vmatpush.msra.mxu0 %v3204
        %4074 = vmatpush.msra.mxu0 %v3188
        %4075 = vmatpush.msra.mxu0 %v3172
        %4076 = vmatpush.msra.mxu0 %v3156
        %4077 = vmatpush.msra.mxu0 %v3140
        %4078 = vmatpush.msra.mxu0 %v3124
        %4079 = vmatpush.msra.mxu0 %v3108
        %4080 = vmatpush.msra.mxu0 %v3092
        %4081 = vmatpush.msra.mxu0 %v3076
        %4082 = vmatpush.msra.mxu0 %v3060
        %4083 = vmatpush.msra.mxu0 %v3044
        %4084 = vmatpush.msra.mxu0 %v3028
        %4085 = vmatpush.msra.mxu0 %v3012
        %4086 = vmatmul.f32.gmra.mxu0 %v2994
        %v4087 = vpop.f32.mrf.mxu0
        %v4088 = vadd.f32 0.0, %v4087
        %4089 = vdwg.mxu0
        %4090 = vmatpush.msra.mxu0 %v3508
        %4091 = vmatpush.msra.mxu0 %v3492
        %4092 = vmatpush.msra.mxu0 %v3476
        %4093 = vmatpush.msra.mxu0 %v3460
        %4094 = vmatpush.msra.mxu0 %v3444
        %4095 = vmatpush.msra.mxu0 %v3428
        %4096 = vmatpush.msra.mxu0 %v3412
        %4097 = vmatpush.msra.mxu0 %v3396
        %4098 = vmatpush.msra.mxu0 %v3380
        %4099 = vmatpush.msra.mxu0 %v3364
        %4100 = vmatpush.msra.mxu0 %v3348
        %4101 = vmatpush.msra.mxu0 %v3332
        %4102 = vmatpush.msra.mxu0 %v3316
        %4103 = vmatpush.msra.mxu0 %v3300
        %4104 = vmatpush.msra.mxu0 %v3284
        %4105 = vmatpush.msra.mxu0 %v3268
        %4106 = vmatmul.f32.gmra.mxu0 %v2995
        %v4107 = vpop.f32.mrf.mxu0
        %v4108 = vadd.f32 %v4088, %v4107
        %4109 = vdwg.mxu0
        %4110 = vmatpush.msra.mxu0 %v3253
        %4111 = vmatpush.msra.mxu0 %v3237
        %4112 = vmatpush.msra.mxu0 %v3221
        %4113 = vmatpush.msra.mxu0 %v3205
        %4114 = vmatpush.msra.mxu0 %v3189
        %4115 = vmatpush.msra.mxu0 %v3173
        %4116 = vmatpush.msra.mxu0 %v3157
        %4117 = vmatpush.msra.mxu0 %v3141
        %4118 = vmatpush.msra.mxu0 %v3125
        %4119 = vmatpush.msra.mxu0 %v3109
        %4120 = vmatpush.msra.mxu0 %v3093
        %4121 = vmatpush.msra.mxu0 %v3077
        %4122 = vmatpush.msra.mxu0 %v3061
        %4123 = vmatpush.msra.mxu0 %v3045
        %4124 = vmatpush.msra.mxu0 %v3029
        %4125 = vmatpush.msra.mxu0 %v3013
        %4126 = vmatmul.f32.gmra.mxu0 %v2994
        %v4127 = vpop.f32.mrf.mxu0
        %v4128 = vadd.f32 0.0, %v4127
        %4129 = vdwg.mxu0
        %4130 = vmatpush.msra.mxu0 %v3509
        %4131 = vmatpush.msra.mxu0 %v3493
        %4132 = vmatpush.msra.mxu0 %v3477
        %4133 = vmatpush.msra.mxu0 %v3461
        %4134 = vmatpush.msra.mxu0 %v3445
        %4135 = vmatpush.msra.mxu0 %v3429
        %4136 = vmatpush.msra.mxu0 %v3413
        %4137 = vmatpush.msra.mxu0 %v3397
        %4138 = vmatpush.msra.mxu0 %v3381
        %4139 = vmatpush.msra.mxu0 %v3365
        %4140 = vmatpush.msra.mxu0 %v3349
        %4141 = vmatpush.msra.mxu0 %v3333
        %4142 = vmatpush.msra.mxu0 %v3317
        %4143 = vmatpush.msra.mxu0 %v3301
        %4144 = vmatpush.msra.mxu0 %v3285
        %4145 = vmatpush.msra.mxu0 %v3269
        %4146 = vmatmul.f32.gmra.mxu0 %v2995
        %v4147 = vpop.f32.mrf.mxu0
        %v4148 = vadd.f32 %v4128, %v4147
        %4149 = vdwg.mxu0
        %4150 = vst [vmem:[#allocation3] sm:$0xff] %v3548
        %4151 = vst [vmem:[#allocation3 + $0x8] sm:$0xff] %v3588
        %4152 = vst [vmem:[#allocation3 + $0x10] sm:$0xff] %v3628
        %4153 = vst [vmem:[#allocation3 + $0x18] sm:$0xff] %v3668
        %4154 = vst [vmem:[#allocation3 + $0x20] sm:$0xff] %v3708
        %4155 = vst [vmem:[#allocation3 + $0x28] sm:$0xff] %v3748
        %4156 = vst [vmem:[#allocation3 + $0x30] sm:$0xff] %v3788
        %4157 = vst [vmem:[#allocation3 + $0x38] sm:$0xff] %v3828
        %4158 = vst [vmem:[#allocation3 + $0x40] sm:$0xff] %v3868
        %4159 = vst [vmem:[#allocation3 + $0x48] sm:$0xff] %v3908
        %4160 = vst [vmem:[#allocation3 + $0x50] sm:$0xff] %v3948
        %4161 = vst [vmem:[#allocation3 + $0x58] sm:$0xff] %v3988
        %4162 = vst [vmem:[#allocation3 + $0x60] sm:$0xff] %v4028
        %4163 = vst [vmem:[#allocation3 + $0x68] sm:$0xff] %v4068
        %4164 = vst [vmem:[#allocation3 + $0x70] sm:$0xff] %v4108
        %4165 = vst [vmem:[#allocation3 + $0x78] sm:$0xff] %v4148
        %v4166 = vld [vmem:[#allocation3] sm:$0xff]
        %v4167 = vld [vmem:[#allocation3 + $0x8] sm:$0xff]
        %v4168 = vmul.f32 %v4166, %v2996
        %v4169 = vmul.f32 %v4167, %v2997
        %4170 = vst [vmem:[#allocation3] sm:$0xff] %v4168
        %4171 = vst [vmem:[#allocation3 + $0x8] sm:$0xff] %v4169
        %v4172 = vld [vmem:[#allocation3 + $0x10] sm:$0xff]
        %v4173 = vld [vmem:[#allocation3 + $0x18] sm:$0xff]
        %v4174 = vmul.f32 %v4172, %v2996
        %v4175 = vmul.f32 %v4173, %v2997
        %4176 = vst [vmem:[#allocation3 + $0x10] sm:$0xff] %v4174
        %4177 = vst [vmem:[#allocation3 + $0x18] sm:$0xff] %v4175
        %v4178 = vld [vmem:[#allocation3 + $0x20] sm:$0xff]
        %v4179 = vld [vmem:[#allocation3 + $0x28] sm:$0xff]
        %v4180 = vmul.f32 %v4178, %v2996
        %v4181 = vmul.f32 %v4179, %v2997
        %4182 = vst [vmem:[#allocation3 + $0x20] sm:$0xff] %v4180
        %4183 = vst [vmem:[#allocation3 + $0x28] sm:$0xff] %v4181
        %v4184 = vld [vmem:[#allocation3 + $0x30] sm:$0xff]
        %v4185 = vld [vmem:[#allocation3 + $0x38] sm:$0xff]
        %v4186 = vmul.f32 %v4184, %v2996
        %v4187 = vmul.f32 %v4185, %v2997
        %4188 = vst [vmem:[#allocation3 + $0x30] sm:$0xff] %v4186
        %4189 = vst [vmem:[#allocation3 + $0x38] sm:$0xff] %v4187
        %v4190 = vld [vmem:[#allocation3 + $0x40] sm:$0xff]
        %v4191 = vld [vmem:[#allocation3 + $0x48] sm:$0xff]
        %v4192 = vmul.f32 %v4190, %v2996
        %v4193 = vmul.f32 %v4191, %v2997
        %4194 = vst [vmem:[#allocation3 + $0x40] sm:$0xff] %v4192
        %4195 = vst [vmem:[#allocation3 + $0x48] sm:$0xff] %v4193
        %v4196 = vld [vmem:[#allocation3 + $0x50] sm:$0xff]
        %v4197 = vld [vmem:[#allocation3 + $0x58] sm:$0xff]
        %v4198 = vmul.f32 %v4196, %v2996
        %v4199 = vmul.f32 %v4197, %v2997
        %4200 = vst [vmem:[#allocation3 + $0x50] sm:$0xff] %v4198
        %4201 = vst [vmem:[#allocation3 + $0x58] sm:$0xff] %v4199
        %v4202 = vld [vmem:[#allocation3 + $0x60] sm:$0xff]
        %v4203 = vld [vmem:[#allocation3 + $0x68] sm:$0xff]
        %v4204 = vmul.f32 %v4202, %v2996
        %v4205 = vmul.f32 %v4203, %v2997
        %4206 = vst [vmem:[#allocation3 + $0x60] sm:$0xff] %v4204
        %4207 = vst [vmem:[#allocation3 + $0x68] sm:$0xff] %v4205
        %v4208 = vld [vmem:[#allocation3 + $0x70] sm:$0xff]
        %v4209 = vld [vmem:[#allocation3 + $0x78] sm:$0xff]
        %v4210 = vmul.f32 %v4208, %v2996
        %v4211 = vmul.f32 %v4209, %v2997
        %4212 = vst [vmem:[#allocation3 + $0x70] sm:$0xff] %v4210
        %4213 = vst [vmem:[#allocation3 + $0x78] sm:$0xff] %v4211
        %v4214 = vld [vmem:[#allocation3] sm:$0xff]
        %v4215 = vld [vmem:[#allocation3 + $0x8] sm:$0xff]
        %v4216 = vld [vmem:[#allocation3 + $0x10] sm:$0xff]
        %v4217 = vld [vmem:[#allocation3 + $0x18] sm:$0xff]
        %v4218 = vld [vmem:[#allocation3 + $0x20] sm:$0xff]
        %v4219 = vld [vmem:[#allocation3 + $0x28] sm:$0xff]
        %v4220 = vld [vmem:[#allocation3 + $0x30] sm:$0xff]
        %v4221 = vld [vmem:[#allocation3 + $0x38] sm:$0xff]
        %v4222 = vld [vmem:[#allocation3 + $0x40] sm:$0xff]
        %v4223 = vld [vmem:[#allocation3 + $0x48] sm:$0xff]
        %v4224 = vld [vmem:[#allocation3 + $0x50] sm:$0xff]
        %v4225 = vld [vmem:[#allocation3 + $0x58] sm:$0xff]
        %v4226 = vld [vmem:[#allocation3 + $0x60] sm:$0xff]
        %v4227 = vld [vmem:[#allocation3 + $0x68] sm:$0xff]
        %v4228 = vld [vmem:[#allocation3 + $0x70] sm:$0xff]
        %v4229 = vld [vmem:[#allocation3 + $0x78] sm:$0xff]
        %v4230 = vld [vmem:[#allocation21] sm:$0xff]
        %v4231 = vld [vmem:[#allocation21 + $0x8] sm:$0xff]
        %v4232 = vld [vmem:[#allocation21 + $0x10] sm:$0xff]
        %v4233 = vld [vmem:[#allocation21 + $0x18] sm:$0xff]
        %v4234 = vld [vmem:[#allocation21 + $0x20] sm:$0xff]
        %v4235 = vld [vmem:[#allocation21 + $0x28] sm:$0xff]
        %v4236 = vld [vmem:[#allocation21 + $0x30] sm:$0xff]
        %v4237 = vld [vmem:[#allocation21 + $0x38] sm:$0xff]
        %v4238 = vld [vmem:[#allocation21 + $0x40] sm:$0xff]
        %v4239 = vld [vmem:[#allocation21 + $0x48] sm:$0xff]
        %v4240 = vld [vmem:[#allocation21 + $0x50] sm:$0xff]
        %v4241 = vld [vmem:[#allocation21 + $0x58] sm:$0xff]
        %v4242 = vld [vmem:[#allocation21 + $0x60] sm:$0xff]
        %v4243 = vld [vmem:[#allocation21 + $0x68] sm:$0xff]
        %v4244 = vld [vmem:[#allocation21 + $0x70] sm:$0xff]
        %v4245 = vld [vmem:[#allocation21 + $0x78] sm:$0xff]
        %v4246 = vld [vmem:[#allocation21 + $0x80] sm:$0xff]
        %v4247 = vld [vmem:[#allocation21 + $0x88] sm:$0xff]
        %v4248 = vld [vmem:[#allocation21 + $0x90] sm:$0xff]
        %v4249 = vld [vmem:[#allocation21 + $0x98] sm:$0xff]
        %v4250 = vld [vmem:[#allocation21 + $0xa0] sm:$0xff]
        %v4251 = vld [vmem:[#allocation21 + $0xa8] sm:$0xff]
        %v4252 = vld [vmem:[#allocation21 + $0xb0] sm:$0xff]
        %v4253 = vld [vmem:[#allocation21 + $0xb8] sm:$0xff]
        %v4254 = vld [vmem:[#allocation21 + $0xc0] sm:$0xff]
        %v4255 = vld [vmem:[#allocation21 + $0xc8] sm:$0xff]
        %v4256 = vld [vmem:[#allocation21 + $0xd0] sm:$0xff]
        %v4257 = vld [vmem:[#allocation21 + $0xd8] sm:$0xff]
        %v4258 = vld [vmem:[#allocation21 + $0xe0] sm:$0xff]
        %v4259 = vld [vmem:[#allocation21 + $0xe8] sm:$0xff]
        %v4260 = vld [vmem:[#allocation21 + $0xf0] sm:$0xff]
        %v4261 = vld [vmem:[#allocation21 + $0xf8] sm:$0xff]
        %v4262 = vld [vmem:[#allocation21 + $0x100] sm:$0xff]
        %v4263 = vld [vmem:[#allocation21 + $0x108] sm:$0xff]
        %v4264 = vld [vmem:[#allocation21 + $0x110] sm:$0xff]
        %v4265 = vld [vmem:[#allocation21 + $0x118] sm:$0xff]
        %v4266 = vld [vmem:[#allocation21 + $0x120] sm:$0xff]
        %v4267 = vld [vmem:[#allocation21 + $0x128] sm:$0xff]
        %v4268 = vld [vmem:[#allocation21 + $0x130] sm:$0xff]
        %v4269 = vld [vmem:[#allocation21 + $0x138] sm:$0xff]
        %v4270 = vld [vmem:[#allocation21 + $0x140] sm:$0xff]
        %v4271 = vld [vmem:[#allocation21 + $0x148] sm:$0xff]
        %v4272 = vld [vmem:[#allocation21 + $0x150] sm:$0xff]
        %v4273 = vld [vmem:[#allocation21 + $0x158] sm:$0xff]
        %v4274 = vld [vmem:[#allocation21 + $0x160] sm:$0xff]
        %v4275 = vld [vmem:[#allocation21 + $0x168] sm:$0xff]
        %v4276 = vld [vmem:[#allocation21 + $0x170] sm:$0xff]
        %v4277 = vld [vmem:[#allocation21 + $0x178] sm:$0xff]
        %v4278 = vld [vmem:[#allocation21 + $0x180] sm:$0xff]
        %v4279 = vld [vmem:[#allocation21 + $0x188] sm:$0xff]
        %v4280 = vld [vmem:[#allocation21 + $0x190] sm:$0xff]
        %v4281 = vld [vmem:[#allocation21 + $0x198] sm:$0xff]
        %v4282 = vld [vmem:[#allocation21 + $0x1a0] sm:$0xff]
        %v4283 = vld [vmem:[#allocation21 + $0x1a8] sm:$0xff]
        %v4284 = vld [vmem:[#allocation21 + $0x1b0] sm:$0xff]
        %v4285 = vld [vmem:[#allocation21 + $0x1b8] sm:$0xff]
        %v4286 = vld [vmem:[#allocation21 + $0x1c0] sm:$0xff]
        %v4287 = vld [vmem:[#allocation21 + $0x1c8] sm:$0xff]
        %v4288 = vld [vmem:[#allocation21 + $0x1d0] sm:$0xff]
        %v4289 = vld [vmem:[#allocation21 + $0x1d8] sm:$0xff]
        %v4290 = vld [vmem:[#allocation21 + $0x1e0] sm:$0xff]
        %v4291 = vld [vmem:[#allocation21 + $0x1e8] sm:$0xff]
        %v4292 = vld [vmem:[#allocation21 + $0x1f0] sm:$0xff]
        %v4293 = vld [vmem:[#allocation21 + $0x1f8] sm:$0xff]
        %v4294 = vld [vmem:[#allocation21 + $0x200] sm:$0xff]
        %v4295 = vld [vmem:[#allocation21 + $0x208] sm:$0xff]
        %v4296 = vld [vmem:[#allocation21 + $0x210] sm:$0xff]
        %v4297 = vld [vmem:[#allocation21 + $0x218] sm:$0xff]
        %v4298 = vld [vmem:[#allocation21 + $0x220] sm:$0xff]
        %v4299 = vld [vmem:[#allocation21 + $0x228] sm:$0xff]
        %v4300 = vld [vmem:[#allocation21 + $0x230] sm:$0xff]
        %v4301 = vld [vmem:[#allocation21 + $0x238] sm:$0xff]
        %v4302 = vld [vmem:[#allocation21 + $0x240] sm:$0xff]
        %v4303 = vld [vmem:[#allocation21 + $0x248] sm:$0xff]
        %v4304 = vld [vmem:[#allocation21 + $0x250] sm:$0xff]
        %v4305 = vld [vmem:[#allocation21 + $0x258] sm:$0xff]
        %v4306 = vld [vmem:[#allocation21 + $0x260] sm:$0xff]
        %v4307 = vld [vmem:[#allocation21 + $0x268] sm:$0xff]
        %v4308 = vld [vmem:[#allocation21 + $0x270] sm:$0xff]
        %v4309 = vld [vmem:[#allocation21 + $0x278] sm:$0xff]
        %v4310 = vld [vmem:[#allocation21 + $0x280] sm:$0xff]
        %v4311 = vld [vmem:[#allocation21 + $0x288] sm:$0xff]
        %v4312 = vld [vmem:[#allocation21 + $0x290] sm:$0xff]
        %v4313 = vld [vmem:[#allocation21 + $0x298] sm:$0xff]
        %v4314 = vld [vmem:[#allocation21 + $0x2a0] sm:$0xff]
        %v4315 = vld [vmem:[#allocation21 + $0x2a8] sm:$0xff]
        %v4316 = vld [vmem:[#allocation21 + $0x2b0] sm:$0xff]
        %v4317 = vld [vmem:[#allocation21 + $0x2b8] sm:$0xff]
        %v4318 = vld [vmem:[#allocation21 + $0x2c0] sm:$0xff]
        %v4319 = vld [vmem:[#allocation21 + $0x2c8] sm:$0xff]
        %v4320 = vld [vmem:[#allocation21 + $0x2d0] sm:$0xff]
        %v4321 = vld [vmem:[#allocation21 + $0x2d8] sm:$0xff]
        %v4322 = vld [vmem:[#allocation21 + $0x2e0] sm:$0xff]
        %v4323 = vld [vmem:[#allocation21 + $0x2e8] sm:$0xff]
        %v4324 = vld [vmem:[#allocation21 + $0x2f0] sm:$0xff]
        %v4325 = vld [vmem:[#allocation21 + $0x2f8] sm:$0xff]
        %v4326 = vld [vmem:[#allocation21 + $0x300] sm:$0xff]
        %v4327 = vld [vmem:[#allocation21 + $0x308] sm:$0xff]
        %v4328 = vld [vmem:[#allocation21 + $0x310] sm:$0xff]
        %v4329 = vld [vmem:[#allocation21 + $0x318] sm:$0xff]
        %v4330 = vld [vmem:[#allocation21 + $0x320] sm:$0xff]
        %v4331 = vld [vmem:[#allocation21 + $0x328] sm:$0xff]
        %v4332 = vld [vmem:[#allocation21 + $0x330] sm:$0xff]
        %v4333 = vld [vmem:[#allocation21 + $0x338] sm:$0xff]
        %v4334 = vld [vmem:[#allocation21 + $0x340] sm:$0xff]
        %v4335 = vld [vmem:[#allocation21 + $0x348] sm:$0xff]
        %v4336 = vld [vmem:[#allocation21 + $0x350] sm:$0xff]
        %v4337 = vld [vmem:[#allocation21 + $0x358] sm:$0xff]
        %v4338 = vld [vmem:[#allocation21 + $0x360] sm:$0xff]
        %v4339 = vld [vmem:[#allocation21 + $0x368] sm:$0xff]
        %v4340 = vld [vmem:[#allocation21 + $0x370] sm:$0xff]
        %v4341 = vld [vmem:[#allocation21 + $0x378] sm:$0xff]
        %v4342 = vld [vmem:[#allocation21 + $0x380] sm:$0xff]
        %v4343 = vld [vmem:[#allocation21 + $0x388] sm:$0xff]
        %v4344 = vld [vmem:[#allocation21 + $0x390] sm:$0xff]
        %v4345 = vld [vmem:[#allocation21 + $0x398] sm:$0xff]
        %v4346 = vld [vmem:[#allocation21 + $0x3a0] sm:$0xff]
        %v4347 = vld [vmem:[#allocation21 + $0x3a8] sm:$0xff]
        %v4348 = vld [vmem:[#allocation21 + $0x3b0] sm:$0xff]
        %v4349 = vld [vmem:[#allocation21 + $0x3b8] sm:$0xff]
        %v4350 = vld [vmem:[#allocation21 + $0x3c0] sm:$0xff]
        %v4351 = vld [vmem:[#allocation21 + $0x3c8] sm:$0xff]
        %v4352 = vld [vmem:[#allocation21 + $0x3d0] sm:$0xff]
        %v4353 = vld [vmem:[#allocation21 + $0x3d8] sm:$0xff]
        %v4354 = vld [vmem:[#allocation21 + $0x3e0] sm:$0xff]
        %v4355 = vld [vmem:[#allocation21 + $0x3e8] sm:$0xff]
        %v4356 = vld [vmem:[#allocation21 + $0x3f0] sm:$0xff]
        %v4357 = vld [vmem:[#allocation21 + $0x3f8] sm:$0xff]
        %v4358 = vld [vmem:[#allocation21 + $0x400] sm:$0xff]
        %v4359 = vld [vmem:[#allocation21 + $0x408] sm:$0xff]
        %v4360 = vld [vmem:[#allocation21 + $0x410] sm:$0xff]
        %v4361 = vld [vmem:[#allocation21 + $0x418] sm:$0xff]
        %v4362 = vld [vmem:[#allocation21 + $0x420] sm:$0xff]
        %v4363 = vld [vmem:[#allocation21 + $0x428] sm:$0xff]
        %v4364 = vld [vmem:[#allocation21 + $0x430] sm:$0xff]
        %v4365 = vld [vmem:[#allocation21 + $0x438] sm:$0xff]
        %v4366 = vld [vmem:[#allocation21 + $0x440] sm:$0xff]
        %v4367 = vld [vmem:[#allocation21 + $0x448] sm:$0xff]
        %v4368 = vld [vmem:[#allocation21 + $0x450] sm:$0xff]
        %v4369 = vld [vmem:[#allocation21 + $0x458] sm:$0xff]
        %v4370 = vld [vmem:[#allocation21 + $0x460] sm:$0xff]
        %v4371 = vld [vmem:[#allocation21 + $0x468] sm:$0xff]
        %v4372 = vld [vmem:[#allocation21 + $0x470] sm:$0xff]
        %v4373 = vld [vmem:[#allocation21 + $0x478] sm:$0xff]
        %v4374 = vld [vmem:[#allocation21 + $0x480] sm:$0xff]
        %v4375 = vld [vmem:[#allocation21 + $0x488] sm:$0xff]
        %v4376 = vld [vmem:[#allocation21 + $0x490] sm:$0xff]
        %v4377 = vld [vmem:[#allocation21 + $0x498] sm:$0xff]
        %v4378 = vld [vmem:[#allocation21 + $0x4a0] sm:$0xff]
        %v4379 = vld [vmem:[#allocation21 + $0x4a8] sm:$0xff]
        %v4380 = vld [vmem:[#allocation21 + $0x4b0] sm:$0xff]
        %v4381 = vld [vmem:[#allocation21 + $0x4b8] sm:$0xff]
        %v4382 = vld [vmem:[#allocation21 + $0x4c0] sm:$0xff]
        %v4383 = vld [vmem:[#allocation21 + $0x4c8] sm:$0xff]
        %v4384 = vld [vmem:[#allocation21 + $0x4d0] sm:$0xff]
        %v4385 = vld [vmem:[#allocation21 + $0x4d8] sm:$0xff]
        %v4386 = vld [vmem:[#allocation21 + $0x4e0] sm:$0xff]
        %v4387 = vld [vmem:[#allocation21 + $0x4e8] sm:$0xff]
        %v4388 = vld [vmem:[#allocation21 + $0x4f0] sm:$0xff]
        %v4389 = vld [vmem:[#allocation21 + $0x4f8] sm:$0xff]
        %v4390 = vld [vmem:[#allocation21 + $0x500] sm:$0xff]
        %v4391 = vld [vmem:[#allocation21 + $0x508] sm:$0xff]
        %v4392 = vld [vmem:[#allocation21 + $0x510] sm:$0xff]
        %v4393 = vld [vmem:[#allocation21 + $0x518] sm:$0xff]
        %v4394 = vld [vmem:[#allocation21 + $0x520] sm:$0xff]
        %v4395 = vld [vmem:[#allocation21 + $0x528] sm:$0xff]
        %v4396 = vld [vmem:[#allocation21 + $0x530] sm:$0xff]
        %v4397 = vld [vmem:[#allocation21 + $0x538] sm:$0xff]
        %v4398 = vld [vmem:[#allocation21 + $0x540] sm:$0xff]
        %v4399 = vld [vmem:[#allocation21 + $0x548] sm:$0xff]
        %v4400 = vld [vmem:[#allocation21 + $0x550] sm:$0xff]
        %v4401 = vld [vmem:[#allocation21 + $0x558] sm:$0xff]
        %v4402 = vld [vmem:[#allocation21 + $0x560] sm:$0xff]
        %v4403 = vld [vmem:[#allocation21 + $0x568] sm:$0xff]
        %v4404 = vld [vmem:[#allocation21 + $0x570] sm:$0xff]
        %v4405 = vld [vmem:[#allocation21 + $0x578] sm:$0xff]
        %v4406 = vld [vmem:[#allocation21 + $0x580] sm:$0xff]
        %v4407 = vld [vmem:[#allocation21 + $0x588] sm:$0xff]
        %v4408 = vld [vmem:[#allocation21 + $0x590] sm:$0xff]
        %v4409 = vld [vmem:[#allocation21 + $0x598] sm:$0xff]
        %v4410 = vld [vmem:[#allocation21 + $0x5a0] sm:$0xff]
        %v4411 = vld [vmem:[#allocation21 + $0x5a8] sm:$0xff]
        %v4412 = vld [vmem:[#allocation21 + $0x5b0] sm:$0xff]
        %v4413 = vld [vmem:[#allocation21 + $0x5b8] sm:$0xff]
        %v4414 = vld [vmem:[#allocation21 + $0x5c0] sm:$0xff]
        %v4415 = vld [vmem:[#allocation21 + $0x5c8] sm:$0xff]
        %v4416 = vld [vmem:[#allocation21 + $0x5d0] sm:$0xff]
        %v4417 = vld [vmem:[#allocation21 + $0x5d8] sm:$0xff]
        %v4418 = vld [vmem:[#allocation21 + $0x5e0] sm:$0xff]
        %v4419 = vld [vmem:[#allocation21 + $0x5e8] sm:$0xff]
        %v4420 = vld [vmem:[#allocation21 + $0x5f0] sm:$0xff]
        %v4421 = vld [vmem:[#allocation21 + $0x5f8] sm:$0xff]
        %v4422 = vld [vmem:[#allocation21 + $0x600] sm:$0xff]
        %v4423 = vld [vmem:[#allocation21 + $0x608] sm:$0xff]
        %v4424 = vld [vmem:[#allocation21 + $0x610] sm:$0xff]
        %v4425 = vld [vmem:[#allocation21 + $0x618] sm:$0xff]
        %v4426 = vld [vmem:[#allocation21 + $0x620] sm:$0xff]
        %v4427 = vld [vmem:[#allocation21 + $0x628] sm:$0xff]
        %v4428 = vld [vmem:[#allocation21 + $0x630] sm:$0xff]
        %v4429 = vld [vmem:[#allocation21 + $0x638] sm:$0xff]
        %v4430 = vld [vmem:[#allocation21 + $0x640] sm:$0xff]
        %v4431 = vld [vmem:[#allocation21 + $0x648] sm:$0xff]
        %v4432 = vld [vmem:[#allocation21 + $0x650] sm:$0xff]
        %v4433 = vld [vmem:[#allocation21 + $0x658] sm:$0xff]
        %v4434 = vld [vmem:[#allocation21 + $0x660] sm:$0xff]
        %v4435 = vld [vmem:[#allocation21 + $0x668] sm:$0xff]
        %v4436 = vld [vmem:[#allocation21 + $0x670] sm:$0xff]
        %v4437 = vld [vmem:[#allocation21 + $0x678] sm:$0xff]
        %v4438 = vld [vmem:[#allocation21 + $0x680] sm:$0xff]
        %v4439 = vld [vmem:[#allocation21 + $0x688] sm:$0xff]
        %v4440 = vld [vmem:[#allocation21 + $0x690] sm:$0xff]
        %v4441 = vld [vmem:[#allocation21 + $0x698] sm:$0xff]
        %v4442 = vld [vmem:[#allocation21 + $0x6a0] sm:$0xff]
        %v4443 = vld [vmem:[#allocation21 + $0x6a8] sm:$0xff]
        %v4444 = vld [vmem:[#allocation21 + $0x6b0] sm:$0xff]
        %v4445 = vld [vmem:[#allocation21 + $0x6b8] sm:$0xff]
        %v4446 = vld [vmem:[#allocation21 + $0x6c0] sm:$0xff]
        %v4447 = vld [vmem:[#allocation21 + $0x6c8] sm:$0xff]
        %v4448 = vld [vmem:[#allocation21 + $0x6d0] sm:$0xff]
        %v4449 = vld [vmem:[#allocation21 + $0x6d8] sm:$0xff]
        %v4450 = vld [vmem:[#allocation21 + $0x6e0] sm:$0xff]
        %v4451 = vld [vmem:[#allocation21 + $0x6e8] sm:$0xff]
        %v4452 = vld [vmem:[#allocation21 + $0x6f0] sm:$0xff]
        %v4453 = vld [vmem:[#allocation21 + $0x6f8] sm:$0xff]
        %v4454 = vld [vmem:[#allocation21 + $0x700] sm:$0xff]
        %v4455 = vld [vmem:[#allocation21 + $0x708] sm:$0xff]
        %v4456 = vld [vmem:[#allocation21 + $0x710] sm:$0xff]
        %v4457 = vld [vmem:[#allocation21 + $0x718] sm:$0xff]
        %v4458 = vld [vmem:[#allocation21 + $0x720] sm:$0xff]
        %v4459 = vld [vmem:[#allocation21 + $0x728] sm:$0xff]
        %v4460 = vld [vmem:[#allocation21 + $0x730] sm:$0xff]
        %v4461 = vld [vmem:[#allocation21 + $0x738] sm:$0xff]
        %v4462 = vld [vmem:[#allocation21 + $0x740] sm:$0xff]
        %v4463 = vld [vmem:[#allocation21 + $0x748] sm:$0xff]
        %v4464 = vld [vmem:[#allocation21 + $0x750] sm:$0xff]
        %v4465 = vld [vmem:[#allocation21 + $0x758] sm:$0xff]
        %v4466 = vld [vmem:[#allocation21 + $0x760] sm:$0xff]
        %v4467 = vld [vmem:[#allocation21 + $0x768] sm:$0xff]
        %v4468 = vld [vmem:[#allocation21 + $0x770] sm:$0xff]
        %v4469 = vld [vmem:[#allocation21 + $0x778] sm:$0xff]
        %v4470 = vld [vmem:[#allocation21 + $0x780] sm:$0xff]
        %v4471 = vld [vmem:[#allocation21 + $0x788] sm:$0xff]
        %v4472 = vld [vmem:[#allocation21 + $0x790] sm:$0xff]
        %v4473 = vld [vmem:[#allocation21 + $0x798] sm:$0xff]
        %v4474 = vld [vmem:[#allocation21 + $0x7a0] sm:$0xff]
        %v4475 = vld [vmem:[#allocation21 + $0x7a8] sm:$0xff]
        %v4476 = vld [vmem:[#allocation21 + $0x7b0] sm:$0xff]
        %v4477 = vld [vmem:[#allocation21 + $0x7b8] sm:$0xff]
        %v4478 = vld [vmem:[#allocation21 + $0x7c0] sm:$0xff]
        %v4479 = vld [vmem:[#allocation21 + $0x7c8] sm:$0xff]
        %v4480 = vld [vmem:[#allocation21 + $0x7d0] sm:$0xff]
        %v4481 = vld [vmem:[#allocation21 + $0x7d8] sm:$0xff]
        %v4482 = vld [vmem:[#allocation21 + $0x7e0] sm:$0xff]
        %v4483 = vld [vmem:[#allocation21 + $0x7e8] sm:$0xff]
        %v4484 = vld [vmem:[#allocation21 + $0x7f0] sm:$0xff]
        %v4485 = vld [vmem:[#allocation21 + $0x7f8] sm:$0xff]
        %v4486 = vld [vmem:[#allocation22] sm:$0x1]
        %v4488 = vperm.slane %v4486, 0
        %4490 = vmatpush.msra.mxu0 %v4245
        %4491 = vmatpush.msra.mxu0 %v4244
        %4492 = vmatpush.msra.mxu0 %v4243
        %4493 = vmatpush.msra.mxu0 %v4242
        %4494 = vmatpush.msra.mxu0 %v4241
        %4495 = vmatpush.msra.mxu0 %v4240
        %4496 = vmatpush.msra.mxu0 %v4239
        %4497 = vmatpush.msra.mxu0 %v4238
        %4498 = vmatpush.msra.mxu0 %v4237
        %4499 = vmatpush.msra.mxu0 %v4236
        %4500 = vmatpush.msra.mxu0 %v4235
        %4501 = vmatpush.msra.mxu0 %v4234
        %4502 = vmatpush.msra.mxu0 %v4233
        %4503 = vmatpush.msra.mxu0 %v4232
        %4504 = vmatpush.msra.mxu0 %v4231
        %4505 = vmatpush.msra.mxu0 %v4230
        %4506 = vmatmul.f32.gmra.mxu0 %v4214
        %v4507 = vpop.f32.mrf.mxu0
        %v4508 = vadd.f32 %v4488, %v4507
        %4509 = vdwg.mxu0
        %4510 = vmatpush.msra.mxu0 %v4261
        %4511 = vmatpush.msra.mxu0 %v4260
        %4512 = vmatpush.msra.mxu0 %v4259
        %4513 = vmatpush.msra.mxu0 %v4258
        %4514 = vmatpush.msra.mxu0 %v4257
        %4515 = vmatpush.msra.mxu0 %v4256
        %4516 = vmatpush.msra.mxu0 %v4255
        %4517 = vmatpush.msra.mxu0 %v4254
        %4518 = vmatpush.msra.mxu0 %v4253
        %4519 = vmatpush.msra.mxu0 %v4252
        %4520 = vmatpush.msra.mxu0 %v4251
        %4521 = vmatpush.msra.mxu0 %v4250
        %4522 = vmatpush.msra.mxu0 %v4249
        %4523 = vmatpush.msra.mxu0 %v4248
        %4524 = vmatpush.msra.mxu0 %v4247
        %4525 = vmatpush.msra.mxu0 %v4246
        %4526 = vmatmul.f32.gmra.mxu0 %v4215
        %v4527 = vpop.f32.mrf.mxu0
        %v4528 = vadd.f32 %v4508, %v4527
        %4529 = vdwg.mxu0
        %4530 = vmatpush.msra.mxu0 %v4277
        %4531 = vmatpush.msra.mxu0 %v4276
        %4532 = vmatpush.msra.mxu0 %v4275
        %4533 = vmatpush.msra.mxu0 %v4274
        %4534 = vmatpush.msra.mxu0 %v4273
        %4535 = vmatpush.msra.mxu0 %v4272
        %4536 = vmatpush.msra.mxu0 %v4271
        %4537 = vmatpush.msra.mxu0 %v4270
        %4538 = vmatpush.msra.mxu0 %v4269
        %4539 = vmatpush.msra.mxu0 %v4268
        %4540 = vmatpush.msra.mxu0 %v4267
        %4541 = vmatpush.msra.mxu0 %v4266
        %4542 = vmatpush.msra.mxu0 %v4265
        %4543 = vmatpush.msra.mxu0 %v4264
        %4544 = vmatpush.msra.mxu0 %v4263
        %4545 = vmatpush.msra.mxu0 %v4262
        %4546 = vmatmul.f32.gmra.mxu0 %v4216
        %v4547 = vpop.f32.mrf.mxu0
        %v4548 = vadd.f32 %v4528, %v4547
        %4549 = vdwg.mxu0
        %4550 = vmatpush.msra.mxu0 %v4293
        %4551 = vmatpush.msra.mxu0 %v4292
        %4552 = vmatpush.msra.mxu0 %v4291
        %4553 = vmatpush.msra.mxu0 %v4290
        %4554 = vmatpush.msra.mxu0 %v4289
        %4555 = vmatpush.msra.mxu0 %v4288
        %4556 = vmatpush.msra.mxu0 %v4287
        %4557 = vmatpush.msra.mxu0 %v4286
        %4558 = vmatpush.msra.mxu0 %v4285
        %4559 = vmatpush.msra.mxu0 %v4284
        %4560 = vmatpush.msra.mxu0 %v4283
        %4561 = vmatpush.msra.mxu0 %v4282
        %4562 = vmatpush.msra.mxu0 %v4281
        %4563 = vmatpush.msra.mxu0 %v4280
        %4564 = vmatpush.msra.mxu0 %v4279
        %4565 = vmatpush.msra.mxu0 %v4278
        %4566 = vmatmul.f32.gmra.mxu0 %v4217
        %v4567 = vpop.f32.mrf.mxu0
        %v4568 = vadd.f32 %v4548, %v4567
        %4569 = vdwg.mxu0
        %4570 = vmatpush.msra.mxu0 %v4309
        %4571 = vmatpush.msra.mxu0 %v4308
        %4572 = vmatpush.msra.mxu0 %v4307
        %4573 = vmatpush.msra.mxu0 %v4306
        %4574 = vmatpush.msra.mxu0 %v4305
        %4575 = vmatpush.msra.mxu0 %v4304
        %4576 = vmatpush.msra.mxu0 %v4303
        %4577 = vmatpush.msra.mxu0 %v4302
        %4578 = vmatpush.msra.mxu0 %v4301
        %4579 = vmatpush.msra.mxu0 %v4300
        %4580 = vmatpush.msra.mxu0 %v4299
        %4581 = vmatpush.msra.mxu0 %v4298
        %4582 = vmatpush.msra.mxu0 %v4297
        %4583 = vmatpush.msra.mxu0 %v4296
        %4584 = vmatpush.msra.mxu0 %v4295
        %4585 = vmatpush.msra.mxu0 %v4294
        %4586 = vmatmul.f32.gmra.mxu0 %v4218
        %v4587 = vpop.f32.mrf.mxu0
        %v4588 = vadd.f32 %v4568, %v4587
        %4589 = vdwg.mxu0
        %4590 = vmatpush.msra.mxu0 %v4325
        %4591 = vmatpush.msra.mxu0 %v4324
        %4592 = vmatpush.msra.mxu0 %v4323
        %4593 = vmatpush.msra.mxu0 %v4322
        %4594 = vmatpush.msra.mxu0 %v4321
        %4595 = vmatpush.msra.mxu0 %v4320
        %4596 = vmatpush.msra.mxu0 %v4319
        %4597 = vmatpush.msra.mxu0 %v4318
        %4598 = vmatpush.msra.mxu0 %v4317
        %4599 = vmatpush.msra.mxu0 %v4316
        %4600 = vmatpush.msra.mxu0 %v4315
        %4601 = vmatpush.msra.mxu0 %v4314
        %4602 = vmatpush.msra.mxu0 %v4313
        %4603 = vmatpush.msra.mxu0 %v4312
        %4604 = vmatpush.msra.mxu0 %v4311
        %4605 = vmatpush.msra.mxu0 %v4310
        %4606 = vmatmul.f32.gmra.mxu0 %v4219
        %v4607 = vpop.f32.mrf.mxu0
        %v4608 = vadd.f32 %v4588, %v4607
        %4609 = vdwg.mxu0
        %4610 = vmatpush.msra.mxu0 %v4341
        %4611 = vmatpush.msra.mxu0 %v4340
        %4612 = vmatpush.msra.mxu0 %v4339
        %4613 = vmatpush.msra.mxu0 %v4338
        %4614 = vmatpush.msra.mxu0 %v4337
        %4615 = vmatpush.msra.mxu0 %v4336
        %4616 = vmatpush.msra.mxu0 %v4335
        %4617 = vmatpush.msra.mxu0 %v4334
        %4618 = vmatpush.msra.mxu0 %v4333
        %4619 = vmatpush.msra.mxu0 %v4332
        %4620 = vmatpush.msra.mxu0 %v4331
        %4621 = vmatpush.msra.mxu0 %v4330
        %4622 = vmatpush.msra.mxu0 %v4329
        %4623 = vmatpush.msra.mxu0 %v4328
        %4624 = vmatpush.msra.mxu0 %v4327
        %4625 = vmatpush.msra.mxu0 %v4326
        %4626 = vmatmul.f32.gmra.mxu0 %v4220
        %v4627 = vpop.f32.mrf.mxu0
        %v4628 = vadd.f32 %v4608, %v4627
        %4629 = vdwg.mxu0
        %4630 = vmatpush.msra.mxu0 %v4357
        %4631 = vmatpush.msra.mxu0 %v4356
        %4632 = vmatpush.msra.mxu0 %v4355
        %4633 = vmatpush.msra.mxu0 %v4354
        %4634 = vmatpush.msra.mxu0 %v4353
        %4635 = vmatpush.msra.mxu0 %v4352
        %4636 = vmatpush.msra.mxu0 %v4351
        %4637 = vmatpush.msra.mxu0 %v4350
        %4638 = vmatpush.msra.mxu0 %v4349
        %4639 = vmatpush.msra.mxu0 %v4348
        %4640 = vmatpush.msra.mxu0 %v4347
        %4641 = vmatpush.msra.mxu0 %v4346
        %4642 = vmatpush.msra.mxu0 %v4345
        %4643 = vmatpush.msra.mxu0 %v4344
        %4644 = vmatpush.msra.mxu0 %v4343
        %4645 = vmatpush.msra.mxu0 %v4342
        %4646 = vmatmul.f32.gmra.mxu0 %v4221
        %v4647 = vpop.f32.mrf.mxu0
        %v4648 = vadd.f32 %v4628, %v4647
        %4649 = vdwg.mxu0
        %4650 = vmatpush.msra.mxu0 %v4373
        %4651 = vmatpush.msra.mxu0 %v4372
        %4652 = vmatpush.msra.mxu0 %v4371
        %4653 = vmatpush.msra.mxu0 %v4370
        %4654 = vmatpush.msra.mxu0 %v4369
        %4655 = vmatpush.msra.mxu0 %v4368
        %4656 = vmatpush.msra.mxu0 %v4367
        %4657 = vmatpush.msra.mxu0 %v4366
        %4658 = vmatpush.msra.mxu0 %v4365
        %4659 = vmatpush.msra.mxu0 %v4364
        %4660 = vmatpush.msra.mxu0 %v4363
        %4661 = vmatpush.msra.mxu0 %v4362
        %4662 = vmatpush.msra.mxu0 %v4361
        %4663 = vmatpush.msra.mxu0 %v4360
        %4664 = vmatpush.msra.mxu0 %v4359
        %4665 = vmatpush.msra.mxu0 %v4358
        %4666 = vmatmul.f32.gmra.mxu0 %v4222
        %v4667 = vpop.f32.mrf.mxu0
        %v4668 = vadd.f32 %v4648, %v4667
        %4669 = vdwg.mxu0
        %4670 = vmatpush.msra.mxu0 %v4389
        %4671 = vmatpush.msra.mxu0 %v4388
        %4672 = vmatpush.msra.mxu0 %v4387
        %4673 = vmatpush.msra.mxu0 %v4386
        %4674 = vmatpush.msra.mxu0 %v4385
        %4675 = vmatpush.msra.mxu0 %v4384
        %4676 = vmatpush.msra.mxu0 %v4383
        %4677 = vmatpush.msra.mxu0 %v4382
        %4678 = vmatpush.msra.mxu0 %v4381
        %4679 = vmatpush.msra.mxu0 %v4380
        %4680 = vmatpush.msra.mxu0 %v4379
        %4681 = vmatpush.msra.mxu0 %v4378
        %4682 = vmatpush.msra.mxu0 %v4377
        %4683 = vmatpush.msra.mxu0 %v4376
        %4684 = vmatpush.msra.mxu0 %v4375
        %4685 = vmatpush.msra.mxu0 %v4374
        %4686 = vmatmul.f32.gmra.mxu0 %v4223
        %v4687 = vpop.f32.mrf.mxu0
        %v4688 = vadd.f32 %v4668, %v4687
        %4689 = vdwg.mxu0
        %4690 = vmatpush.msra.mxu0 %v4405
        %4691 = vmatpush.msra.mxu0 %v4404
        %4692 = vmatpush.msra.mxu0 %v4403
        %4693 = vmatpush.msra.mxu0 %v4402
        %4694 = vmatpush.msra.mxu0 %v4401
        %4695 = vmatpush.msra.mxu0 %v4400
        %4696 = vmatpush.msra.mxu0 %v4399
        %4697 = vmatpush.msra.mxu0 %v4398
        %4698 = vmatpush.msra.mxu0 %v4397
        %4699 = vmatpush.msra.mxu0 %v4396
        %4700 = vmatpush.msra.mxu0 %v4395
        %4701 = vmatpush.msra.mxu0 %v4394
        %4702 = vmatpush.msra.mxu0 %v4393
        %4703 = vmatpush.msra.mxu0 %v4392
        %4704 = vmatpush.msra.mxu0 %v4391
        %4705 = vmatpush.msra.mxu0 %v4390
        %4706 = vmatmul.f32.gmra.mxu0 %v4224
        %v4707 = vpop.f32.mrf.mxu0
        %v4708 = vadd.f32 %v4688, %v4707
        %4709 = vdwg.mxu0
        %4710 = vmatpush.msra.mxu0 %v4421
        %4711 = vmatpush.msra.mxu0 %v4420
        %4712 = vmatpush.msra.mxu0 %v4419
        %4713 = vmatpush.msra.mxu0 %v4418
        %4714 = vmatpush.msra.mxu0 %v4417
        %4715 = vmatpush.msra.mxu0 %v4416
        %4716 = vmatpush.msra.mxu0 %v4415
        %4717 = vmatpush.msra.mxu0 %v4414
        %4718 = vmatpush.msra.mxu0 %v4413
        %4719 = vmatpush.msra.mxu0 %v4412
        %4720 = vmatpush.msra.mxu0 %v4411
        %4721 = vmatpush.msra.mxu0 %v4410
        %4722 = vmatpush.msra.mxu0 %v4409
        %4723 = vmatpush.msra.mxu0 %v4408
        %4724 = vmatpush.msra.mxu0 %v4407
        %4725 = vmatpush.msra.mxu0 %v4406
        %4726 = vmatmul.f32.gmra.mxu0 %v4225
        %v4727 = vpop.f32.mrf.mxu0
        %v4728 = vadd.f32 %v4708, %v4727
        %4729 = vdwg.mxu0
        %4730 = vmatpush.msra.mxu0 %v4437
        %4731 = vmatpush.msra.mxu0 %v4436
        %4732 = vmatpush.msra.mxu0 %v4435
        %4733 = vmatpush.msra.mxu0 %v4434
        %4734 = vmatpush.msra.mxu0 %v4433
        %4735 = vmatpush.msra.mxu0 %v4432
        %4736 = vmatpush.msra.mxu0 %v4431
        %4737 = vmatpush.msra.mxu0 %v4430
        %4738 = vmatpush.msra.mxu0 %v4429
        %4739 = vmatpush.msra.mxu0 %v4428
        %4740 = vmatpush.msra.mxu0 %v4427
        %4741 = vmatpush.msra.mxu0 %v4426
        %4742 = vmatpush.msra.mxu0 %v4425
        %4743 = vmatpush.msra.mxu0 %v4424
        %4744 = vmatpush.msra.mxu0 %v4423
        %4745 = vmatpush.msra.mxu0 %v4422
        %4746 = vmatmul.f32.gmra.mxu0 %v4226
        %v4747 = vpop.f32.mrf.mxu0
        %v4748 = vadd.f32 %v4728, %v4747
        %4749 = vdwg.mxu0
        %4750 = vmatpush.msra.mxu0 %v4453
        %4751 = vmatpush.msra.mxu0 %v4452
        %4752 = vmatpush.msra.mxu0 %v4451
        %4753 = vmatpush.msra.mxu0 %v4450
        %4754 = vmatpush.msra.mxu0 %v4449
        %4755 = vmatpush.msra.mxu0 %v4448
        %4756 = vmatpush.msra.mxu0 %v4447
        %4757 = vmatpush.msra.mxu0 %v4446
        %4758 = vmatpush.msra.mxu0 %v4445
        %4759 = vmatpush.msra.mxu0 %v4444
        %4760 = vmatpush.msra.mxu0 %v4443
        %4761 = vmatpush.msra.mxu0 %v4442
        %4762 = vmatpush.msra.mxu0 %v4441
        %4763 = vmatpush.msra.mxu0 %v4440
        %4764 = vmatpush.msra.mxu0 %v4439
        %4765 = vmatpush.msra.mxu0 %v4438
        %4766 = vmatmul.f32.gmra.mxu0 %v4227
        %v4767 = vpop.f32.mrf.mxu0
        %v4768 = vadd.f32 %v4748, %v4767
        %4769 = vdwg.mxu0
        %4770 = vmatpush.msra.mxu0 %v4469
        %4771 = vmatpush.msra.mxu0 %v4468
        %4772 = vmatpush.msra.mxu0 %v4467
        %4773 = vmatpush.msra.mxu0 %v4466
        %4774 = vmatpush.msra.mxu0 %v4465
        %4775 = vmatpush.msra.mxu0 %v4464
        %4776 = vmatpush.msra.mxu0 %v4463
        %4777 = vmatpush.msra.mxu0 %v4462
        %4778 = vmatpush.msra.mxu0 %v4461
        %4779 = vmatpush.msra.mxu0 %v4460
        %4780 = vmatpush.msra.mxu0 %v4459
        %4781 = vmatpush.msra.mxu0 %v4458
        %4782 = vmatpush.msra.mxu0 %v4457
        %4783 = vmatpush.msra.mxu0 %v4456
        %4784 = vmatpush.msra.mxu0 %v4455
        %4785 = vmatpush.msra.mxu0 %v4454
        %4786 = vmatmul.f32.gmra.mxu0 %v4228
        %v4787 = vpop.f32.mrf.mxu0
        %v4788 = vadd.f32 %v4768, %v4787
        %4789 = vdwg.mxu0
        %4790 = vmatpush.msra.mxu0 %v4485
        %4791 = vmatpush.msra.mxu0 %v4484
        %4792 = vmatpush.msra.mxu0 %v4483
        %4793 = vmatpush.msra.mxu0 %v4482
        %4794 = vmatpush.msra.mxu0 %v4481
        %4795 = vmatpush.msra.mxu0 %v4480
        %4796 = vmatpush.msra.mxu0 %v4479
        %4797 = vmatpush.msra.mxu0 %v4478
        %4798 = vmatpush.msra.mxu0 %v4477
        %4799 = vmatpush.msra.mxu0 %v4476
        %4800 = vmatpush.msra.mxu0 %v4475
        %4801 = vmatpush.msra.mxu0 %v4474
        %4802 = vmatpush.msra.mxu0 %v4473
        %4803 = vmatpush.msra.mxu0 %v4472
        %4804 = vmatpush.msra.mxu0 %v4471
        %4805 = vmatpush.msra.mxu0 %v4470
        %4806 = vmatmul.f32.gmra.mxu0 %v4229
        %v4807 = vpop.f32.mrf.mxu0
        %v4808 = vadd.f32 %v4788, %v4807
        %4809 = vdwg.mxu0
        %4810 = vst [vmem:[%s683] sm:$0xff] %v4808
        %s4811 = sand.u32 %s336, 1
        %s4812 = scalar_lea.sflag [#allocation6], %s4811
        %s4813 = sand.u32 %s336, 1
        %s4814 = smul.addr %s4813, 8
        %s4815 = scalar_lea.vmem [#allocation24], %s4814
        // Predicated region
        $region121: #{tpu_custom_call.1} parent=67 // pred_check
          %p4816 = pneg %p346
        $region122: #{tpu_custom_call.1} parent=67 // pred_check_branch
          %4818 = sbr.rel (%p4816) target = $region124
        $region123: #{tpu_custom_call.1} parent=67 // pred_region
          %4820 = vsyncadd %s4812, 0
          %s4821 = sadd.s32 %s42, %s41
          %s4822 = smul.addr %s4821, 8
          %s4823 = scalar_lea.hbm %s12, %s4822
          %s4825 = sshll.u32 %s4815, 4
          %s4826 = int_to_ptr.vmem [resolvable:$true] %s4825
          %s4827 = sshll.u32 %s4823, 4
          %s4828 = int_to_ptr.hbm [resolvable:$true] %s4827
          %4830 = dma.vmem_to_hbm [thread:$0]  %s4826, 128, %s4828, %s4812
        $region124: #{tpu_custom_call.1} parent=67 // pred_fallthru
          _
      $region68: #{tpu_custom_call.1} parent=5 // pred_fallthru
        _
      %p4831 = scmp.le.s32.totalorder 2, %s32
      // Predicated region
      $region125: #{tpu_custom_call.1} parent=5 // pred_check
        %p4832 = pneg %p4831
      $region126: #{tpu_custom_call.1} parent=5 // pred_check_branch
        %4834 = sbr.rel (%p4832) target = $region128
      $region127: #{tpu_custom_call.1} parent=5 // pred_region
        %s4835 = ssub.s32 %s32, 2
        // Predicated region
        $region129: #{tpu_custom_call.1} parent=127 // pred_check
          %p4836 = pneg %p352
        $region130: #{tpu_custom_call.1} parent=127 // pred_check_branch
          %4838 = sbr.rel (%p4836) target = $region132
        $region131: #{tpu_custom_call.1} parent=127 // pred_region
          %s4839 = sand.u32 %s337, 1
          %s4840 = scalar_lea.sflag [#allocation6], %s4839
          %s4841 = sand.u32 %s337, 1
          %s4842 = smul.addr %s4841, 8
          %s4843 = scalar_lea.vmem [#allocation24], %s4842
          %4845 = dma.done %s4840, 128
        $region132: #{tpu_custom_call.1} parent=127 // pred_fallthru
          _
      $region128: #{tpu_custom_call.1} parent=5 // pred_fallthru
        _
    $region6: #{tpu_custom_call.1} parent=1 // loop_footer
      %s36 = sadd.s32 1, %s32
    $region7: #{tpu_custom_call.1} parent=1 // loop_footer_branch
      %31 = sbr.rel target = $region3
    $region8: #{tpu_custom_call.1} parent=1 // loop_exit
      _
    %4846 = vsyncpa [#allocation5], 1
    %s4847 = scalar_lea.sflag [#allocation5], 1
    %4848 = vsyncpa %s4847, 1
    %4849 = vsyncpa [#allocation8], 1
    %s4850 = scalar_lea.sflag [#allocation8], 1
    %4851 = vsyncpa %s4850, 1
    %4852 = vsyncpa [#allocation11], 1
    %4853 = vsyncpa [#allocation14], 1
    %4854 = vsyncpa [#allocation17], 1
    %4855 = vsyncpa [#allocation20], 1
    %4856 = vsyncpa [#allocation23], 1
    %4857 = vsyncpa [#allocation6], 1
    %s4858 = scalar_lea.sflag [#allocation6], 1
    %4859 = vsyncpa %s4858, 1

</llo_original>
